<compile_context>
chip_gen: v5e
topology: v5e:2x2
jax: 0.10.0
libtpu: 0.0.40
codegen_flags: <defaults>
</compile_context>

<pallas_src>
import jax
import jax.numpy as jnp
import numpy as np
from jax.experimental import pallas as pl
from jax.experimental.pallas import tpu as pltpu


def _round_up(a, b):
    return -(-a // b) * b


def _cdiv(a, b):
    return -(-a // b)


MAX_DY = 10   # largest vertical tap offset (21x1 conv)
MAX_DX = 10   # largest horizontal tap offset (1x21 conv)


def _pack_weights(params, C, W, WC_pad):
    """All conv weights/biases -> one (n_rows, 1, WC_pad) array of lane rows + static offsets."""
    (w55, b55, w17, b17, w71, b71, w1_11, b1_11,
     w11_1, b11_1, w1_21, b1_21, w21_1, b21_1, wpt, bpt) = params
    WC = W * C
    rows = []
    off = {}

    def lane_row(vals_c):                                   # (C,) per-channel -> (WC_pad,)
        r = jnp.tile(vals_c.astype(jnp.float32), W)
        return jnp.pad(r, (0, WC_pad - WC))                 # zero in the lane-pad region

    def add(name, row_list):
        off[name] = len(rows)
        rows.extend(row_list)

    def dw_rows(w, kh, kw):
        ph, pw = (kh - 1) // 2, (kw - 1) // 2
        return [lane_row(w[:, 0, dy + ph, dx + pw])
                for dy in range(-ph, ph + 1) for dx in range(-pw, pw + 1)]

    # biases (vertical-pass biases pre-summed into one row)
    add("b55",   [lane_row(b55)])
    add("b17",   [lane_row(b17)])
    add("b1_11", [lane_row(b1_11)])
    add("b1_21", [lane_row(b1_21)])
    add("bvert", [lane_row(b71 + b11_1 + b21_1)])
    add("bpt",   [lane_row(bpt)])

    # depthwise tap rows
    add("w55",   dw_rows(w55, 5, 5))
    add("w17",   dw_rows(w17, 1, 7))
    add("w1_11", dw_rows(w1_11, 1, 11))
    add("w1_21", dw_rows(w1_21, 1, 21))
    add("w71",   dw_rows(w71, 7, 1))
    add("w11_1", dw_rows(w11_1, 11, 1))
    add("w21_1", dw_rows(w21_1, 21, 1))

    # 1x1 channel mix as (2C-1) per-channel-offset rows (invalid offsets masked to zero)
    wm = wpt[:, :, 0, 0].astype(jnp.float32)                # (C_out, C_in)
    cout = jnp.arange(C)
    pt_rows = []
    for delta in range(-(C - 1), C):
        cin = cout + delta
        valid = (cin >= 0) & (cin < C)
        vals = jnp.where(valid, wm[cout, jnp.clip(cin, 0, C - 1)], 0.0)
        pt_rows.append(lane_row(vals))
    add("wpt", pt_rows)

    w_all = jnp.stack(rows, axis=0)[:, None, :]             # (n_rows, 1, WC_pad)
    return w_all, off


def _make_kernel(C, H, H_pad, WC_pad, NB, off):
    R = NB * H_pad                                          # images stacked along sublanes

    def kernel(x_ref, w_ref, out_ref):
        x = x_ref[...]                                      # (R, WC_pad)

        def wrow(i):                                        # static i -> (1, WC_pad) lane row
            return w_ref[i]

        def shift_w(v, lanes):                              # result[., l] = v[., l + lanes]
            if lanes == 0:
                return v
            return pltpu.roll(v, (-lanes) % WC_pad, 1)      # XLU lane rotate

        def shift_h(v, r):                                  # result[h, .] = v[h + r, .]
            if r == 0:
                return v
            return pltpu.roll(v, (-r) % R, 0)               # XLU sublane rotate

        # ---- 5x5 depthwise conv (bias folded into the accumulator init) ----
        acc = wrow(off["b55"])
        t = off["w55"]
        for dy in range(-2, 3):
            xr = shift_h(x, dy)
            for dx in range(-2, 3):
                acc = acc + shift_w(xr, dx * C) * wrow(t)
                t += 1
        x_init = acc                                        # (R, WC_pad)

        # ---- fused 1x7 / 1x11 / 1x21 horizontal passes: one lane roll per dx ----
        a1 = wrow(off["b17"])
        a2 = wrow(off["b1_11"])
        a3 = wrow(off["b1_21"])
        for dx in range(-MAX_DX, MAX_DX + 1):
            v = shift_w(x_init, dx * C)
            if -3 <= dx <= 3:
                a1 = a1 + v * wrow(off["w17"] + dx + 3)
            if -5 <= dx <= 5:
                a2 = a2 + v * wrow(off["w1_11"] + dx + 5)
            a3 = a3 + v * wrow(off["w1_21"] + dx + 10)

        # Zero each image's H-pad rows so the vertical taps see exact "same" zero padding
        # (the pad rows of a1/a2/a3 otherwise contain bias + boundary spill).
        row = jax.lax.broadcasted_iota(jnp.int32, (R, WC_pad), 0)
        valid = row < H
        for k in range(1, NB):
            valid = valid | ((row >= k * H_pad) & (row < k * H_pad + H))
        a1 = jnp.where(valid, a1, 0.0)
        a2 = jnp.where(valid, a2, 0.0)
        a3 = jnp.where(valid, a3, 0.0)

        # ---- vertical 7x1 / 11x1 / 21x1 passes, accumulated straight into s ----
        s = x_init + wrow(off["bvert"])                     # pre-summed b71+b11_1+b21_1
        for i, dy in enumerate(range(-3, 4)):
            s = s + shift_h(a1, dy) * wrow(off["w71"] + i)
        for i, dy in enumerate(range(-5, 6)):
            s = s + shift_h(a2, dy) * wrow(off["w11_1"] + i)
        for i, dy in enumerate(range(-10, 11)):
            s = s + shift_h(a3, dy) * wrow(off["w21_1"] + i)

        # ---- 1x1 channel mix as (2C-1) lane-shifted VPU FMAs (C too small for MXU), sigmoid ----
        att = wrow(off["bpt"])
        for i in range(2 * C - 1):
            delta = i - (C - 1)
            att = att + shift_w(s, delta) * wrow(off["wpt"] + i)

        out_ref[...] = jax.nn.sigmoid(att)

    return kernel


def spatial_attention(x_nchw, params, images_per_step=None):
    N, C, H, W = x_nchw.shape
    WC = W * C

    # Padding margins replace the per-tap edge masks (see header invariants).
    H_pad = _round_up(H + MAX_DY, 8)
    WC_pad = _round_up(WC, 128)
    if WC_pad - WC < MAX_DX * C:
        WC_pad = _round_up(WC + MAX_DX * C, 128)

    if images_per_step is None:
        # Whole batch per grid step while the live working set stays ~within the 64-vreg file.
        images_per_step = max(1, min(N, max(1, 64 // H_pad)))
    NB = int(images_per_step)
    N_pad = _cdiv(N, NB) * NB
    R = NB * H_pad

    w_all, off = _pack_weights(params, C, W, WC_pad)

    # NCHW -> (N, H, W*C) lane-dense packing, zero-padded (pad rows/lanes MUST be zero: they
    # provide the "same"-padding zeros that the rolls wrap into), images stacked on sublanes.
    x_pack = jnp.transpose(x_nchw.astype(jnp.float32), (0, 2, 3, 1)).reshape(N, H, WC)
    x_pack = jnp.pad(x_pack, ((0, N_pad - N), (0, H_pad - H), (0, WC_pad - WC)))
    x_pack = x_pack.reshape(N_pad * H_pad, WC_pad)

    kernel = _make_kernel(C, H, H_pad, WC_pad, NB, off)

    out = pl.pallas_call(
        kernel,
        out_shape=jax.ShapeDtypeStruct((N_pad * H_pad, WC_pad), jnp.float32),
        grid_spec=pltpu.PrefetchScalarGridSpec(
            num_scalar_prefetch=0,
            grid=(N_pad // NB,),
            in_specs=[
                pl.BlockSpec((R, WC_pad), lambda n: (n, 0)),        # NB images per step
                pl.BlockSpec(w_all.shape, lambda n: (0, 0, 0)),     # one consolidated weight op
            ],
            out_specs=pl.BlockSpec((R, WC_pad), lambda n: (n, 0)),
        ),
        compiler_params=pltpu.CompilerParams(
            dimension_semantics=("parallel",),   # independent per step; lets v7x shard the grid
        ),
    )(x_pack, w_all)

    out = out.reshape(N_pad, H_pad, WC_pad)[:N, :H, :WC].reshape(N, H, W, C)
    return jnp.transpose(out, (0, 3, 1, 2))                  # back to NCHW


# ----- pure-JAX reference (for correctness check only) -----
def spatial_attention_ref(x, params):
    (w55, b55, w17, b17, w71, b71, w1_11, b1_11,
     w11_1, b11_1, w1_21, b1_21, w21_1, b21_1, wpt, bpt) = params
    C = x.shape[1]

    def dconv(x, w, b, pad):
        y = jax.lax.conv_general_dilated(
            x, w, (1, 1), [(pad[0], pad[0]), (pad[1], pad[1])],
            dimension_numbers=('NCHW', 'OIHW', 'NCHW'),
            feature_group_count=C)
        return y + b[None, :, None, None]

    x_init = dconv(x, w55, b55, (2, 2))
    x_1 = dconv(dconv(x_init, w17, b17, (0, 3)), w71, b71, (3, 0))
    x_2 = dconv(dconv(x_init, w1_11, b1_11, (0, 5)), w11_1, b11_1, (5, 0))
    x_3 = dconv(dconv(x_init, w1_21, b1_21, (0, 10)), w21_1, b21_1, (10, 0))
    s = x_1 + x_2 + x_3 + x_init
    att = jax.lax.conv_general_dilated(
        s, wpt, (1, 1), [(0, 0), (0, 0)],
        dimension_numbers=('NCHW', 'OIHW', 'NCHW')) + bpt[None, :, None, None]
    return jax.nn.sigmoid(att)


def init_params(key, C):
    ks = jax.random.split(key, 16)

    def w(k, shape, scale=0.1):
        return scale * jax.random.normal(k, shape, jnp.float32)

    return (
        w(ks[0], (C, 1, 5, 5)),   w(ks[1], (C,)),
        w(ks[2], (C, 1, 1, 7)),   w(ks[3], (C,)),
        w(ks[4], (C, 1, 7, 1)),   w(ks[5], (C,)),
        w(ks[6], (C, 1, 1, 11)),  w(ks[7], (C,)),
        w(ks[8], (C, 1, 11, 1)),  w(ks[9], (C,)),
        w(ks[10], (C, 1, 1, 21)), w(ks[11], (C,)),
        w(ks[12], (C, 1, 21, 1)), w(ks[13], (C,)),
        w(ks[14], (C, C, 1, 1)),  w(ks[15], (C,)),
    )


if __name__ == "__main__":
    key = jax.random.PRNGKey(0)
    kx, kp = jax.random.split(key)
    N, C, H, W = 2, 4, 16, 16
    x = jax.random.normal(kx, (N, C, H, W), jnp.float32)
    params = init_params(kp, C)

    out = spatial_attention(x, params)
    out = jax.block_until_ready(out)

    ref = spatial_attention_ref(x, params)
    assert out.shape == (N, C, H, W)
    np.testing.assert_allclose(np.asarray(out), np.asarray(ref), atol=1e-4, rtol=1e-3)
    print("KERNEL_OK")
</pallas_src>

<mosaic_0001>
module attributes {stable_mosaic.version = 11 : i64} {
  func.func @kernel(%arg0: i32, %arg1: memref<64x128xf32, #tpu.memory_space<vmem>>, %arg2: memref<116x1x128xf32, #tpu.memory_space<vmem>>, %arg3: memref<64x128xf32, #tpu.memory_space<vmem>>) attributes {dimension_semantics = [#tpu.dimension_semantics<parallel>], iteration_bounds = array<i64: 1>, scalar_prefetch = 0 : i64, scratch_operands = 0 : i64, tpu.core_type = #tpu.core_type<tc>, window_params = [{transform_indices = @transform_0, window_bounds = array<i64: 64, 128>}, {pipeline_mode = #tpu.pipeline_mode<synchronous>, transform_indices = @transform_1, window_bounds = array<i64: 116, 1, 128>}, {transform_indices = @transform_2, window_bounds = array<i64: 64, 128>}]} {
    %c0 = arith.constant 0 : index
    %c0_0 = arith.constant 0 : index
    %0 = vector.load %arg1[%c0, %c0_0] : memref<64x128xf32, #tpu.memory_space<vmem>>, vector<64x128xf32>
    %c0_1 = arith.constant 0 : index
    %c0_2 = arith.constant 0 : index
    %c0_3 = arith.constant 0 : index
    %1 = vector.load %arg2[%c0_1, %c0_2, %c0_3] : memref<116x1x128xf32, #tpu.memory_space<vmem>>, vector<1x1x128xf32>
    %2 = vector.shape_cast %1 : vector<1x1x128xf32> to vector<1x128xf32>
    %c2_i32 = arith.constant 2 : i32
    %3 = tpu.dynamic_rotate %0 by %c2_i32 dim 0 : vector<64x128xf32>, i32 -> vector<64x128xf32>
    %c8_i32 = arith.constant 8 : i32
    %4 = tpu.dynamic_rotate %3 by %c8_i32 dim 1 : vector<64x128xf32>, i32 -> vector<64x128xf32>
    %c6 = arith.constant 6 : index
    %c0_4 = arith.constant 0 : index
    %c0_5 = arith.constant 0 : index
    %5 = vector.load %arg2[%c6, %c0_4, %c0_5] : memref<116x1x128xf32, #tpu.memory_space<vmem>>, vector<1x1x128xf32>
    %6 = vector.shape_cast %5 : vector<1x1x128xf32> to vector<1x128xf32>
    %7 = vector.broadcast %6 : vector<1x128xf32> to vector<64x128xf32>
    %8 = arith.mulf %4, %7 : vector<64x128xf32>
    %9 = vector.broadcast %2 : vector<1x128xf32> to vector<64x128xf32>
    %10 = arith.addf %9, %8 : vector<64x128xf32>
    %c4_i32 = arith.constant 4 : i32
    %11 = tpu.dynamic_rotate %3 by %c4_i32 dim 1 : vector<64x128xf32>, i32 -> vector<64x128xf32>
    %c7 = arith.constant 7 : index
    %c0_6 = arith.constant 0 : index
    %c0_7 = arith.constant 0 : index
    %12 = vector.load %arg2[%c7, %c0_6, %c0_7] : memref<116x1x128xf32, #tpu.memory_space<vmem>>, vector<1x1x128xf32>
    %13 = vector.shape_cast %12 : vector<1x1x128xf32> to vector<1x128xf32>
    %14 = vector.broadcast %13 : vector<1x128xf32> to vector<64x128xf32>
    %15 = arith.mulf %11, %14 : vector<64x128xf32>
    %16 = arith.addf %10, %15 : vector<64x128xf32>
    %c8 = arith.constant 8 : index
    %c0_8 = arith.constant 0 : index
    %c0_9 = arith.constant 0 : index
    %17 = vector.load %arg2[%c8, %c0_8, %c0_9] : memref<116x1x128xf32, #tpu.memory_space<vmem>>, vector<1x1x128xf32>
    %18 = vector.shape_cast %17 : vector<1x1x128xf32> to vector<1x128xf32>
    %19 = vector.broadcast %18 : vector<1x128xf32> to vector<64x128xf32>
    %20 = arith.mulf %3, %19 : vector<64x128xf32>
    %21 = arith.addf %16, %20 : vector<64x128xf32>
    %c124_i32 = arith.constant 124 : i32
    %22 = tpu.dynamic_rotate %3 by %c124_i32 dim 1 : vector<64x128xf32>, i32 -> vector<64x128xf32>
    %c9 = arith.constant 9 : index
    %c0_10 = arith.constant 0 : index
    %c0_11 = arith.constant 0 : index
    %23 = vector.load %arg2[%c9, %c0_10, %c0_11] : memref<116x1x128xf32, #tpu.memory_space<vmem>>, vector<1x1x128xf32>
    %24 = vector.shape_cast %23 : vector<1x1x128xf32> to vector<1x128xf32>
    %25 = vector.broadcast %24 : vector<1x128xf32> to vector<64x128xf32>
    %26 = arith.mulf %22, %25 : vector<64x128xf32>
    %27 = arith.addf %21, %26 : vector<64x128xf32>
    %c120_i32 = arith.constant 120 : i32
    %28 = tpu.dynamic_rotate %3 by %c120_i32 dim 1 : vector<64x128xf32>, i32 -> vector<64x128xf32>
    %c10 = arith.constant 10 : index
    %c0_12 = arith.constant 0 : index
    %c0_13 = arith.constant 0 : index
    %29 = vector.load %arg2[%c10, %c0_12, %c0_13] : memref<116x1x128xf32, #tpu.memory_space<vmem>>, vector<1x1x128xf32>
    %30 = vector.shape_cast %29 : vector<1x1x128xf32> to vector<1x128xf32>
    %31 = vector.broadcast %30 : vector<1x128xf32> to vector<64x128xf32>
    %32 = arith.mulf %28, %31 : vector<64x128xf32>
    %33 = arith.addf %27, %32 : vector<64x128xf32>
    %c1_i32 = arith.constant 1 : i32
    %34 = tpu.dynamic_rotate %0 by %c1_i32 dim 0 : vector<64x128xf32>, i32 -> vector<64x128xf32>
    %c8_i32_14 = arith.constant 8 : i32
    %35 = tpu.dynamic_rotate %34 by %c8_i32_14 dim 1 : vector<64x128xf32>, i32 -> vector<64x128xf32>
    %c11 = arith.constant 11 : index
    %c0_15 = arith.constant 0 : index
    %c0_16 = arith.constant 0 : index
    %36 = vector.load %arg2[%c11, %c0_15, %c0_16] : memref<116x1x128xf32, #tpu.memory_space<vmem>>, vector<1x1x128xf32>
    %37 = vector.shape_cast %36 : vector<1x1x128xf32> to vector<1x128xf32>
    %38 = vector.broadcast %37 : vector<1x128xf32> to vector<64x128xf32>
    %39 = arith.mulf %35, %38 : vector<64x128xf32>
    %40 = arith.addf %33, %39 : vector<64x128xf32>
    %c4_i32_17 = arith.constant 4 : i32
    %41 = tpu.dynamic_rotate %34 by %c4_i32_17 dim 1 : vector<64x128xf32>, i32 -> vector<64x128xf32>
    %c12 = arith.constant 12 : index
    %c0_18 = arith.constant 0 : index
    %c0_19 = arith.constant 0 : index
    %42 = vector.load %arg2[%c12, %c0_18, %c0_19] : memref<116x1x128xf32, #tpu.memory_space<vmem>>, vector<1x1x128xf32>
    %43 = vector.shape_cast %42 : vector<1x1x128xf32> to vector<1x128xf32>
    %44 = vector.broadcast %43 : vector<1x128xf32> to vector<64x128xf32>
    %45 = arith.mulf %41, %44 : vector<64x128xf32>
    %46 = arith.addf %40, %45 : vector<64x128xf32>
    %c13 = arith.constant 13 : index
    %c0_20 = arith.constant 0 : index
    %c0_21 = arith.constant 0 : index
    %47 = vector.load %arg2[%c13, %c0_20, %c0_21] : memref<116x1x128xf32, #tpu.memory_space<vmem>>, vector<1x1x128xf32>
    %48 = vector.shape_cast %47 : vector<1x1x128xf32> to vector<1x128xf32>
    %49 = vector.broadcast %48 : vector<1x128xf32> to vector<64x128xf32>
    %50 = arith.mulf %34, %49 : vector<64x128xf32>
    %51 = arith.addf %46, %50 : vector<64x128xf32>
    %c124_i32_22 = arith.constant 124 : i32
    %52 = tpu.dynamic_rotate %34 by %c124_i32_22 dim 1 : vector<64x128xf32>, i32 -> vector<64x128xf32>
    %c14 = arith.constant 14 : index
    %c0_23 = arith.constant 0 : index
    %c0_24 = arith.constant 0 : index
    %53 = vector.load %arg2[%c14, %c0_23, %c0_24] : memref<116x1x128xf32, #tpu.memory_space<vmem>>, vector<1x1x128xf32>
    %54 = vector.shape_cast %53 : vector<1x1x128xf32> to vector<1x128xf32>
    %55 = vector.broadcast %54 : vector<1x128xf32> to vector<64x128xf32>
    %56 = arith.mulf %52, %55 : vector<64x128xf32>
    %57 = arith.addf %51, %56 : vector<64x128xf32>
    %c120_i32_25 = arith.constant 120 : i32
    %58 = tpu.dynamic_rotate %34 by %c120_i32_25 dim 1 : vector<64x128xf32>, i32 -> vector<64x128xf32>
    %c15 = arith.constant 15 : index
    %c0_26 = arith.constant 0 : index
    %c0_27 = arith.constant 0 : index
    %59 = vector.load %arg2[%c15, %c0_26, %c0_27] : memref<116x1x128xf32, #tpu.memory_space<vmem>>, vector<1x1x128xf32>
    %60 = vector.shape_cast %59 : vector<1x1x128xf32> to vector<1x128xf32>
    %61 = vector.broadcast %60 : vector<1x128xf32> to vector<64x128xf32>
    %62 = arith.mulf %58, %61 : vector<64x128xf32>
    %63 = arith.addf %57, %62 : vector<64x128xf32>
    %c8_i32_28 = arith.constant 8 : i32
    %64 = tpu.dynamic_rotate %0 by %c8_i32_28 dim 1 : vector<64x128xf32>, i32 -> vector<64x128xf32>
    %c16 = arith.constant 16 : index
    %c0_29 = arith.constant 0 : index
    %c0_30 = arith.constant 0 : index
    %65 = vector.load %arg2[%c16, %c0_29, %c0_30] : memref<116x1x128xf32, #tpu.memory_space<vmem>>, vector<1x1x128xf32>
    %66 = vector.shape_cast %65 : vector<1x1x128xf32> to vector<1x128xf32>
    %67 = vector.broadcast %66 : vector<1x128xf32> to vector<64x128xf32>
    %68 = arith.mulf %64, %67 : vector<64x128xf32>
    %69 = arith.addf %63, %68 : vector<64x128xf32>
    %c4_i32_31 = arith.constant 4 : i32
    %70 = tpu.dynamic_rotate %0 by %c4_i32_31 dim 1 : vector<64x128xf32>, i32 -> vector<64x128xf32>
    %c17 = arith.constant 17 : index
    %c0_32 = arith.constant 0 : index
    %c0_33 = arith.constant 0 : index
    %71 = vector.load %arg2[%c17, %c0_32, %c0_33] : memref<116x1x128xf32, #tpu.memory_space<vmem>>, vector<1x1x128xf32>
    %72 = vector.shape_cast %71 : vector<1x1x128xf32> to vector<1x128xf32>
    %73 = vector.broadcast %72 : vector<1x128xf32> to vector<64x128xf32>
    %74 = arith.mulf %70, %73 : vector<64x128xf32>
    %75 = arith.addf %69, %74 : vector<64x128xf32>
    %c18 = arith.constant 18 : index
    %c0_34 = arith.constant 0 : index
    %c0_35 = arith.constant 0 : index
    %76 = vector.load %arg2[%c18, %c0_34, %c0_35] : memref<116x1x128xf32, #tpu.memory_space<vmem>>, vector<1x1x128xf32>
    %77 = vector.shape_cast %76 : vector<1x1x128xf32> to vector<1x128xf32>
    %78 = vector.broadcast %77 : vector<1x128xf32> to vector<64x128xf32>
    %79 = arith.mulf %0, %78 : vector<64x128xf32>
    %80 = arith.addf %75, %79 : vector<64x128xf32>
    %c124_i32_36 = arith.constant 124 : i32
    %81 = tpu.dynamic_rotate %0 by %c124_i32_36 dim 1 : vector<64x128xf32>, i32 -> vector<64x128xf32>
    %c19 = arith.constant 19 : index
    %c0_37 = arith.constant 0 : index
    %c0_38 = arith.constant 0 : index
    %82 = vector.load %arg2[%c19, %c0_37, %c0_38] : memref<116x1x128xf32, #tpu.memory_space<vmem>>, vector<1x1x128xf32>
    %83 = vector.shape_cast %82 : vector<1x1x128xf32> to vector<1x128xf32>
    %84 = vector.broadcast %83 : vector<1x128xf32> to vector<64x128xf32>
    %85 = arith.mulf %81, %84 : vector<64x128xf32>
    %86 = arith.addf %80, %85 : vector<64x128xf32>
    %c120_i32_39 = arith.constant 120 : i32
    %87 = tpu.dynamic_rotate %0 by %c120_i32_39 dim 1 : vector<64x128xf32>, i32 -> vector<64x128xf32>
    %c20 = arith.constant 20 : index
    %c0_40 = arith.constant 0 : index
    %c0_41 = arith.constant 0 : index
    %88 = vector.load %arg2[%c20, %c0_40, %c0_41] : memref<116x1x128xf32, #tpu.memory_space<vmem>>, vector<1x1x128xf32>
    %89 = vector.shape_cast %88 : vector<1x1x128xf32> to vector<1x128xf32>
    %90 = vector.broadcast %89 : vector<1x128xf32> to vector<64x128xf32>
    %91 = arith.mulf %87, %90 : vector<64x128xf32>
    %92 = arith.addf %86, %91 : vector<64x128xf32>
    %c63_i32 = arith.constant 63 : i32
    %93 = tpu.dynamic_rotate %0 by %c63_i32 dim 0 : vector<64x128xf32>, i32 -> vector<64x128xf32>
    %c8_i32_42 = arith.constant 8 : i32
    %94 = tpu.dynamic_rotate %93 by %c8_i32_42 dim 1 : vector<64x128xf32>, i32 -> vector<64x128xf32>
    %c21 = arith.constant 21 : index
    %c0_43 = arith.constant 0 : index
    %c0_44 = arith.constant 0 : index
    %95 = vector.load %arg2[%c21, %c0_43, %c0_44] : memref<116x1x128xf32, #tpu.memory_space<vmem>>, vector<1x1x128xf32>
    %96 = vector.shape_cast %95 : vector<1x1x128xf32> to vector<1x128xf32>
    %97 = vector.broadcast %96 : vector<1x128xf32> to vector<64x128xf32>
    %98 = arith.mulf %94, %97 : vector<64x128xf32>
    %99 = arith.addf %92, %98 : vector<64x128xf32>
    %c4_i32_45 = arith.constant 4 : i32
    %100 = tpu.dynamic_rotate %93 by %c4_i32_45 dim 1 : vector<64x128xf32>, i32 -> vector<64x128xf32>
    %c22 = arith.constant 22 : index
    %c0_46 = arith.constant 0 : index
    %c0_47 = arith.constant 0 : index
    %101 = vector.load %arg2[%c22, %c0_46, %c0_47] : memref<116x1x128xf32, #tpu.memory_space<vmem>>, vector<1x1x128xf32>
    %102 = vector.shape_cast %101 : vector<1x1x128xf32> to vector<1x128xf32>
    %103 = vector.broadcast %102 : vector<1x128xf32> to vector<64x128xf32>
    %104 = arith.mulf %100, %103 : vector<64x128xf32>
    %105 = arith.addf %99, %104 : vector<64x128xf32>
    %c23 = arith.constant 23 : index
    %c0_48 = arith.constant 0 : index
    %c0_49 = arith.constant 0 : index
    %106 = vector.load %arg2[%c23, %c0_48, %c0_49] : memref<116x1x128xf32, #tpu.memory_space<vmem>>, vector<1x1x128xf32>
    %107 = vector.shape_cast %106 : vector<1x1x128xf32> to vector<1x128xf32>
    %108 = vector.broadcast %107 : vector<1x128xf32> to vector<64x128xf32>
    %109 = arith.mulf %93, %108 : vector<64x128xf32>
    %110 = arith.addf %105, %109 : vector<64x128xf32>
    %c124_i32_50 = arith.constant 124 : i32
    %111 = tpu.dynamic_rotate %93 by %c124_i32_50 dim 1 : vector<64x128xf32>, i32 -> vector<64x128xf32>
    %c24 = arith.constant 24 : index
    %c0_51 = arith.constant 0 : index
    %c0_52 = arith.constant 0 : index
    %112 = vector.load %arg2[%c24, %c0_51, %c0_52] : memref<116x1x128xf32, #tpu.memory_space<vmem>>, vector<1x1x128xf32>
    %113 = vector.shape_cast %112 : vector<1x1x128xf32> to vector<1x128xf32>
    %114 = vector.broadcast %113 : vector<1x128xf32> to vector<64x128xf32>
    %115 = arith.mulf %111, %114 : vector<64x128xf32>
    %116 = arith.addf %110, %115 : vector<64x128xf32>
    %c120_i32_53 = arith.constant 120 : i32
    %117 = tpu.dynamic_rotate %93 by %c120_i32_53 dim 1 : vector<64x128xf32>, i32 -> vector<64x128xf32>
    %c25 = arith.constant 25 : index
    %c0_54 = arith.constant 0 : index
    %c0_55 = arith.constant 0 : index
    %118 = vector.load %arg2[%c25, %c0_54, %c0_55] : memref<116x1x128xf32, #tpu.memory_space<vmem>>, vector<1x1x128xf32>
    %119 = vector.shape_cast %118 : vector<1x1x128xf32> to vector<1x128xf32>
    %120 = vector.broadcast %119 : vector<1x128xf32> to vector<64x128xf32>
    %121 = arith.mulf %117, %120 : vector<64x128xf32>
    %122 = arith.addf %116, %121 : vector<64x128xf32>
    %c62_i32 = arith.constant 62 : i32
    %123 = tpu.dynamic_rotate %0 by %c62_i32 dim 0 : vector<64x128xf32>, i32 -> vector<64x128xf32>
    %c8_i32_56 = arith.constant 8 : i32
    %124 = tpu.dynamic_rotate %123 by %c8_i32_56 dim 1 : vector<64x128xf32>, i32 -> vector<64x128xf32>
    %c26 = arith.constant 26 : index
    %c0_57 = arith.constant 0 : index
    %c0_58 = arith.constant 0 : index
    %125 = vector.load %arg2[%c26, %c0_57, %c0_58] : memref<116x1x128xf32, #tpu.memory_space<vmem>>, vector<1x1x128xf32>
    %126 = vector.shape_cast %125 : vector<1x1x128xf32> to vector<1x128xf32>
    %127 = vector.broadcast %126 : vector<1x128xf32> to vector<64x128xf32>
    %128 = arith.mulf %124, %127 : vector<64x128xf32>
    %129 = arith.addf %122, %128 : vector<64x128xf32>
    %c4_i32_59 = arith.constant 4 : i32
    %130 = tpu.dynamic_rotate %123 by %c4_i32_59 dim 1 : vector<64x128xf32>, i32 -> vector<64x128xf32>
    %c27 = arith.constant 27 : index
    %c0_60 = arith.constant 0 : index
    %c0_61 = arith.constant 0 : index
    %131 = vector.load %arg2[%c27, %c0_60, %c0_61] : memref<116x1x128xf32, #tpu.memory_space<vmem>>, vector<1x1x128xf32>
    %132 = vector.shape_cast %131 : vector<1x1x128xf32> to vector<1x128xf32>
    %133 = vector.broadcast %132 : vector<1x128xf32> to vector<64x128xf32>
    %134 = arith.mulf %130, %133 : vector<64x128xf32>
    %135 = arith.addf %129, %134 : vector<64x128xf32>
    %c28 = arith.constant 28 : index
    %c0_62 = arith.constant 0 : index
    %c0_63 = arith.constant 0 : index
    %136 = vector.load %arg2[%c28, %c0_62, %c0_63] : memref<116x1x128xf32, #tpu.memory_space<vmem>>, vector<1x1x128xf32>
    %137 = vector.shape_cast %136 : vector<1x1x128xf32> to vector<1x128xf32>
    %138 = vector.broadcast %137 : vector<1x128xf32> to vector<64x128xf32>
    %139 = arith.mulf %123, %138 : vector<64x128xf32>
    %140 = arith.addf %135, %139 : vector<64x128xf32>
    %c124_i32_64 = arith.constant 124 : i32
    %141 = tpu.dynamic_rotate %123 by %c124_i32_64 dim 1 : vector<64x128xf32>, i32 -> vector<64x128xf32>
    %c29 = arith.constant 29 : index
    %c0_65 = arith.constant 0 : index
    %c0_66 = arith.constant 0 : index
    %142 = vector.load %arg2[%c29, %c0_65, %c0_66] : memref<116x1x128xf32, #tpu.memory_space<vmem>>, vector<1x1x128xf32>
    %143 = vector.shape_cast %142 : vector<1x1x128xf32> to vector<1x128xf32>
    %144 = vector.broadcast %143 : vector<1x128xf32> to vector<64x128xf32>
    %145 = arith.mulf %141, %144 : vector<64x128xf32>
    %146 = arith.addf %140, %145 : vector<64x128xf32>
    %c120_i32_67 = arith.constant 120 : i32
    %147 = tpu.dynamic_rotate %123 by %c120_i32_67 dim 1 : vector<64x128xf32>, i32 -> vector<64x128xf32>
    %c30 = arith.constant 30 : index
    %c0_68 = arith.constant 0 : index
    %c0_69 = arith.constant 0 : index
    %148 = vector.load %arg2[%c30, %c0_68, %c0_69] : memref<116x1x128xf32, #tpu.memory_space<vmem>>, vector<1x1x128xf32>
    %149 = vector.shape_cast %148 : vector<1x1x128xf32> to vector<1x128xf32>
    %150 = vector.broadcast %149 : vector<1x128xf32> to vector<64x128xf32>
    %151 = arith.mulf %147, %150 : vector<64x128xf32>
    %152 = arith.addf %146, %151 : vector<64x128xf32>
    %c1 = arith.constant 1 : index
    %c0_70 = arith.constant 0 : index
    %c0_71 = arith.constant 0 : index
    %153 = vector.load %arg2[%c1, %c0_70, %c0_71] : memref<116x1x128xf32, #tpu.memory_space<vmem>>, vector<1x1x128xf32>
    %154 = vector.shape_cast %153 : vector<1x1x128xf32> to vector<1x128xf32>
    %c2 = arith.constant 2 : index
    %c0_72 = arith.constant 0 : index
    %c0_73 = arith.constant 0 : index
    %155 = vector.load %arg2[%c2, %c0_72, %c0_73] : memref<116x1x128xf32, #tpu.memory_space<vmem>>, vector<1x1x128xf32>
    %156 = vector.shape_cast %155 : vector<1x1x128xf32> to vector<1x128xf32>
    %c3 = arith.constant 3 : index
    %c0_74 = arith.constant 0 : index
    %c0_75 = arith.constant 0 : index
    %157 = vector.load %arg2[%c3, %c0_74, %c0_75] : memref<116x1x128xf32, #tpu.memory_space<vmem>>, vector<1x1x128xf32>
    %158 = vector.shape_cast %157 : vector<1x1x128xf32> to vector<1x128xf32>
    %c40_i32 = arith.constant 40 : i32
    %159 = tpu.dynamic_rotate %152 by %c40_i32 dim 1 : vector<64x128xf32>, i32 -> vector<64x128xf32>
    %c49 = arith.constant 49 : index
    %c0_76 = arith.constant 0 : index
    %c0_77 = arith.constant 0 : index
    %160 = vector.load %arg2[%c49, %c0_76, %c0_77] : memref<116x1x128xf32, #tpu.memory_space<vmem>>, vector<1x1x128xf32>
    %161 = vector.shape_cast %160 : vector<1x1x128xf32> to vector<1x128xf32>
    %162 = vector.broadcast %161 : vector<1x128xf32> to vector<64x128xf32>
    %163 = arith.mulf %159, %162 : vector<64x128xf32>
    %164 = vector.broadcast %158 : vector<1x128xf32> to vector<64x128xf32>
    %165 = arith.addf %164, %163 : vector<64x128xf32>
    %c36_i32 = arith.constant 36 : i32
    %166 = tpu.dynamic_rotate %152 by %c36_i32 dim 1 : vector<64x128xf32>, i32 -> vector<64x128xf32>
    %c50 = arith.constant 50 : index
    %c0_78 = arith.constant 0 : index
    %c0_79 = arith.constant 0 : index
    %167 = vector.load %arg2[%c50, %c0_78, %c0_79] : memref<116x1x128xf32, #tpu.memory_space<vmem>>, vector<1x1x128xf32>
    %168 = vector.shape_cast %167 : vector<1x1x128xf32> to vector<1x128xf32>
    %169 = vector.broadcast %168 : vector<1x128xf32> to vector<64x128xf32>
    %170 = arith.mulf %166, %169 : vector<64x128xf32>
    %171 = arith.addf %165, %170 : vector<64x128xf32>
    %c32_i32 = arith.constant 32 : i32
    %172 = tpu.dynamic_rotate %152 by %c32_i32 dim 1 : vector<64x128xf32>, i32 -> vector<64x128xf32>
    %c51 = arith.constant 51 : index
    %c0_80 = arith.constant 0 : index
    %c0_81 = arith.constant 0 : index
    %173 = vector.load %arg2[%c51, %c0_80, %c0_81] : memref<116x1x128xf32, #tpu.memory_space<vmem>>, vector<1x1x128xf32>
    %174 = vector.shape_cast %173 : vector<1x1x128xf32> to vector<1x128xf32>
    %175 = vector.broadcast %174 : vector<1x128xf32> to vector<64x128xf32>
    %176 = arith.mulf %172, %175 : vector<64x128xf32>
    %177 = arith.addf %171, %176 : vector<64x128xf32>
    %c28_i32 = arith.constant 28 : i32
    %178 = tpu.dynamic_rotate %152 by %c28_i32 dim 1 : vector<64x128xf32>, i32 -> vector<64x128xf32>
    %c52 = arith.constant 52 : index
    %c0_82 = arith.constant 0 : index
    %c0_83 = arith.constant 0 : index
    %179 = vector.load %arg2[%c52, %c0_82, %c0_83] : memref<116x1x128xf32, #tpu.memory_space<vmem>>, vector<1x1x128xf32>
    %180 = vector.shape_cast %179 : vector<1x1x128xf32> to vector<1x128xf32>
    %181 = vector.broadcast %180 : vector<1x128xf32> to vector<64x128xf32>
    %182 = arith.mulf %178, %181 : vector<64x128xf32>
    %183 = arith.addf %177, %182 : vector<64x128xf32>
    %c24_i32 = arith.constant 24 : i32
    %184 = tpu.dynamic_rotate %152 by %c24_i32 dim 1 : vector<64x128xf32>, i32 -> vector<64x128xf32>
    %c53 = arith.constant 53 : index
    %c0_84 = arith.constant 0 : index
    %c0_85 = arith.constant 0 : index
    %185 = vector.load %arg2[%c53, %c0_84, %c0_85] : memref<116x1x128xf32, #tpu.memory_space<vmem>>, vector<1x1x128xf32>
    %186 = vector.shape_cast %185 : vector<1x1x128xf32> to vector<1x128xf32>
    %187 = vector.broadcast %186 : vector<1x128xf32> to vector<64x128xf32>
    %188 = arith.mulf %184, %187 : vector<64x128xf32>
    %189 = arith.addf %183, %188 : vector<64x128xf32>
    %c20_i32 = arith.constant 20 : i32
    %190 = tpu.dynamic_rotate %152 by %c20_i32 dim 1 : vector<64x128xf32>, i32 -> vector<64x128xf32>
    %c38 = arith.constant 38 : index
    %c0_86 = arith.constant 0 : index
    %c0_87 = arith.constant 0 : index
    %191 = vector.load %arg2[%c38, %c0_86, %c0_87] : memref<116x1x128xf32, #tpu.memory_space<vmem>>, vector<1x1x128xf32>
    %192 = vector.shape_cast %191 : vector<1x1x128xf32> to vector<1x128xf32>
    %193 = vector.broadcast %192 : vector<1x128xf32> to vector<64x128xf32>
    %194 = arith.mulf %190, %193 : vector<64x128xf32>
    %195 = vector.broadcast %156 : vector<1x128xf32> to vector<64x128xf32>
    %196 = arith.addf %195, %194 : vector<64x128xf32>
    %c54 = arith.constant 54 : index
    %c0_88 = arith.constant 0 : index
    %c0_89 = arith.constant 0 : index
    %197 = vector.load %arg2[%c54, %c0_88, %c0_89] : memref<116x1x128xf32, #tpu.memory_space<vmem>>, vector<1x1x128xf32>
    %198 = vector.shape_cast %197 : vector<1x1x128xf32> to vector<1x128xf32>
    %199 = vector.broadcast %198 : vector<1x128xf32> to vector<64x128xf32>
    %200 = arith.mulf %190, %199 : vector<64x128xf32>
    %201 = arith.addf %189, %200 : vector<64x128xf32>
    %c16_i32 = arith.constant 16 : i32
    %202 = tpu.dynamic_rotate %152 by %c16_i32 dim 1 : vector<64x128xf32>, i32 -> vector<64x128xf32>
    %c39 = arith.constant 39 : index
    %c0_90 = arith.constant 0 : index
    %c0_91 = arith.constant 0 : index
    %203 = vector.load %arg2[%c39, %c0_90, %c0_91] : memref<116x1x128xf32, #tpu.memory_space<vmem>>, vector<1x1x128xf32>
    %204 = vector.shape_cast %203 : vector<1x1x128xf32> to vector<1x128xf32>
    %205 = vector.broadcast %204 : vector<1x128xf32> to vector<64x128xf32>
    %206 = arith.mulf %202, %205 : vector<64x128xf32>
    %207 = arith.addf %196, %206 : vector<64x128xf32>
    %c55 = arith.constant 55 : index
    %c0_92 = arith.constant 0 : index
    %c0_93 = arith.constant 0 : index
    %208 = vector.load %arg2[%c55, %c0_92, %c0_93] : memref<116x1x128xf32, #tpu.memory_space<vmem>>, vector<1x1x128xf32>
    %209 = vector.shape_cast %208 : vector<1x1x128xf32> to vector<1x128xf32>
    %210 = vector.broadcast %209 : vector<1x128xf32> to vector<64x128xf32>
    %211 = arith.mulf %202, %210 : vector<64x128xf32>
    %212 = arith.addf %201, %211 : vector<64x128xf32>
    %c12_i32 = arith.constant 12 : i32
    %213 = tpu.dynamic_rotate %152 by %c12_i32 dim 1 : vector<64x128xf32>, i32 -> vector<64x128xf32>
    %c31 = arith.constant 31 : index
    %c0_94 = arith.constant 0 : index
    %c0_95 = arith.constant 0 : index
    %214 = vector.load %arg2[%c31, %c0_94, %c0_95] : memref<116x1x128xf32, #tpu.memory_space<vmem>>, vector<1x1x128xf32>
    %215 = vector.shape_cast %214 : vector<1x1x128xf32> to vector<1x128xf32>
    %216 = vector.broadcast %215 : vector<1x128xf32> to vector<64x128xf32>
    %217 = arith.mulf %213, %216 : vector<64x128xf32>
    %218 = vector.broadcast %154 : vector<1x128xf32> to vector<64x128xf32>
    %219 = arith.addf %218, %217 : vector<64x128xf32>
    %c40 = arith.constant 40 : index
    %c0_96 = arith.constant 0 : index
    %c0_97 = arith.constant 0 : index
    %220 = vector.load %arg2[%c40, %c0_96, %c0_97] : memref<116x1x128xf32, #tpu.memory_space<vmem>>, vector<1x1x128xf32>
    %221 = vector.shape_cast %220 : vector<1x1x128xf32> to vector<1x128xf32>
    %222 = vector.broadcast %221 : vector<1x128xf32> to vector<64x128xf32>
    %223 = arith.mulf %213, %222 : vector<64x128xf32>
    %224 = arith.addf %207, %223 : vector<64x128xf32>
    %c56 = arith.constant 56 : index
    %c0_98 = arith.constant 0 : index
    %c0_99 = arith.constant 0 : index
    %225 = vector.load %arg2[%c56, %c0_98, %c0_99] : memref<116x1x128xf32, #tpu.memory_space<vmem>>, vector<1x1x128xf32>
    %226 = vector.shape_cast %225 : vector<1x1x128xf32> to vector<1x128xf32>
    %227 = vector.broadcast %226 : vector<1x128xf32> to vector<64x128xf32>
    %228 = arith.mulf %213, %227 : vector<64x128xf32>
    %229 = arith.addf %212, %228 : vector<64x128xf32>
    %c8_i32_100 = arith.constant 8 : i32
    %230 = tpu.dynamic_rotate %152 by %c8_i32_100 dim 1 : vector<64x128xf32>, i32 -> vector<64x128xf32>
    %c32 = arith.constant 32 : index
    %c0_101 = arith.constant 0 : index
    %c0_102 = arith.constant 0 : index
    %231 = vector.load %arg2[%c32, %c0_101, %c0_102] : memref<116x1x128xf32, #tpu.memory_space<vmem>>, vector<1x1x128xf32>
    %232 = vector.shape_cast %231 : vector<1x1x128xf32> to vector<1x128xf32>
    %233 = vector.broadcast %232 : vector<1x128xf32> to vector<64x128xf32>
    %234 = arith.mulf %230, %233 : vector<64x128xf32>
    %235 = arith.addf %219, %234 : vector<64x128xf32>
    %c41 = arith.constant 41 : index
    %c0_103 = arith.constant 0 : index
    %c0_104 = arith.constant 0 : index
    %236 = vector.load %arg2[%c41, %c0_103, %c0_104] : memref<116x1x128xf32, #tpu.memory_space<vmem>>, vector<1x1x128xf32>
    %237 = vector.shape_cast %236 : vector<1x1x128xf32> to vector<1x128xf32>
    %238 = vector.broadcast %237 : vector<1x128xf32> to vector<64x128xf32>
    %239 = arith.mulf %230, %238 : vector<64x128xf32>
    %240 = arith.addf %224, %239 : vector<64x128xf32>
    %c57 = arith.constant 57 : index
    %c0_105 = arith.constant 0 : index
    %c0_106 = arith.constant 0 : index
    %241 = vector.load %arg2[%c57, %c0_105, %c0_106] : memref<116x1x128xf32, #tpu.memory_space<vmem>>, vector<1x1x128xf32>
    %242 = vector.shape_cast %241 : vector<1x1x128xf32> to vector<1x128xf32>
    %243 = vector.broadcast %242 : vector<1x128xf32> to vector<64x128xf32>
    %244 = arith.mulf %230, %243 : vector<64x128xf32>
    %245 = arith.addf %229, %244 : vector<64x128xf32>
    %c4_i32_107 = arith.constant 4 : i32
    %246 = tpu.dynamic_rotate %152 by %c4_i32_107 dim 1 : vector<64x128xf32>, i32 -> vector<64x128xf32>
    %c33 = arith.constant 33 : index
    %c0_108 = arith.constant 0 : index
    %c0_109 = arith.constant 0 : index
    %247 = vector.load %arg2[%c33, %c0_108, %c0_109] : memref<116x1x128xf32, #tpu.memory_space<vmem>>, vector<1x1x128xf32>
    %248 = vector.shape_cast %247 : vector<1x1x128xf32> to vector<1x128xf32>
    %249 = vector.broadcast %248 : vector<1x128xf32> to vector<64x128xf32>
    %250 = arith.mulf %246, %249 : vector<64x128xf32>
    %251 = arith.addf %235, %250 : vector<64x128xf32>
    %c42 = arith.constant 42 : index
    %c0_110 = arith.constant 0 : index
    %c0_111 = arith.constant 0 : index
    %252 = vector.load %arg2[%c42, %c0_110, %c0_111] : memref<116x1x128xf32, #tpu.memory_space<vmem>>, vector<1x1x128xf32>
    %253 = vector.shape_cast %252 : vector<1x1x128xf32> to vector<1x128xf32>
    %254 = vector.broadcast %253 : vector<1x128xf32> to vector<64x128xf32>
    %255 = arith.mulf %246, %254 : vector<64x128xf32>
    %256 = arith.addf %240, %255 : vector<64x128xf32>
    %c58 = arith.constant 58 : index
    %c0_112 = arith.constant 0 : index
    %c0_113 = arith.constant 0 : index
    %257 = vector.load %arg2[%c58, %c0_112, %c0_113] : memref<116x1x128xf32, #tpu.memory_space<vmem>>, vector<1x1x128xf32>
    %258 = vector.shape_cast %257 : vector<1x1x128xf32> to vector<1x128xf32>
    %259 = vector.broadcast %258 : vector<1x128xf32> to vector<64x128xf32>
    %260 = arith.mulf %246, %259 : vector<64x128xf32>
    %261 = arith.addf %245, %260 : vector<64x128xf32>
    %c34 = arith.constant 34 : index
    %c0_114 = arith.constant 0 : index
    %c0_115 = arith.constant 0 : index
    %262 = vector.load %arg2[%c34, %c0_114, %c0_115] : memref<116x1x128xf32, #tpu.memory_space<vmem>>, vector<1x1x128xf32>
    %263 = vector.shape_cast %262 : vector<1x1x128xf32> to vector<1x128xf32>
    %264 = vector.broadcast %263 : vector<1x128xf32> to vector<64x128xf32>
    %265 = arith.mulf %152, %264 : vector<64x128xf32>
    %266 = arith.addf %251, %265 : vector<64x128xf32>
    %c43 = arith.constant 43 : index
    %c0_116 = arith.constant 0 : index
    %c0_117 = arith.constant 0 : index
    %267 = vector.load %arg2[%c43, %c0_116, %c0_117] : memref<116x1x128xf32, #tpu.memory_space<vmem>>, vector<1x1x128xf32>
    %268 = vector.shape_cast %267 : vector<1x1x128xf32> to vector<1x128xf32>
    %269 = vector.broadcast %268 : vector<1x128xf32> to vector<64x128xf32>
    %270 = arith.mulf %152, %269 : vector<64x128xf32>
    %271 = arith.addf %256, %270 : vector<64x128xf32>
    %c59 = arith.constant 59 : index
    %c0_118 = arith.constant 0 : index
    %c0_119 = arith.constant 0 : index
    %272 = vector.load %arg2[%c59, %c0_118, %c0_119] : memref<116x1x128xf32, #tpu.memory_space<vmem>>, vector<1x1x128xf32>
    %273 = vector.shape_cast %272 : vector<1x1x128xf32> to vector<1x128xf32>
    %274 = vector.broadcast %273 : vector<1x128xf32> to vector<64x128xf32>
    %275 = arith.mulf %152, %274 : vector<64x128xf32>
    %276 = arith.addf %261, %275 : vector<64x128xf32>
    %c124_i32_120 = arith.constant 124 : i32
    %277 = tpu.dynamic_rotate %152 by %c124_i32_120 dim 1 : vector<64x128xf32>, i32 -> vector<64x128xf32>
    %c35 = arith.constant 35 : index
    %c0_121 = arith.constant 0 : index
    %c0_122 = arith.constant 0 : index
    %278 = vector.load %arg2[%c35, %c0_121, %c0_122] : memref<116x1x128xf32, #tpu.memory_space<vmem>>, vector<1x1x128xf32>
    %279 = vector.shape_cast %278 : vector<1x1x128xf32> to vector<1x128xf32>
    %280 = vector.broadcast %279 : vector<1x128xf32> to vector<64x128xf32>
    %281 = arith.mulf %277, %280 : vector<64x128xf32>
    %282 = arith.addf %266, %281 : vector<64x128xf32>
    %c44 = arith.constant 44 : index
    %c0_123 = arith.constant 0 : index
    %c0_124 = arith.constant 0 : index
    %283 = vector.load %arg2[%c44, %c0_123, %c0_124] : memref<116x1x128xf32, #tpu.memory_space<vmem>>, vector<1x1x128xf32>
    %284 = vector.shape_cast %283 : vector<1x1x128xf32> to vector<1x128xf32>
    %285 = vector.broadcast %284 : vector<1x128xf32> to vector<64x128xf32>
    %286 = arith.mulf %277, %285 : vector<64x128xf32>
    %287 = arith.addf %271, %286 : vector<64x128xf32>
    %c60 = arith.constant 60 : index
    %c0_125 = arith.constant 0 : index
    %c0_126 = arith.constant 0 : index
    %288 = vector.load %arg2[%c60, %c0_125, %c0_126] : memref<116x1x128xf32, #tpu.memory_space<vmem>>, vector<1x1x128xf32>
    %289 = vector.shape_cast %288 : vector<1x1x128xf32> to vector<1x128xf32>
    %290 = vector.broadcast %289 : vector<1x128xf32> to vector<64x128xf32>
    %291 = arith.mulf %277, %290 : vector<64x128xf32>
    %292 = arith.addf %276, %291 : vector<64x128xf32>
    %c120_i32_127 = arith.constant 120 : i32
    %293 = tpu.dynamic_rotate %152 by %c120_i32_127 dim 1 : vector<64x128xf32>, i32 -> vector<64x128xf32>
    %c36 = arith.constant 36 : index
    %c0_128 = arith.constant 0 : index
    %c0_129 = arith.constant 0 : index
    %294 = vector.load %arg2[%c36, %c0_128, %c0_129] : memref<116x1x128xf32, #tpu.memory_space<vmem>>, vector<1x1x128xf32>
    %295 = vector.shape_cast %294 : vector<1x1x128xf32> to vector<1x128xf32>
    %296 = vector.broadcast %295 : vector<1x128xf32> to vector<64x128xf32>
    %297 = arith.mulf %293, %296 : vector<64x128xf32>
    %298 = arith.addf %282, %297 : vector<64x128xf32>
    %c45 = arith.constant 45 : index
    %c0_130 = arith.constant 0 : index
    %c0_131 = arith.constant 0 : index
    %299 = vector.load %arg2[%c45, %c0_130, %c0_131] : memref<116x1x128xf32, #tpu.memory_space<vmem>>, vector<1x1x128xf32>
    %300 = vector.shape_cast %299 : vector<1x1x128xf32> to vector<1x128xf32>
    %301 = vector.broadcast %300 : vector<1x128xf32> to vector<64x128xf32>
    %302 = arith.mulf %293, %301 : vector<64x128xf32>
    %303 = arith.addf %287, %302 : vector<64x128xf32>
    %c61 = arith.constant 61 : index
    %c0_132 = arith.constant 0 : index
    %c0_133 = arith.constant 0 : index
    %304 = vector.load %arg2[%c61, %c0_132, %c0_133] : memref<116x1x128xf32, #tpu.memory_space<vmem>>, vector<1x1x128xf32>
    %305 = vector.shape_cast %304 : vector<1x1x128xf32> to vector<1x128xf32>
    %306 = vector.broadcast %305 : vector<1x128xf32> to vector<64x128xf32>
    %307 = arith.mulf %293, %306 : vector<64x128xf32>
    %308 = arith.addf %292, %307 : vector<64x128xf32>
    %c116_i32 = arith.constant 116 : i32
    %309 = tpu.dynamic_rotate %152 by %c116_i32 dim 1 : vector<64x128xf32>, i32 -> vector<64x128xf32>
    %c37 = arith.constant 37 : index
    %c0_134 = arith.constant 0 : index
    %c0_135 = arith.constant 0 : index
    %310 = vector.load %arg2[%c37, %c0_134, %c0_135] : memref<116x1x128xf32, #tpu.memory_space<vmem>>, vector<1x1x128xf32>
    %311 = vector.shape_cast %310 : vector<1x1x128xf32> to vector<1x128xf32>
    %312 = vector.broadcast %311 : vector<1x128xf32> to vector<64x128xf32>
    %313 = arith.mulf %309, %312 : vector<64x128xf32>
    %314 = arith.addf %298, %313 : vector<64x128xf32>
    %c46 = arith.constant 46 : index
    %c0_136 = arith.constant 0 : index
    %c0_137 = arith.constant 0 : index
    %315 = vector.load %arg2[%c46, %c0_136, %c0_137] : memref<116x1x128xf32, #tpu.memory_space<vmem>>, vector<1x1x128xf32>
    %316 = vector.shape_cast %315 : vector<1x1x128xf32> to vector<1x128xf32>
    %317 = vector.broadcast %316 : vector<1x128xf32> to vector<64x128xf32>
    %318 = arith.mulf %309, %317 : vector<64x128xf32>
    %319 = arith.addf %303, %318 : vector<64x128xf32>
    %c62 = arith.constant 62 : index
    %c0_138 = arith.constant 0 : index
    %c0_139 = arith.constant 0 : index
    %320 = vector.load %arg2[%c62, %c0_138, %c0_139] : memref<116x1x128xf32, #tpu.memory_space<vmem>>, vector<1x1x128xf32>
    %321 = vector.shape_cast %320 : vector<1x1x128xf32> to vector<1x128xf32>
    %322 = vector.broadcast %321 : vector<1x128xf32> to vector<64x128xf32>
    %323 = arith.mulf %309, %322 : vector<64x128xf32>
    %324 = arith.addf %308, %323 : vector<64x128xf32>
    %c112_i32 = arith.constant 112 : i32
    %325 = tpu.dynamic_rotate %152 by %c112_i32 dim 1 : vector<64x128xf32>, i32 -> vector<64x128xf32>
    %c47 = arith.constant 47 : index
    %c0_140 = arith.constant 0 : index
    %c0_141 = arith.constant 0 : index
    %326 = vector.load %arg2[%c47, %c0_140, %c0_141] : memref<116x1x128xf32, #tpu.memory_space<vmem>>, vector<1x1x128xf32>
    %327 = vector.shape_cast %326 : vector<1x1x128xf32> to vector<1x128xf32>
    %328 = vector.broadcast %327 : vector<1x128xf32> to vector<64x128xf32>
    %329 = arith.mulf %325, %328 : vector<64x128xf32>
    %330 = arith.addf %319, %329 : vector<64x128xf32>
    %c63 = arith.constant 63 : index
    %c0_142 = arith.constant 0 : index
    %c0_143 = arith.constant 0 : index
    %331 = vector.load %arg2[%c63, %c0_142, %c0_143] : memref<116x1x128xf32, #tpu.memory_space<vmem>>, vector<1x1x128xf32>
    %332 = vector.shape_cast %331 : vector<1x1x128xf32> to vector<1x128xf32>
    %333 = vector.broadcast %332 : vector<1x128xf32> to vector<64x128xf32>
    %334 = arith.mulf %325, %333 : vector<64x128xf32>
    %335 = arith.addf %324, %334 : vector<64x128xf32>
    %c108_i32 = arith.constant 108 : i32
    %336 = tpu.dynamic_rotate %152 by %c108_i32 dim 1 : vector<64x128xf32>, i32 -> vector<64x128xf32>
    %c48 = arith.constant 48 : index
    %c0_144 = arith.constant 0 : index
    %c0_145 = arith.constant 0 : index
    %337 = vector.load %arg2[%c48, %c0_144, %c0_145] : memref<116x1x128xf32, #tpu.memory_space<vmem>>, vector<1x1x128xf32>
    %338 = vector.shape_cast %337 : vector<1x1x128xf32> to vector<1x128xf32>
    %339 = vector.broadcast %338 : vector<1x128xf32> to vector<64x128xf32>
    %340 = arith.mulf %336, %339 : vector<64x128xf32>
    %341 = arith.addf %330, %340 : vector<64x128xf32>
    %c64 = arith.constant 64 : index
    %c0_146 = arith.constant 0 : index
    %c0_147 = arith.constant 0 : index
    %342 = vector.load %arg2[%c64, %c0_146, %c0_147] : memref<116x1x128xf32, #tpu.memory_space<vmem>>, vector<1x1x128xf32>
    %343 = vector.shape_cast %342 : vector<1x1x128xf32> to vector<1x128xf32>
    %344 = vector.broadcast %343 : vector<1x128xf32> to vector<64x128xf32>
    %345 = arith.mulf %336, %344 : vector<64x128xf32>
    %346 = arith.addf %335, %345 : vector<64x128xf32>
    %c104_i32 = arith.constant 104 : i32
    %347 = tpu.dynamic_rotate %152 by %c104_i32 dim 1 : vector<64x128xf32>, i32 -> vector<64x128xf32>
    %c65 = arith.constant 65 : index
    %c0_148 = arith.constant 0 : index
    %c0_149 = arith.constant 0 : index
    %348 = vector.load %arg2[%c65, %c0_148, %c0_149] : memref<116x1x128xf32, #tpu.memory_space<vmem>>, vector<1x1x128xf32>
    %349 = vector.shape_cast %348 : vector<1x1x128xf32> to vector<1x128xf32>
    %350 = vector.broadcast %349 : vector<1x128xf32> to vector<64x128xf32>
    %351 = arith.mulf %347, %350 : vector<64x128xf32>
    %352 = arith.addf %346, %351 : vector<64x128xf32>
    %c100_i32 = arith.constant 100 : i32
    %353 = tpu.dynamic_rotate %152 by %c100_i32 dim 1 : vector<64x128xf32>, i32 -> vector<64x128xf32>
    %c66 = arith.constant 66 : index
    %c0_150 = arith.constant 0 : index
    %c0_151 = arith.constant 0 : index
    %354 = vector.load %arg2[%c66, %c0_150, %c0_151] : memref<116x1x128xf32, #tpu.memory_space<vmem>>, vector<1x1x128xf32>
    %355 = vector.shape_cast %354 : vector<1x1x128xf32> to vector<1x128xf32>
    %356 = vector.broadcast %355 : vector<1x128xf32> to vector<64x128xf32>
    %357 = arith.mulf %353, %356 : vector<64x128xf32>
    %358 = arith.addf %352, %357 : vector<64x128xf32>
    %c96_i32 = arith.constant 96 : i32
    %359 = tpu.dynamic_rotate %152 by %c96_i32 dim 1 : vector<64x128xf32>, i32 -> vector<64x128xf32>
    %c67 = arith.constant 67 : index
    %c0_152 = arith.constant 0 : index
    %c0_153 = arith.constant 0 : index
    %360 = vector.load %arg2[%c67, %c0_152, %c0_153] : memref<116x1x128xf32, #tpu.memory_space<vmem>>, vector<1x1x128xf32>
    %361 = vector.shape_cast %360 : vector<1x1x128xf32> to vector<1x128xf32>
    %362 = vector.broadcast %361 : vector<1x128xf32> to vector<64x128xf32>
    %363 = arith.mulf %359, %362 : vector<64x128xf32>
    %364 = arith.addf %358, %363 : vector<64x128xf32>
    %c92_i32 = arith.constant 92 : i32
    %365 = tpu.dynamic_rotate %152 by %c92_i32 dim 1 : vector<64x128xf32>, i32 -> vector<64x128xf32>
    %c68 = arith.constant 68 : index
    %c0_154 = arith.constant 0 : index
    %c0_155 = arith.constant 0 : index
    %366 = vector.load %arg2[%c68, %c0_154, %c0_155] : memref<116x1x128xf32, #tpu.memory_space<vmem>>, vector<1x1x128xf32>
    %367 = vector.shape_cast %366 : vector<1x1x128xf32> to vector<1x128xf32>
    %368 = vector.broadcast %367 : vector<1x128xf32> to vector<64x128xf32>
    %369 = arith.mulf %365, %368 : vector<64x128xf32>
    %370 = arith.addf %364, %369 : vector<64x128xf32>
    %c88_i32 = arith.constant 88 : i32
    %371 = tpu.dynamic_rotate %152 by %c88_i32 dim 1 : vector<64x128xf32>, i32 -> vector<64x128xf32>
    %c69 = arith.constant 69 : index
    %c0_156 = arith.constant 0 : index
    %c0_157 = arith.constant 0 : index
    %372 = vector.load %arg2[%c69, %c0_156, %c0_157] : memref<116x1x128xf32, #tpu.memory_space<vmem>>, vector<1x1x128xf32>
    %373 = vector.shape_cast %372 : vector<1x1x128xf32> to vector<1x128xf32>
    %374 = vector.broadcast %373 : vector<1x128xf32> to vector<64x128xf32>
    %375 = arith.mulf %371, %374 : vector<64x128xf32>
    %376 = arith.addf %370, %375 : vector<64x128xf32>
    %377 = tpu.iota {dimensions = array<i32: 0>} : vector<64x128xi32>
    %c16_i32_158 = arith.constant 16 : i32
    %378 = vector.broadcast %c16_i32_158 : i32 to vector<64x128xi32>
    %379 = arith.cmpi slt, %377, %378 : vector<64x128xi32>
    %c32_i32_159 = arith.constant 32 : i32
    %380 = vector.broadcast %c32_i32_159 : i32 to vector<64x128xi32>
    %381 = arith.cmpi sge, %377, %380 : vector<64x128xi32>
    %c48_i32 = arith.constant 48 : i32
    %382 = vector.broadcast %c48_i32 : i32 to vector<64x128xi32>
    %383 = arith.cmpi slt, %377, %382 : vector<64x128xi32>
    %384 = arith.andi %381, %383 : vector<64x128xi1>
    %385 = arith.ori %379, %384 : vector<64x128xi1>
    %cst = arith.constant 0.000000e+00 : f32
    %386 = vector.broadcast %cst : f32 to vector<64x128xf32>
    %387 = arith.select %385, %314, %386 : vector<64x128xi1>, vector<64x128xf32>
    %cst_160 = arith.constant 0.000000e+00 : f32
    %388 = vector.broadcast %cst_160 : f32 to vector<64x128xf32>
    %389 = arith.select %385, %341, %388 : vector<64x128xi1>, vector<64x128xf32>
    %cst_161 = arith.constant 0.000000e+00 : f32
    %390 = vector.broadcast %cst_161 : f32 to vector<64x128xf32>
    %391 = arith.select %385, %376, %390 : vector<64x128xi1>, vector<64x128xf32>
    %c4 = arith.constant 4 : index
    %c0_162 = arith.constant 0 : index
    %c0_163 = arith.constant 0 : index
    %392 = vector.load %arg2[%c4, %c0_162, %c0_163] : memref<116x1x128xf32, #tpu.memory_space<vmem>>, vector<1x1x128xf32>
    %393 = vector.shape_cast %392 : vector<1x1x128xf32> to vector<1x128xf32>
    %394 = vector.broadcast %393 : vector<1x128xf32> to vector<64x128xf32>
    %395 = arith.addf %152, %394 : vector<64x128xf32>
    %c3_i32 = arith.constant 3 : i32
    %396 = tpu.dynamic_rotate %387 by %c3_i32 dim 0 : vector<64x128xf32>, i32 -> vector<64x128xf32>
    %c70 = arith.constant 70 : index
    %c0_164 = arith.constant 0 : index
    %c0_165 = arith.constant 0 : index
    %397 = vector.load %arg2[%c70, %c0_164, %c0_165] : memref<116x1x128xf32, #tpu.memory_space<vmem>>, vector<1x1x128xf32>
    %398 = vector.shape_cast %397 : vector<1x1x128xf32> to vector<1x128xf32>
    %399 = vector.broadcast %398 : vector<1x128xf32> to vector<64x128xf32>
    %400 = arith.mulf %396, %399 : vector<64x128xf32>
    %401 = arith.addf %395, %400 : vector<64x128xf32>
    %c2_i32_166 = arith.constant 2 : i32
    %402 = tpu.dynamic_rotate %387 by %c2_i32_166 dim 0 : vector<64x128xf32>, i32 -> vector<64x128xf32>
    %c71 = arith.constant 71 : index
    %c0_167 = arith.constant 0 : index
    %c0_168 = arith.constant 0 : index
    %403 = vector.load %arg2[%c71, %c0_167, %c0_168] : memref<116x1x128xf32, #tpu.memory_space<vmem>>, vector<1x1x128xf32>
    %404 = vector.shape_cast %403 : vector<1x1x128xf32> to vector<1x128xf32>
    %405 = vector.broadcast %404 : vector<1x128xf32> to vector<64x128xf32>
    %406 = arith.mulf %402, %405 : vector<64x128xf32>
    %407 = arith.addf %401, %406 : vector<64x128xf32>
    %c1_i32_169 = arith.constant 1 : i32
    %408 = tpu.dynamic_rotate %387 by %c1_i32_169 dim 0 : vector<64x128xf32>, i32 -> vector<64x128xf32>
    %c72 = arith.constant 72 : index
    %c0_170 = arith.constant 0 : index
    %c0_171 = arith.constant 0 : index
    %409 = vector.load %arg2[%c72, %c0_170, %c0_171] : memref<116x1x128xf32, #tpu.memory_space<vmem>>, vector<1x1x128xf32>
    %410 = vector.shape_cast %409 : vector<1x1x128xf32> to vector<1x128xf32>
    %411 = vector.broadcast %410 : vector<1x128xf32> to vector<64x128xf32>
    %412 = arith.mulf %408, %411 : vector<64x128xf32>
    %413 = arith.addf %407, %412 : vector<64x128xf32>
    %c73 = arith.constant 73 : index
    %c0_172 = arith.constant 0 : index
    %c0_173 = arith.constant 0 : index
    %414 = vector.load %arg2[%c73, %c0_172, %c0_173] : memref<116x1x128xf32, #tpu.memory_space<vmem>>, vector<1x1x128xf32>
    %415 = vector.shape_cast %414 : vector<1x1x128xf32> to vector<1x128xf32>
    %416 = vector.broadcast %415 : vector<1x128xf32> to vector<64x128xf32>
    %417 = arith.mulf %387, %416 : vector<64x128xf32>
    %418 = arith.addf %413, %417 : vector<64x128xf32>
    %c63_i32_174 = arith.constant 63 : i32
    %419 = tpu.dynamic_rotate %387 by %c63_i32_174 dim 0 : vector<64x128xf32>, i32 -> vector<64x128xf32>
    %c74 = arith.constant 74 : index
    %c0_175 = arith.constant 0 : index
    %c0_176 = arith.constant 0 : index
    %420 = vector.load %arg2[%c74, %c0_175, %c0_176] : memref<116x1x128xf32, #tpu.memory_space<vmem>>, vector<1x1x128xf32>
    %421 = vector.shape_cast %420 : vector<1x1x128xf32> to vector<1x128xf32>
    %422 = vector.broadcast %421 : vector<1x128xf32> to vector<64x128xf32>
    %423 = arith.mulf %419, %422 : vector<64x128xf32>
    %424 = arith.addf %418, %423 : vector<64x128xf32>
    %c62_i32_177 = arith.constant 62 : i32
    %425 = tpu.dynamic_rotate %387 by %c62_i32_177 dim 0 : vector<64x128xf32>, i32 -> vector<64x128xf32>
    %c75 = arith.constant 75 : index
    %c0_178 = arith.constant 0 : index
    %c0_179 = arith.constant 0 : index
    %426 = vector.load %arg2[%c75, %c0_178, %c0_179] : memref<116x1x128xf32, #tpu.memory_space<vmem>>, vector<1x1x128xf32>
    %427 = vector.shape_cast %426 : vector<1x1x128xf32> to vector<1x128xf32>
    %428 = vector.broadcast %427 : vector<1x128xf32> to vector<64x128xf32>
    %429 = arith.mulf %425, %428 : vector<64x128xf32>
    %430 = arith.addf %424, %429 : vector<64x128xf32>
    %c61_i32 = arith.constant 61 : i32
    %431 = tpu.dynamic_rotate %387 by %c61_i32 dim 0 : vector<64x128xf32>, i32 -> vector<64x128xf32>
    %c76 = arith.constant 76 : index
    %c0_180 = arith.constant 0 : index
    %c0_181 = arith.constant 0 : index
    %432 = vector.load %arg2[%c76, %c0_180, %c0_181] : memref<116x1x128xf32, #tpu.memory_space<vmem>>, vector<1x1x128xf32>
    %433 = vector.shape_cast %432 : vector<1x1x128xf32> to vector<1x128xf32>
    %434 = vector.broadcast %433 : vector<1x128xf32> to vector<64x128xf32>
    %435 = arith.mulf %431, %434 : vector<64x128xf32>
    %436 = arith.addf %430, %435 : vector<64x128xf32>
    %c5_i32 = arith.constant 5 : i32
    %437 = tpu.dynamic_rotate %389 by %c5_i32 dim 0 : vector<64x128xf32>, i32 -> vector<64x128xf32>
    %c77 = arith.constant 77 : index
    %c0_182 = arith.constant 0 : index
    %c0_183 = arith.constant 0 : index
    %438 = vector.load %arg2[%c77, %c0_182, %c0_183] : memref<116x1x128xf32, #tpu.memory_space<vmem>>, vector<1x1x128xf32>
    %439 = vector.shape_cast %438 : vector<1x1x128xf32> to vector<1x128xf32>
    %440 = vector.broadcast %439 : vector<1x128xf32> to vector<64x128xf32>
    %441 = arith.mulf %437, %440 : vector<64x128xf32>
    %442 = arith.addf %436, %441 : vector<64x128xf32>
    %c4_i32_184 = arith.constant 4 : i32
    %443 = tpu.dynamic_rotate %389 by %c4_i32_184 dim 0 : vector<64x128xf32>, i32 -> vector<64x128xf32>
    %c78 = arith.constant 78 : index
    %c0_185 = arith.constant 0 : index
    %c0_186 = arith.constant 0 : index
    %444 = vector.load %arg2[%c78, %c0_185, %c0_186] : memref<116x1x128xf32, #tpu.memory_space<vmem>>, vector<1x1x128xf32>
    %445 = vector.shape_cast %444 : vector<1x1x128xf32> to vector<1x128xf32>
    %446 = vector.broadcast %445 : vector<1x128xf32> to vector<64x128xf32>
    %447 = arith.mulf %443, %446 : vector<64x128xf32>
    %448 = arith.addf %442, %447 : vector<64x128xf32>
    %c3_i32_187 = arith.constant 3 : i32
    %449 = tpu.dynamic_rotate %389 by %c3_i32_187 dim 0 : vector<64x128xf32>, i32 -> vector<64x128xf32>
    %c79 = arith.constant 79 : index
    %c0_188 = arith.constant 0 : index
    %c0_189 = arith.constant 0 : index
    %450 = vector.load %arg2[%c79, %c0_188, %c0_189] : memref<116x1x128xf32, #tpu.memory_space<vmem>>, vector<1x1x128xf32>
    %451 = vector.shape_cast %450 : vector<1x1x128xf32> to vector<1x128xf32>
    %452 = vector.broadcast %451 : vector<1x128xf32> to vector<64x128xf32>
    %453 = arith.mulf %449, %452 : vector<64x128xf32>
    %454 = arith.addf %448, %453 : vector<64x128xf32>
    %c2_i32_190 = arith.constant 2 : i32
    %455 = tpu.dynamic_rotate %389 by %c2_i32_190 dim 0 : vector<64x128xf32>, i32 -> vector<64x128xf32>
    %c80 = arith.constant 80 : index
    %c0_191 = arith.constant 0 : index
    %c0_192 = arith.constant 0 : index
    %456 = vector.load %arg2[%c80, %c0_191, %c0_192] : memref<116x1x128xf32, #tpu.memory_space<vmem>>, vector<1x1x128xf32>
    %457 = vector.shape_cast %456 : vector<1x1x128xf32> to vector<1x128xf32>
    %458 = vector.broadcast %457 : vector<1x128xf32> to vector<64x128xf32>
    %459 = arith.mulf %455, %458 : vector<64x128xf32>
    %460 = arith.addf %454, %459 : vector<64x128xf32>
    %c1_i32_193 = arith.constant 1 : i32
    %461 = tpu.dynamic_rotate %389 by %c1_i32_193 dim 0 : vector<64x128xf32>, i32 -> vector<64x128xf32>
    %c81 = arith.constant 81 : index
    %c0_194 = arith.constant 0 : index
    %c0_195 = arith.constant 0 : index
    %462 = vector.load %arg2[%c81, %c0_194, %c0_195] : memref<116x1x128xf32, #tpu.memory_space<vmem>>, vector<1x1x128xf32>
    %463 = vector.shape_cast %462 : vector<1x1x128xf32> to vector<1x128xf32>
    %464 = vector.broadcast %463 : vector<1x128xf32> to vector<64x128xf32>
    %465 = arith.mulf %461, %464 : vector<64x128xf32>
    %466 = arith.addf %460, %465 : vector<64x128xf32>
    %c82 = arith.constant 82 : index
    %c0_196 = arith.constant 0 : index
    %c0_197 = arith.constant 0 : index
    %467 = vector.load %arg2[%c82, %c0_196, %c0_197] : memref<116x1x128xf32, #tpu.memory_space<vmem>>, vector<1x1x128xf32>
    %468 = vector.shape_cast %467 : vector<1x1x128xf32> to vector<1x128xf32>
    %469 = vector.broadcast %468 : vector<1x128xf32> to vector<64x128xf32>
    %470 = arith.mulf %389, %469 : vector<64x128xf32>
    %471 = arith.addf %466, %470 : vector<64x128xf32>
    %c63_i32_198 = arith.constant 63 : i32
    %472 = tpu.dynamic_rotate %389 by %c63_i32_198 dim 0 : vector<64x128xf32>, i32 -> vector<64x128xf32>
    %c83 = arith.constant 83 : index
    %c0_199 = arith.constant 0 : index
    %c0_200 = arith.constant 0 : index
    %473 = vector.load %arg2[%c83, %c0_199, %c0_200] : memref<116x1x128xf32, #tpu.memory_space<vmem>>, vector<1x1x128xf32>
    %474 = vector.shape_cast %473 : vector<1x1x128xf32> to vector<1x128xf32>
    %475 = vector.broadcast %474 : vector<1x128xf32> to vector<64x128xf32>
    %476 = arith.mulf %472, %475 : vector<64x128xf32>
    %477 = arith.addf %471, %476 : vector<64x128xf32>
    %c62_i32_201 = arith.constant 62 : i32
    %478 = tpu.dynamic_rotate %389 by %c62_i32_201 dim 0 : vector<64x128xf32>, i32 -> vector<64x128xf32>
    %c84 = arith.constant 84 : index
    %c0_202 = arith.constant 0 : index
    %c0_203 = arith.constant 0 : index
    %479 = vector.load %arg2[%c84, %c0_202, %c0_203] : memref<116x1x128xf32, #tpu.memory_space<vmem>>, vector<1x1x128xf32>
    %480 = vector.shape_cast %479 : vector<1x1x128xf32> to vector<1x128xf32>
    %481 = vector.broadcast %480 : vector<1x128xf32> to vector<64x128xf32>
    %482 = arith.mulf %478, %481 : vector<64x128xf32>
    %483 = arith.addf %477, %482 : vector<64x128xf32>
    %c61_i32_204 = arith.constant 61 : i32
    %484 = tpu.dynamic_rotate %389 by %c61_i32_204 dim 0 : vector<64x128xf32>, i32 -> vector<64x128xf32>
    %c85 = arith.constant 85 : index
    %c0_205 = arith.constant 0 : index
    %c0_206 = arith.constant 0 : index
    %485 = vector.load %arg2[%c85, %c0_205, %c0_206] : memref<116x1x128xf32, #tpu.memory_space<vmem>>, vector<1x1x128xf32>
    %486 = vector.shape_cast %485 : vector<1x1x128xf32> to vector<1x128xf32>
    %487 = vector.broadcast %486 : vector<1x128xf32> to vector<64x128xf32>
    %488 = arith.mulf %484, %487 : vector<64x128xf32>
    %489 = arith.addf %483, %488 : vector<64x128xf32>
    %c60_i32 = arith.constant 60 : i32
    %490 = tpu.dynamic_rotate %389 by %c60_i32 dim 0 : vector<64x128xf32>, i32 -> vector<64x128xf32>
    %c86 = arith.constant 86 : index
    %c0_207 = arith.constant 0 : index
    %c0_208 = arith.constant 0 : index
    %491 = vector.load %arg2[%c86, %c0_207, %c0_208] : memref<116x1x128xf32, #tpu.memory_space<vmem>>, vector<1x1x128xf32>
    %492 = vector.shape_cast %491 : vector<1x1x128xf32> to vector<1x128xf32>
    %493 = vector.broadcast %492 : vector<1x128xf32> to vector<64x128xf32>
    %494 = arith.mulf %490, %493 : vector<64x128xf32>
    %495 = arith.addf %489, %494 : vector<64x128xf32>
    %c59_i32 = arith.constant 59 : i32
    %496 = tpu.dynamic_rotate %389 by %c59_i32 dim 0 : vector<64x128xf32>, i32 -> vector<64x128xf32>
    %c87 = arith.constant 87 : index
    %c0_209 = arith.constant 0 : index
    %c0_210 = arith.constant 0 : index
    %497 = vector.load %arg2[%c87, %c0_209, %c0_210] : memref<116x1x128xf32, #tpu.memory_space<vmem>>, vector<1x1x128xf32>
    %498 = vector.shape_cast %497 : vector<1x1x128xf32> to vector<1x128xf32>
    %499 = vector.broadcast %498 : vector<1x128xf32> to vector<64x128xf32>
    %500 = arith.mulf %496, %499 : vector<64x128xf32>
    %501 = arith.addf %495, %500 : vector<64x128xf32>
    %c10_i32 = arith.constant 10 : i32
    %502 = tpu.dynamic_rotate %391 by %c10_i32 dim 0 : vector<64x128xf32>, i32 -> vector<64x128xf32>
    %c88 = arith.constant 88 : index
    %c0_211 = arith.constant 0 : index
    %c0_212 = arith.constant 0 : index
    %503 = vector.load %arg2[%c88, %c0_211, %c0_212] : memref<116x1x128xf32, #tpu.memory_space<vmem>>, vector<1x1x128xf32>
    %504 = vector.shape_cast %503 : vector<1x1x128xf32> to vector<1x128xf32>
    %505 = vector.broadcast %504 : vector<1x128xf32> to vector<64x128xf32>
    %506 = arith.mulf %502, %505 : vector<64x128xf32>
    %507 = arith.addf %501, %506 : vector<64x128xf32>
    %c9_i32 = arith.constant 9 : i32
    %508 = tpu.dynamic_rotate %391 by %c9_i32 dim 0 : vector<64x128xf32>, i32 -> vector<64x128xf32>
    %c89 = arith.constant 89 : index
    %c0_213 = arith.constant 0 : index
    %c0_214 = arith.constant 0 : index
    %509 = vector.load %arg2[%c89, %c0_213, %c0_214] : memref<116x1x128xf32, #tpu.memory_space<vmem>>, vector<1x1x128xf32>
    %510 = vector.shape_cast %509 : vector<1x1x128xf32> to vector<1x128xf32>
    %511 = vector.broadcast %510 : vector<1x128xf32> to vector<64x128xf32>
    %512 = arith.mulf %508, %511 : vector<64x128xf32>
    %513 = arith.addf %507, %512 : vector<64x128xf32>
    %c8_i32_215 = arith.constant 8 : i32
    %514 = tpu.dynamic_rotate %391 by %c8_i32_215 dim 0 : vector<64x128xf32>, i32 -> vector<64x128xf32>
    %c90 = arith.constant 90 : index
    %c0_216 = arith.constant 0 : index
    %c0_217 = arith.constant 0 : index
    %515 = vector.load %arg2[%c90, %c0_216, %c0_217] : memref<116x1x128xf32, #tpu.memory_space<vmem>>, vector<1x1x128xf32>
    %516 = vector.shape_cast %515 : vector<1x1x128xf32> to vector<1x128xf32>
    %517 = vector.broadcast %516 : vector<1x128xf32> to vector<64x128xf32>
    %518 = arith.mulf %514, %517 : vector<64x128xf32>
    %519 = arith.addf %513, %518 : vector<64x128xf32>
    %c7_i32 = arith.constant 7 : i32
    %520 = tpu.dynamic_rotate %391 by %c7_i32 dim 0 : vector<64x128xf32>, i32 -> vector<64x128xf32>
    %c91 = arith.constant 91 : index
    %c0_218 = arith.constant 0 : index
    %c0_219 = arith.constant 0 : index
    %521 = vector.load %arg2[%c91, %c0_218, %c0_219] : memref<116x1x128xf32, #tpu.memory_space<vmem>>, vector<1x1x128xf32>
    %522 = vector.shape_cast %521 : vector<1x1x128xf32> to vector<1x128xf32>
    %523 = vector.broadcast %522 : vector<1x128xf32> to vector<64x128xf32>
    %524 = arith.mulf %520, %523 : vector<64x128xf32>
    %525 = arith.addf %519, %524 : vector<64x128xf32>
    %c6_i32 = arith.constant 6 : i32
    %526 = tpu.dynamic_rotate %391 by %c6_i32 dim 0 : vector<64x128xf32>, i32 -> vector<64x128xf32>
    %c92 = arith.constant 92 : index
    %c0_220 = arith.constant 0 : index
    %c0_221 = arith.constant 0 : index
    %527 = vector.load %arg2[%c92, %c0_220, %c0_221] : memref<116x1x128xf32, #tpu.memory_space<vmem>>, vector<1x1x128xf32>
    %528 = vector.shape_cast %527 : vector<1x1x128xf32> to vector<1x128xf32>
    %529 = vector.broadcast %528 : vector<1x128xf32> to vector<64x128xf32>
    %530 = arith.mulf %526, %529 : vector<64x128xf32>
    %531 = arith.addf %525, %530 : vector<64x128xf32>
    %c5_i32_222 = arith.constant 5 : i32
    %532 = tpu.dynamic_rotate %391 by %c5_i32_222 dim 0 : vector<64x128xf32>, i32 -> vector<64x128xf32>
    %c93 = arith.constant 93 : index
    %c0_223 = arith.constant 0 : index
    %c0_224 = arith.constant 0 : index
    %533 = vector.load %arg2[%c93, %c0_223, %c0_224] : memref<116x1x128xf32, #tpu.memory_space<vmem>>, vector<1x1x128xf32>
    %534 = vector.shape_cast %533 : vector<1x1x128xf32> to vector<1x128xf32>
    %535 = vector.broadcast %534 : vector<1x128xf32> to vector<64x128xf32>
    %536 = arith.mulf %532, %535 : vector<64x128xf32>
    %537 = arith.addf %531, %536 : vector<64x128xf32>
    %c4_i32_225 = arith.constant 4 : i32
    %538 = tpu.dynamic_rotate %391 by %c4_i32_225 dim 0 : vector<64x128xf32>, i32 -> vector<64x128xf32>
    %c94 = arith.constant 94 : index
    %c0_226 = arith.constant 0 : index
    %c0_227 = arith.constant 0 : index
    %539 = vector.load %arg2[%c94, %c0_226, %c0_227] : memref<116x1x128xf32, #tpu.memory_space<vmem>>, vector<1x1x128xf32>
    %540 = vector.shape_cast %539 : vector<1x1x128xf32> to vector<1x128xf32>
    %541 = vector.broadcast %540 : vector<1x128xf32> to vector<64x128xf32>
    %542 = arith.mulf %538, %541 : vector<64x128xf32>
    %543 = arith.addf %537, %542 : vector<64x128xf32>
    %c3_i32_228 = arith.constant 3 : i32
    %544 = tpu.dynamic_rotate %391 by %c3_i32_228 dim 0 : vector<64x128xf32>, i32 -> vector<64x128xf32>
    %c95 = arith.constant 95 : index
    %c0_229 = arith.constant 0 : index
    %c0_230 = arith.constant 0 : index
    %545 = vector.load %arg2[%c95, %c0_229, %c0_230] : memref<116x1x128xf32, #tpu.memory_space<vmem>>, vector<1x1x128xf32>
    %546 = vector.shape_cast %545 : vector<1x1x128xf32> to vector<1x128xf32>
    %547 = vector.broadcast %546 : vector<1x128xf32> to vector<64x128xf32>
    %548 = arith.mulf %544, %547 : vector<64x128xf32>
    %549 = arith.addf %543, %548 : vector<64x128xf32>
    %c2_i32_231 = arith.constant 2 : i32
    %550 = tpu.dynamic_rotate %391 by %c2_i32_231 dim 0 : vector<64x128xf32>, i32 -> vector<64x128xf32>
    %c96 = arith.constant 96 : index
    %c0_232 = arith.constant 0 : index
    %c0_233 = arith.constant 0 : index
    %551 = vector.load %arg2[%c96, %c0_232, %c0_233] : memref<116x1x128xf32, #tpu.memory_space<vmem>>, vector<1x1x128xf32>
    %552 = vector.shape_cast %551 : vector<1x1x128xf32> to vector<1x128xf32>
    %553 = vector.broadcast %552 : vector<1x128xf32> to vector<64x128xf32>
    %554 = arith.mulf %550, %553 : vector<64x128xf32>
    %555 = arith.addf %549, %554 : vector<64x128xf32>
    %c1_i32_234 = arith.constant 1 : i32
    %556 = tpu.dynamic_rotate %391 by %c1_i32_234 dim 0 : vector<64x128xf32>, i32 -> vector<64x128xf32>
    %c97 = arith.constant 97 : index
    %c0_235 = arith.constant 0 : index
    %c0_236 = arith.constant 0 : index
    %557 = vector.load %arg2[%c97, %c0_235, %c0_236] : memref<116x1x128xf32, #tpu.memory_space<vmem>>, vector<1x1x128xf32>
    %558 = vector.shape_cast %557 : vector<1x1x128xf32> to vector<1x128xf32>
    %559 = vector.broadcast %558 : vector<1x128xf32> to vector<64x128xf32>
    %560 = arith.mulf %556, %559 : vector<64x128xf32>
    %561 = arith.addf %555, %560 : vector<64x128xf32>
    %c98 = arith.constant 98 : index
    %c0_237 = arith.constant 0 : index
    %c0_238 = arith.constant 0 : index
    %562 = vector.load %arg2[%c98, %c0_237, %c0_238] : memref<116x1x128xf32, #tpu.memory_space<vmem>>, vector<1x1x128xf32>
    %563 = vector.shape_cast %562 : vector<1x1x128xf32> to vector<1x128xf32>
    %564 = vector.broadcast %563 : vector<1x128xf32> to vector<64x128xf32>
    %565 = arith.mulf %391, %564 : vector<64x128xf32>
    %566 = arith.addf %561, %565 : vector<64x128xf32>
    %c63_i32_239 = arith.constant 63 : i32
    %567 = tpu.dynamic_rotate %391 by %c63_i32_239 dim 0 : vector<64x128xf32>, i32 -> vector<64x128xf32>
    %c99 = arith.constant 99 : index
    %c0_240 = arith.constant 0 : index
    %c0_241 = arith.constant 0 : index
    %568 = vector.load %arg2[%c99, %c0_240, %c0_241] : memref<116x1x128xf32, #tpu.memory_space<vmem>>, vector<1x1x128xf32>
    %569 = vector.shape_cast %568 : vector<1x1x128xf32> to vector<1x128xf32>
    %570 = vector.broadcast %569 : vector<1x128xf32> to vector<64x128xf32>
    %571 = arith.mulf %567, %570 : vector<64x128xf32>
    %572 = arith.addf %566, %571 : vector<64x128xf32>
    %c62_i32_242 = arith.constant 62 : i32
    %573 = tpu.dynamic_rotate %391 by %c62_i32_242 dim 0 : vector<64x128xf32>, i32 -> vector<64x128xf32>
    %c100 = arith.constant 100 : index
    %c0_243 = arith.constant 0 : index
    %c0_244 = arith.constant 0 : index
    %574 = vector.load %arg2[%c100, %c0_243, %c0_244] : memref<116x1x128xf32, #tpu.memory_space<vmem>>, vector<1x1x128xf32>
    %575 = vector.shape_cast %574 : vector<1x1x128xf32> to vector<1x128xf32>
    %576 = vector.broadcast %575 : vector<1x128xf32> to vector<64x128xf32>
    %577 = arith.mulf %573, %576 : vector<64x128xf32>
    %578 = arith.addf %572, %577 : vector<64x128xf32>
    %c61_i32_245 = arith.constant 61 : i32
    %579 = tpu.dynamic_rotate %391 by %c61_i32_245 dim 0 : vector<64x128xf32>, i32 -> vector<64x128xf32>
    %c101 = arith.constant 101 : index
    %c0_246 = arith.constant 0 : index
    %c0_247 = arith.constant 0 : index
    %580 = vector.load %arg2[%c101, %c0_246, %c0_247] : memref<116x1x128xf32, #tpu.memory_space<vmem>>, vector<1x1x128xf32>
    %581 = vector.shape_cast %580 : vector<1x1x128xf32> to vector<1x128xf32>
    %582 = vector.broadcast %581 : vector<1x128xf32> to vector<64x128xf32>
    %583 = arith.mulf %579, %582 : vector<64x128xf32>
    %584 = arith.addf %578, %583 : vector<64x128xf32>
    %c60_i32_248 = arith.constant 60 : i32
    %585 = tpu.dynamic_rotate %391 by %c60_i32_248 dim 0 : vector<64x128xf32>, i32 -> vector<64x128xf32>
    %c102 = arith.constant 102 : index
    %c0_249 = arith.constant 0 : index
    %c0_250 = arith.constant 0 : index
    %586 = vector.load %arg2[%c102, %c0_249, %c0_250] : memref<116x1x128xf32, #tpu.memory_space<vmem>>, vector<1x1x128xf32>
    %587 = vector.shape_cast %586 : vector<1x1x128xf32> to vector<1x128xf32>
    %588 = vector.broadcast %587 : vector<1x128xf32> to vector<64x128xf32>
    %589 = arith.mulf %585, %588 : vector<64x128xf32>
    %590 = arith.addf %584, %589 : vector<64x128xf32>
    %c59_i32_251 = arith.constant 59 : i32
    %591 = tpu.dynamic_rotate %391 by %c59_i32_251 dim 0 : vector<64x128xf32>, i32 -> vector<64x128xf32>
    %c103 = arith.constant 103 : index
    %c0_252 = arith.constant 0 : index
    %c0_253 = arith.constant 0 : index
    %592 = vector.load %arg2[%c103, %c0_252, %c0_253] : memref<116x1x128xf32, #tpu.memory_space<vmem>>, vector<1x1x128xf32>
    %593 = vector.shape_cast %592 : vector<1x1x128xf32> to vector<1x128xf32>
    %594 = vector.broadcast %593 : vector<1x128xf32> to vector<64x128xf32>
    %595 = arith.mulf %591, %594 : vector<64x128xf32>
    %596 = arith.addf %590, %595 : vector<64x128xf32>
    %c58_i32 = arith.constant 58 : i32
    %597 = tpu.dynamic_rotate %391 by %c58_i32 dim 0 : vector<64x128xf32>, i32 -> vector<64x128xf32>
    %c104 = arith.constant 104 : index
    %c0_254 = arith.constant 0 : index
    %c0_255 = arith.constant 0 : index
    %598 = vector.load %arg2[%c104, %c0_254, %c0_255] : memref<116x1x128xf32, #tpu.memory_space<vmem>>, vector<1x1x128xf32>
    %599 = vector.shape_cast %598 : vector<1x1x128xf32> to vector<1x128xf32>
    %600 = vector.broadcast %599 : vector<1x128xf32> to vector<64x128xf32>
    %601 = arith.mulf %597, %600 : vector<64x128xf32>
    %602 = arith.addf %596, %601 : vector<64x128xf32>
    %c57_i32 = arith.constant 57 : i32
    %603 = tpu.dynamic_rotate %391 by %c57_i32 dim 0 : vector<64x128xf32>, i32 -> vector<64x128xf32>
    %c105 = arith.constant 105 : index
    %c0_256 = arith.constant 0 : index
    %c0_257 = arith.constant 0 : index
    %604 = vector.load %arg2[%c105, %c0_256, %c0_257] : memref<116x1x128xf32, #tpu.memory_space<vmem>>, vector<1x1x128xf32>
    %605 = vector.shape_cast %604 : vector<1x1x128xf32> to vector<1x128xf32>
    %606 = vector.broadcast %605 : vector<1x128xf32> to vector<64x128xf32>
    %607 = arith.mulf %603, %606 : vector<64x128xf32>
    %608 = arith.addf %602, %607 : vector<64x128xf32>
    %c56_i32 = arith.constant 56 : i32
    %609 = tpu.dynamic_rotate %391 by %c56_i32 dim 0 : vector<64x128xf32>, i32 -> vector<64x128xf32>
    %c106 = arith.constant 106 : index
    %c0_258 = arith.constant 0 : index
    %c0_259 = arith.constant 0 : index
    %610 = vector.load %arg2[%c106, %c0_258, %c0_259] : memref<116x1x128xf32, #tpu.memory_space<vmem>>, vector<1x1x128xf32>
    %611 = vector.shape_cast %610 : vector<1x1x128xf32> to vector<1x128xf32>
    %612 = vector.broadcast %611 : vector<1x128xf32> to vector<64x128xf32>
    %613 = arith.mulf %609, %612 : vector<64x128xf32>
    %614 = arith.addf %608, %613 : vector<64x128xf32>
    %c55_i32 = arith.constant 55 : i32
    %615 = tpu.dynamic_rotate %391 by %c55_i32 dim 0 : vector<64x128xf32>, i32 -> vector<64x128xf32>
    %c107 = arith.constant 107 : index
    %c0_260 = arith.constant 0 : index
    %c0_261 = arith.constant 0 : index
    %616 = vector.load %arg2[%c107, %c0_260, %c0_261] : memref<116x1x128xf32, #tpu.memory_space<vmem>>, vector<1x1x128xf32>
    %617 = vector.shape_cast %616 : vector<1x1x128xf32> to vector<1x128xf32>
    %618 = vector.broadcast %617 : vector<1x128xf32> to vector<64x128xf32>
    %619 = arith.mulf %615, %618 : vector<64x128xf32>
    %620 = arith.addf %614, %619 : vector<64x128xf32>
    %c54_i32 = arith.constant 54 : i32
    %621 = tpu.dynamic_rotate %391 by %c54_i32 dim 0 : vector<64x128xf32>, i32 -> vector<64x128xf32>
    %c108 = arith.constant 108 : index
    %c0_262 = arith.constant 0 : index
    %c0_263 = arith.constant 0 : index
    %622 = vector.load %arg2[%c108, %c0_262, %c0_263] : memref<116x1x128xf32, #tpu.memory_space<vmem>>, vector<1x1x128xf32>
    %623 = vector.shape_cast %622 : vector<1x1x128xf32> to vector<1x128xf32>
    %624 = vector.broadcast %623 : vector<1x128xf32> to vector<64x128xf32>
    %625 = arith.mulf %621, %624 : vector<64x128xf32>
    %626 = arith.addf %620, %625 : vector<64x128xf32>
    %c5 = arith.constant 5 : index
    %c0_264 = arith.constant 0 : index
    %c0_265 = arith.constant 0 : index
    %627 = vector.load %arg2[%c5, %c0_264, %c0_265] : memref<116x1x128xf32, #tpu.memory_space<vmem>>, vector<1x1x128xf32>
    %628 = vector.shape_cast %627 : vector<1x1x128xf32> to vector<1x128xf32>
    %c3_i32_266 = arith.constant 3 : i32
    %629 = tpu.dynamic_rotate %626 by %c3_i32_266 dim 1 : vector<64x128xf32>, i32 -> vector<64x128xf32>
    %c109 = arith.constant 109 : index
    %c0_267 = arith.constant 0 : index
    %c0_268 = arith.constant 0 : index
    %630 = vector.load %arg2[%c109, %c0_267, %c0_268] : memref<116x1x128xf32, #tpu.memory_space<vmem>>, vector<1x1x128xf32>
    %631 = vector.shape_cast %630 : vector<1x1x128xf32> to vector<1x128xf32>
    %632 = vector.broadcast %631 : vector<1x128xf32> to vector<64x128xf32>
    %633 = arith.mulf %629, %632 : vector<64x128xf32>
    %634 = vector.broadcast %628 : vector<1x128xf32> to vector<64x128xf32>
    %635 = arith.addf %634, %633 : vector<64x128xf32>
    %c2_i32_269 = arith.constant 2 : i32
    %636 = tpu.dynamic_rotate %626 by %c2_i32_269 dim 1 : vector<64x128xf32>, i32 -> vector<64x128xf32>
    %c110 = arith.constant 110 : index
    %c0_270 = arith.constant 0 : index
    %c0_271 = arith.constant 0 : index
    %637 = vector.load %arg2[%c110, %c0_270, %c0_271] : memref<116x1x128xf32, #tpu.memory_space<vmem>>, vector<1x1x128xf32>
    %638 = vector.shape_cast %637 : vector<1x1x128xf32> to vector<1x128xf32>
    %639 = vector.broadcast %638 : vector<1x128xf32> to vector<64x128xf32>
    %640 = arith.mulf %636, %639 : vector<64x128xf32>
    %641 = arith.addf %635, %640 : vector<64x128xf32>
    %c1_i32_272 = arith.constant 1 : i32
    %642 = tpu.dynamic_rotate %626 by %c1_i32_272 dim 1 : vector<64x128xf32>, i32 -> vector<64x128xf32>
    %c111 = arith.constant 111 : index
    %c0_273 = arith.constant 0 : index
    %c0_274 = arith.constant 0 : index
    %643 = vector.load %arg2[%c111, %c0_273, %c0_274] : memref<116x1x128xf32, #tpu.memory_space<vmem>>, vector<1x1x128xf32>
    %644 = vector.shape_cast %643 : vector<1x1x128xf32> to vector<1x128xf32>
    %645 = vector.broadcast %644 : vector<1x128xf32> to vector<64x128xf32>
    %646 = arith.mulf %642, %645 : vector<64x128xf32>
    %647 = arith.addf %641, %646 : vector<64x128xf32>
    %c112 = arith.constant 112 : index
    %c0_275 = arith.constant 0 : index
    %c0_276 = arith.constant 0 : index
    %648 = vector.load %arg2[%c112, %c0_275, %c0_276] : memref<116x1x128xf32, #tpu.memory_space<vmem>>, vector<1x1x128xf32>
    %649 = vector.shape_cast %648 : vector<1x1x128xf32> to vector<1x128xf32>
    %650 = vector.broadcast %649 : vector<1x128xf32> to vector<64x128xf32>
    %651 = arith.mulf %626, %650 : vector<64x128xf32>
    %652 = arith.addf %647, %651 : vector<64x128xf32>
    %c127_i32 = arith.constant 127 : i32
    %653 = tpu.dynamic_rotate %626 by %c127_i32 dim 1 : vector<64x128xf32>, i32 -> vector<64x128xf32>
    %c113 = arith.constant 113 : index
    %c0_277 = arith.constant 0 : index
    %c0_278 = arith.constant 0 : index
    %654 = vector.load %arg2[%c113, %c0_277, %c0_278] : memref<116x1x128xf32, #tpu.memory_space<vmem>>, vector<1x1x128xf32>
    %655 = vector.shape_cast %654 : vector<1x1x128xf32> to vector<1x128xf32>
    %656 = vector.broadcast %655 : vector<1x128xf32> to vector<64x128xf32>
    %657 = arith.mulf %653, %656 : vector<64x128xf32>
    %658 = arith.addf %652, %657 : vector<64x128xf32>
    %c126_i32 = arith.constant 126 : i32
    %659 = tpu.dynamic_rotate %626 by %c126_i32 dim 1 : vector<64x128xf32>, i32 -> vector<64x128xf32>
    %c114 = arith.constant 114 : index
    %c0_279 = arith.constant 0 : index
    %c0_280 = arith.constant 0 : index
    %660 = vector.load %arg2[%c114, %c0_279, %c0_280] : memref<116x1x128xf32, #tpu.memory_space<vmem>>, vector<1x1x128xf32>
    %661 = vector.shape_cast %660 : vector<1x1x128xf32> to vector<1x128xf32>
    %662 = vector.broadcast %661 : vector<1x128xf32> to vector<64x128xf32>
    %663 = arith.mulf %659, %662 : vector<64x128xf32>
    %664 = arith.addf %658, %663 : vector<64x128xf32>
    %c125_i32 = arith.constant 125 : i32
    %665 = tpu.dynamic_rotate %626 by %c125_i32 dim 1 : vector<64x128xf32>, i32 -> vector<64x128xf32>
    %c115 = arith.constant 115 : index
    %c0_281 = arith.constant 0 : index
    %c0_282 = arith.constant 0 : index
    %666 = vector.load %arg2[%c115, %c0_281, %c0_282] : memref<116x1x128xf32, #tpu.memory_space<vmem>>, vector<1x1x128xf32>
    %667 = vector.shape_cast %666 : vector<1x1x128xf32> to vector<1x128xf32>
    %668 = vector.broadcast %667 : vector<1x128xf32> to vector<64x128xf32>
    %669 = arith.mulf %665, %668 : vector<64x128xf32>
    %670 = arith.addf %664, %669 : vector<64x128xf32>
    %671 = arith.negf %670 : vector<64x128xf32>
    %672 = math.exp %671 : vector<64x128xf32>
    %cst_283 = arith.constant 1.000000e+00 : f32
    %673 = vector.broadcast %cst_283 : f32 to vector<64x128xf32>
    %674 = arith.addf %673, %672 : vector<64x128xf32>
    %675 = arith.divf %673, %674 : vector<64x128xf32>
    %c0_284 = arith.constant 0 : index
    %c0_285 = arith.constant 0 : index
    %676 = vector.load %arg3[%c0_284, %c0_285] : memref<64x128xf32, #tpu.memory_space<vmem>>, vector<64x128xf32>
    tpu.vector_store %arg3[%c0_284, %c0_285], %675 {strides = array<i32>} : memref<64x128xf32, #tpu.memory_space<vmem>>, vector<64x128xf32>,
    return
  }
  func.func @transform_0(%arg0: i32) -> (i32, i32) {
    %c0_i32 = arith.constant 0 : i32
    %c0_i32_0 = arith.constant 0 : i32
    return %arg0, %c0_i32 : i32, i32
  }
  func.func @transform_1(%arg0: i32) -> (i32, i32, i32) {
    %c0_i32 = arith.constant 0 : i32
    %c0_i32_0 = arith.constant 0 : i32
    %c0_i32_1 = arith.constant 0 : i32
    %c0_i32_2 = arith.constant 0 : i32
    return %c0_i32, %c0_i32_0, %c0_i32_1 : i32, i32, i32
  }
  func.func @transform_2(%arg0: i32) -> (i32, i32) {
    %c0_i32 = arith.constant 0 : i32
    %c0_i32_0 = arith.constant 0 : i32
    return %arg0, %c0_i32 : i32, i32
  }
}

</mosaic_0001>

<llo_original>
// kernel: tpu_custom_call.1
$region0: #{tpu_custom_call.1}
  #allocation0 [shape = 'u32[]', space=smem, size = 0x4, offset = 0x4, fixed_abs, tag = 'smem constant byte address 0x4 - core index']
  #allocation1 [shape = 'u32[72,128]{1,0:T(1,128)}', space=vmem, size = 0x9000, scoped, tag = 'internal scratch']
  %s0 = inlined_call_operand.hbm [shape: f32[64,128], index: 0, kind: input, shape index: {}]
  %s1 = inlined_call_operand.hbm [shape: f32[116,1,128], index: 1, kind: input, shape index: {}]
  %s2 = inlined_call_operand.hbm [shape: f32[64,128], index: 2, kind: output, shape index: {}]
  %s3 = sld [smem:[#allocation0]]
  $region26: #{tpu_custom_call.1} parent=0
    _
  %s5 = ssub.s32 1, %s3
  %s6 = scalar_select 0, %s5, %s3
  $region1: #{tpu_custom_call.1} parent=0
    #allocation2 [shape = 'u8[32768]{0}', space=vmem, size = 0x8000, scoped, tag = 'input window, operand 0, single buffered']
    #allocation3 [shape = 's32[1]{0}', space=sflag, size = 0x4, scoped, tag = 'scoped memory for tpu_custom_call.1']
    #allocation4 [shape = 's32[1]{0}', space=sflag, size = 0x4, scoped, tag = 'scoped memory for tpu_custom_call.1']
    #allocation5 [shape = 'u8[59392]{0}', space=vmem, size = 0xe800, scoped, tag = 'input window, operand 1, single buffered']
    #allocation6 [shape = 's32[1]{0}', space=sflag, size = 0x4, scoped, tag = 'scoped memory for tpu_custom_call.1']
    #allocation7 [shape = 'u8[32768]{0}', space=vmem, size = 0x8000, scoped, tag = 'output window, operand 0, single buffered']
    %7 = vsyncpa [#allocation3], 0
    %8 = vsyncpa [#allocation6], 0
    %9 = vsyncpa [#allocation4], 0
    // Predicated region
    $region2: #{tpu_custom_call.1} parent=1 // pred_check
      _
    $region3: #{tpu_custom_call.1} parent=1 // pred_check_branch
      %11 = sbr.rel (0) target = $region5
    $region4: #{tpu_custom_call.1} parent=1 // pred_region
      %13 = vsyncadd [#allocation3], 0
      %s14 = sshll.u32 %s0, 4
      %s15 = int_to_ptr.hbm [resolvable:$true] %s14
      %s16 = sshll.u32 [#allocation2], 4
      %s17 = int_to_ptr.vmem [resolvable:$true] %s16
      %22 = dma.hbm_to_vmem [thread:$0]  %s15, 1024, %s17, [#allocation3], 128, 128, 8
    $region5: #{tpu_custom_call.1} parent=1 // pred_fallthru
      _
    // Predicated region
    $region6: #{tpu_custom_call.1} parent=1 // pred_check
      _
    $region7: #{tpu_custom_call.1} parent=1 // pred_check_branch
      %24 = sbr.rel (0) target = $region9
    $region8: #{tpu_custom_call.1} parent=1 // pred_region
      %26 = vsyncadd [#allocation6], 0
      %s27 = sshll.u32 %s1, 4
      %s28 = int_to_ptr.hbm [resolvable:$true] %s27
      %s29 = sshll.u32 [#allocation5], 4
      %s30 = int_to_ptr.vmem [resolvable:$true] %s29
      %35 = dma.hbm_to_vmem [thread:$0]  %s28, 1856, %s30, [#allocation6], 16, 16, 1
    $region9: #{tpu_custom_call.1} parent=1 // pred_fallthru
      _
    // Predicated region
    $region10: #{tpu_custom_call.1} parent=1 // pred_check
      _
    $region11: #{tpu_custom_call.1} parent=1 // pred_check_branch
      %37 = sbr.rel (0) target = $region13
    $region12: #{tpu_custom_call.1} parent=1 // pred_region
      %39 = dma.done [#allocation3], 1024
    $region13: #{tpu_custom_call.1} parent=1 // pred_fallthru
      _
    // Predicated region
    $region14: #{tpu_custom_call.1} parent=1 // pred_check
      _
    $region15: #{tpu_custom_call.1} parent=1 // pred_check_branch
      %41 = sbr.rel (0) target = $region17
    $region16: #{tpu_custom_call.1} parent=1 // pred_region
      %43 = dma.done [#allocation6], 1856
    $region17: #{tpu_custom_call.1} parent=1 // pred_fallthru
      _
    %v44 = vld [vmem:[#allocation2] sm:$0xff]
    %v45 = vld [vmem:[#allocation2 + $0x8] sm:$0xff]
    %v46 = vld [vmem:[#allocation2 + $0x10] sm:$0xff]
    %v47 = vld [vmem:[#allocation2 + $0x18] sm:$0xff]
    %v48 = vld [vmem:[#allocation2 + $0x20] sm:$0xff]
    %v49 = vld [vmem:[#allocation2 + $0x28] sm:$0xff]
    %v50 = vld [vmem:[#allocation2 + $0x30] sm:$0xff]
    %v51 = vld [vmem:[#allocation2 + $0x38] sm:$0xff]
    %v52 = vld [vmem:[#allocation5] sm:$0x1]
    %v53 = vrot.slane %v44, 6
    %v54 = vrot.slane %v45, 6
    %v55 = vrot.slane %v46, 6
    %v56 = vrot.slane %v47, 6
    %v57 = vrot.slane %v48, 6
    %v58 = vrot.slane %v49, 6
    %v59 = vrot.slane %v50, 6
    %v60 = vrot.slane %v51, 6
    %v61 = vlaneseq
    %v62 = vshrl.u32 %v61, 7
    %vm63 = vcmp.lt.s32.totalorder %v62, 2
    %v64 = vsel %vm63, %v59, %v60
    %v65 = vsel %vm63, %v58, %v59
    %v66 = vsel %vm63, %v57, %v58
    %v67 = vsel %vm63, %v56, %v57
    %v68 = vsel %vm63, %v55, %v56
    %v69 = vsel %vm63, %v54, %v55
    %v70 = vsel %vm63, %v53, %v54
    %v71 = vsel %vm63, %v60, %v53
    %72 = vrot.lane.b32.xlu0 %v71, 8
    %v73 = vpop.permute.xlu0 %72
    %74 = vrot.lane.b32.xlu0 %v70, 8
    %v75 = vpop.permute.xlu0 %74
    %76 = vrot.lane.b32.xlu0 %v69, 8
    %v77 = vpop.permute.xlu0 %76
    %78 = vrot.lane.b32.xlu0 %v68, 8
    %v79 = vpop.permute.xlu0 %78
    %80 = vrot.lane.b32.xlu0 %v67, 8
    %v81 = vpop.permute.xlu0 %80
    %82 = vrot.lane.b32.xlu0 %v66, 8
    %v83 = vpop.permute.xlu0 %82
    %84 = vrot.lane.b32.xlu0 %v65, 8
    %v85 = vpop.permute.xlu0 %84
    %86 = vrot.lane.b32.xlu0 %v64, 8
    %v87 = vpop.permute.xlu0 %86
    %s88 = scalar_lea.vmem [#allocation5], 6
    %v89 = vld [vmem:[%s88] sm:$0x1]
    %v91 = vperm.slane %v89, 0
    %v93 = vmul.f32 %v73, %v91
    %v94 = vmul.f32 %v75, %v91
    %v95 = vmul.f32 %v77, %v91
    %v96 = vmul.f32 %v79, %v91
    %v97 = vmul.f32 %v81, %v91
    %v98 = vmul.f32 %v83, %v91
    %v99 = vmul.f32 %v85, %v91
    %v100 = vmul.f32 %v87, %v91
    %v102 = vperm.slane %v52, 0
    %v104 = vadd.f32 %v102, %v93
    %v105 = vadd.f32 %v102, %v94
    %v106 = vadd.f32 %v102, %v95
    %v107 = vadd.f32 %v102, %v96
    %v108 = vadd.f32 %v102, %v97
    %v109 = vadd.f32 %v102, %v98
    %v110 = vadd.f32 %v102, %v99
    %v111 = vadd.f32 %v102, %v100
    %112 = vrot.lane.b32.xlu0 %v71, 4
    %v113 = vpop.permute.xlu0 %112
    %114 = vrot.lane.b32.xlu0 %v70, 4
    %v115 = vpop.permute.xlu0 %114
    %116 = vrot.lane.b32.xlu0 %v69, 4
    %v117 = vpop.permute.xlu0 %116
    %118 = vrot.lane.b32.xlu0 %v68, 4
    %v119 = vpop.permute.xlu0 %118
    %120 = vrot.lane.b32.xlu0 %v67, 4
    %v121 = vpop.permute.xlu0 %120
    %122 = vrot.lane.b32.xlu0 %v66, 4
    %v123 = vpop.permute.xlu0 %122
    %124 = vrot.lane.b32.xlu0 %v65, 4
    %v125 = vpop.permute.xlu0 %124
    %126 = vrot.lane.b32.xlu0 %v64, 4
    %v127 = vpop.permute.xlu0 %126
    %s128 = scalar_lea.vmem [#allocation5], 7
    %v129 = vld [vmem:[%s128] sm:$0x1]
    %v131 = vperm.slane %v129, 0
    %v133 = vmul.f32 %v113, %v131
    %v134 = vmul.f32 %v115, %v131
    %v135 = vmul.f32 %v117, %v131
    %v136 = vmul.f32 %v119, %v131
    %v137 = vmul.f32 %v121, %v131
    %v138 = vmul.f32 %v123, %v131
    %v139 = vmul.f32 %v125, %v131
    %v140 = vmul.f32 %v127, %v131
    %v141 = vadd.f32 %v104, %v133
    %v142 = vadd.f32 %v105, %v134
    %v143 = vadd.f32 %v106, %v135
    %v144 = vadd.f32 %v107, %v136
    %v145 = vadd.f32 %v108, %v137
    %v146 = vadd.f32 %v109, %v138
    %v147 = vadd.f32 %v110, %v139
    %v148 = vadd.f32 %v111, %v140
    %s149 = scalar_lea.vmem [#allocation5], 8
    %v150 = vld [vmem:[%s149] sm:$0x1]
    %v152 = vperm.slane %v150, 0
    %v154 = vmul.f32 %v71, %v152
    %v155 = vmul.f32 %v70, %v152
    %v156 = vmul.f32 %v69, %v152
    %v157 = vmul.f32 %v68, %v152
    %v158 = vmul.f32 %v67, %v152
    %v159 = vmul.f32 %v66, %v152
    %v160 = vmul.f32 %v65, %v152
    %v161 = vmul.f32 %v64, %v152
    %v162 = vadd.f32 %v141, %v154
    %v163 = vadd.f32 %v142, %v155
    %v164 = vadd.f32 %v143, %v156
    %v165 = vadd.f32 %v144, %v157
    %v166 = vadd.f32 %v145, %v158
    %v167 = vadd.f32 %v146, %v159
    %v168 = vadd.f32 %v147, %v160
    %v169 = vadd.f32 %v148, %v161
    %170 = vrot.lane.b32.xlu0 %v71, 124
    %v171 = vpop.permute.xlu0 %170
    %172 = vrot.lane.b32.xlu0 %v70, 124
    %v173 = vpop.permute.xlu0 %172
    %174 = vrot.lane.b32.xlu0 %v69, 124
    %v175 = vpop.permute.xlu0 %174
    %176 = vrot.lane.b32.xlu0 %v68, 124
    %v177 = vpop.permute.xlu0 %176
    %178 = vrot.lane.b32.xlu0 %v67, 124
    %v179 = vpop.permute.xlu0 %178
    %180 = vrot.lane.b32.xlu0 %v66, 124
    %v181 = vpop.permute.xlu0 %180
    %182 = vrot.lane.b32.xlu0 %v65, 124
    %v183 = vpop.permute.xlu0 %182
    %184 = vrot.lane.b32.xlu0 %v64, 124
    %v185 = vpop.permute.xlu0 %184
    %s186 = scalar_lea.vmem [#allocation5], 9
    %v187 = vld [vmem:[%s186] sm:$0x1]
    %v189 = vperm.slane %v187, 0
    %v191 = vmul.f32 %v171, %v189
    %v192 = vmul.f32 %v173, %v189
    %v193 = vmul.f32 %v175, %v189
    %v194 = vmul.f32 %v177, %v189
    %v195 = vmul.f32 %v179, %v189
    %v196 = vmul.f32 %v181, %v189
    %v197 = vmul.f32 %v183, %v189
    %v198 = vmul.f32 %v185, %v189
    %v199 = vadd.f32 %v162, %v191
    %v200 = vadd.f32 %v163, %v192
    %v201 = vadd.f32 %v164, %v193
    %v202 = vadd.f32 %v165, %v194
    %v203 = vadd.f32 %v166, %v195
    %v204 = vadd.f32 %v167, %v196
    %v205 = vadd.f32 %v168, %v197
    %v206 = vadd.f32 %v169, %v198
    %207 = vrot.lane.b32.xlu0 %v71, 120
    %v208 = vpop.permute.xlu0 %207
    %209 = vrot.lane.b32.xlu0 %v70, 120
    %v210 = vpop.permute.xlu0 %209
    %211 = vrot.lane.b32.xlu0 %v69, 120
    %v212 = vpop.permute.xlu0 %211
    %213 = vrot.lane.b32.xlu0 %v68, 120
    %v214 = vpop.permute.xlu0 %213
    %215 = vrot.lane.b32.xlu0 %v67, 120
    %v216 = vpop.permute.xlu0 %215
    %217 = vrot.lane.b32.xlu0 %v66, 120
    %v218 = vpop.permute.xlu0 %217
    %219 = vrot.lane.b32.xlu0 %v65, 120
    %v220 = vpop.permute.xlu0 %219
    %221 = vrot.lane.b32.xlu0 %v64, 120
    %v222 = vpop.permute.xlu0 %221
    %s223 = scalar_lea.vmem [#allocation5], 10
    %v224 = vld [vmem:[%s223] sm:$0x1]
    %v226 = vperm.slane %v224, 0
    %v228 = vmul.f32 %v208, %v226
    %v229 = vmul.f32 %v210, %v226
    %v230 = vmul.f32 %v212, %v226
    %v231 = vmul.f32 %v214, %v226
    %v232 = vmul.f32 %v216, %v226
    %v233 = vmul.f32 %v218, %v226
    %v234 = vmul.f32 %v220, %v226
    %v235 = vmul.f32 %v222, %v226
    %v236 = vadd.f32 %v199, %v228
    %v237 = vadd.f32 %v200, %v229
    %v238 = vadd.f32 %v201, %v230
    %v239 = vadd.f32 %v202, %v231
    %v240 = vadd.f32 %v203, %v232
    %v241 = vadd.f32 %v204, %v233
    %v242 = vadd.f32 %v205, %v234
    %v243 = vadd.f32 %v206, %v235
    %v244 = vrot.slane %v44, 7
    %v245 = vrot.slane %v45, 7
    %v246 = vrot.slane %v46, 7
    %v247 = vrot.slane %v47, 7
    %v248 = vrot.slane %v48, 7
    %v249 = vrot.slane %v49, 7
    %v250 = vrot.slane %v50, 7
    %v251 = vrot.slane %v51, 7
    %vm252 = vcmp.lt.s32.totalorder %v62, 1
    %v253 = vsel %vm252, %v250, %v251
    %v254 = vsel %vm252, %v249, %v250
    %v255 = vsel %vm252, %v248, %v249
    %v256 = vsel %vm252, %v247, %v248
    %v257 = vsel %vm252, %v246, %v247
    %v258 = vsel %vm252, %v245, %v246
    %v259 = vsel %vm252, %v244, %v245
    %v260 = vsel %vm252, %v251, %v244
    %261 = vrot.lane.b32.xlu0 %v260, 8
    %v262 = vpop.permute.xlu0 %261
    %263 = vrot.lane.b32.xlu0 %v259, 8
    %v264 = vpop.permute.xlu0 %263
    %265 = vrot.lane.b32.xlu0 %v258, 8
    %v266 = vpop.permute.xlu0 %265
    %267 = vrot.lane.b32.xlu0 %v257, 8
    %v268 = vpop.permute.xlu0 %267
    %269 = vrot.lane.b32.xlu0 %v256, 8
    %v270 = vpop.permute.xlu0 %269
    %271 = vrot.lane.b32.xlu0 %v255, 8
    %v272 = vpop.permute.xlu0 %271
    %273 = vrot.lane.b32.xlu0 %v254, 8
    %v274 = vpop.permute.xlu0 %273
    %275 = vrot.lane.b32.xlu0 %v253, 8
    %v276 = vpop.permute.xlu0 %275
    %s277 = scalar_lea.vmem [#allocation5], 11
    %v278 = vld [vmem:[%s277] sm:$0x1]
    %v280 = vperm.slane %v278, 0
    %v282 = vmul.f32 %v262, %v280
    %v283 = vmul.f32 %v264, %v280
    %v284 = vmul.f32 %v266, %v280
    %v285 = vmul.f32 %v268, %v280
    %v286 = vmul.f32 %v270, %v280
    %v287 = vmul.f32 %v272, %v280
    %v288 = vmul.f32 %v274, %v280
    %v289 = vmul.f32 %v276, %v280
    %v290 = vadd.f32 %v236, %v282
    %v291 = vadd.f32 %v237, %v283
    %v292 = vadd.f32 %v238, %v284
    %v293 = vadd.f32 %v239, %v285
    %v294 = vadd.f32 %v240, %v286
    %v295 = vadd.f32 %v241, %v287
    %v296 = vadd.f32 %v242, %v288
    %v297 = vadd.f32 %v243, %v289
    %298 = vrot.lane.b32.xlu0 %v260, 4
    %v299 = vpop.permute.xlu0 %298
    %300 = vrot.lane.b32.xlu0 %v259, 4
    %v301 = vpop.permute.xlu0 %300
    %302 = vrot.lane.b32.xlu0 %v258, 4
    %v303 = vpop.permute.xlu0 %302
    %304 = vrot.lane.b32.xlu0 %v257, 4
    %v305 = vpop.permute.xlu0 %304
    %306 = vrot.lane.b32.xlu0 %v256, 4
    %v307 = vpop.permute.xlu0 %306
    %308 = vrot.lane.b32.xlu0 %v255, 4
    %v309 = vpop.permute.xlu0 %308
    %310 = vrot.lane.b32.xlu0 %v254, 4
    %v311 = vpop.permute.xlu0 %310
    %312 = vrot.lane.b32.xlu0 %v253, 4
    %v313 = vpop.permute.xlu0 %312
    %s314 = scalar_lea.vmem [#allocation5], 12
    %v315 = vld [vmem:[%s314] sm:$0x1]
    %v317 = vperm.slane %v315, 0
    %v319 = vmul.f32 %v299, %v317
    %v320 = vmul.f32 %v301, %v317
    %v321 = vmul.f32 %v303, %v317
    %v322 = vmul.f32 %v305, %v317
    %v323 = vmul.f32 %v307, %v317
    %v324 = vmul.f32 %v309, %v317
    %v325 = vmul.f32 %v311, %v317
    %v326 = vmul.f32 %v313, %v317
    %v327 = vadd.f32 %v290, %v319
    %v328 = vadd.f32 %v291, %v320
    %v329 = vadd.f32 %v292, %v321
    %v330 = vadd.f32 %v293, %v322
    %v331 = vadd.f32 %v294, %v323
    %v332 = vadd.f32 %v295, %v324
    %v333 = vadd.f32 %v296, %v325
    %v334 = vadd.f32 %v297, %v326
    %s335 = scalar_lea.vmem [#allocation5], 13
    %v336 = vld [vmem:[%s335] sm:$0x1]
    %v338 = vperm.slane %v336, 0
    %v340 = vmul.f32 %v260, %v338
    %v341 = vmul.f32 %v259, %v338
    %v342 = vmul.f32 %v258, %v338
    %v343 = vmul.f32 %v257, %v338
    %v344 = vmul.f32 %v256, %v338
    %v345 = vmul.f32 %v255, %v338
    %v346 = vmul.f32 %v254, %v338
    %v347 = vmul.f32 %v253, %v338
    %v348 = vadd.f32 %v327, %v340
    %v349 = vadd.f32 %v328, %v341
    %v350 = vadd.f32 %v329, %v342
    %v351 = vadd.f32 %v330, %v343
    %v352 = vadd.f32 %v331, %v344
    %v353 = vadd.f32 %v332, %v345
    %v354 = vadd.f32 %v333, %v346
    %v355 = vadd.f32 %v334, %v347
    %356 = vrot.lane.b32.xlu0 %v260, 124
    %v357 = vpop.permute.xlu0 %356
    %358 = vrot.lane.b32.xlu0 %v259, 124
    %v359 = vpop.permute.xlu0 %358
    %360 = vrot.lane.b32.xlu0 %v258, 124
    %v361 = vpop.permute.xlu0 %360
    %362 = vrot.lane.b32.xlu0 %v257, 124
    %v363 = vpop.permute.xlu0 %362
    %364 = vrot.lane.b32.xlu0 %v256, 124
    %v365 = vpop.permute.xlu0 %364
    %366 = vrot.lane.b32.xlu0 %v255, 124
    %v367 = vpop.permute.xlu0 %366
    %368 = vrot.lane.b32.xlu0 %v254, 124
    %v369 = vpop.permute.xlu0 %368
    %370 = vrot.lane.b32.xlu0 %v253, 124
    %v371 = vpop.permute.xlu0 %370
    %s372 = scalar_lea.vmem [#allocation5], 14
    %v373 = vld [vmem:[%s372] sm:$0x1]
    %v375 = vperm.slane %v373, 0
    %v377 = vmul.f32 %v357, %v375
    %v378 = vmul.f32 %v359, %v375
    %v379 = vmul.f32 %v361, %v375
    %v380 = vmul.f32 %v363, %v375
    %v381 = vmul.f32 %v365, %v375
    %v382 = vmul.f32 %v367, %v375
    %v383 = vmul.f32 %v369, %v375
    %v384 = vmul.f32 %v371, %v375
    %v385 = vadd.f32 %v348, %v377
    %v386 = vadd.f32 %v349, %v378
    %v387 = vadd.f32 %v350, %v379
    %v388 = vadd.f32 %v351, %v380
    %v389 = vadd.f32 %v352, %v381
    %v390 = vadd.f32 %v353, %v382
    %v391 = vadd.f32 %v354, %v383
    %v392 = vadd.f32 %v355, %v384
    %393 = vrot.lane.b32.xlu0 %v260, 120
    %v394 = vpop.permute.xlu0 %393
    %395 = vrot.lane.b32.xlu0 %v259, 120
    %v396 = vpop.permute.xlu0 %395
    %397 = vrot.lane.b32.xlu0 %v258, 120
    %v398 = vpop.permute.xlu0 %397
    %399 = vrot.lane.b32.xlu0 %v257, 120
    %v400 = vpop.permute.xlu0 %399
    %401 = vrot.lane.b32.xlu0 %v256, 120
    %v402 = vpop.permute.xlu0 %401
    %403 = vrot.lane.b32.xlu0 %v255, 120
    %v404 = vpop.permute.xlu0 %403
    %405 = vrot.lane.b32.xlu0 %v254, 120
    %v406 = vpop.permute.xlu0 %405
    %407 = vrot.lane.b32.xlu0 %v253, 120
    %v408 = vpop.permute.xlu0 %407
    %s409 = scalar_lea.vmem [#allocation5], 15
    %v410 = vld [vmem:[%s409] sm:$0x1]
    %v412 = vperm.slane %v410, 0
    %v414 = vmul.f32 %v394, %v412
    %v415 = vmul.f32 %v396, %v412
    %v416 = vmul.f32 %v398, %v412
    %v417 = vmul.f32 %v400, %v412
    %v418 = vmul.f32 %v402, %v412
    %v419 = vmul.f32 %v404, %v412
    %v420 = vmul.f32 %v406, %v412
    %v421 = vmul.f32 %v408, %v412
    %v422 = vadd.f32 %v385, %v414
    %v423 = vadd.f32 %v386, %v415
    %v424 = vadd.f32 %v387, %v416
    %v425 = vadd.f32 %v388, %v417
    %v426 = vadd.f32 %v389, %v418
    %v427 = vadd.f32 %v390, %v419
    %v428 = vadd.f32 %v391, %v420
    %v429 = vadd.f32 %v392, %v421
    %430 = vrot.lane.b32.xlu0 %v44, 8
    %v431 = vpop.permute.xlu0 %430
    %432 = vrot.lane.b32.xlu0 %v45, 8
    %v433 = vpop.permute.xlu0 %432
    %434 = vrot.lane.b32.xlu0 %v46, 8
    %v435 = vpop.permute.xlu0 %434
    %436 = vrot.lane.b32.xlu0 %v47, 8
    %v437 = vpop.permute.xlu0 %436
    %438 = vrot.lane.b32.xlu0 %v48, 8
    %v439 = vpop.permute.xlu0 %438
    %440 = vrot.lane.b32.xlu0 %v49, 8
    %v441 = vpop.permute.xlu0 %440
    %442 = vrot.lane.b32.xlu0 %v50, 8
    %v443 = vpop.permute.xlu0 %442
    %444 = vrot.lane.b32.xlu0 %v51, 8
    %v445 = vpop.permute.xlu0 %444
    %s446 = scalar_lea.vmem [#allocation5], 16
    %v447 = vld [vmem:[%s446] sm:$0x1]
    %v449 = vperm.slane %v447, 0
    %v451 = vmul.f32 %v431, %v449
    %v452 = vmul.f32 %v433, %v449
    %v453 = vmul.f32 %v435, %v449
    %v454 = vmul.f32 %v437, %v449
    %v455 = vmul.f32 %v439, %v449
    %v456 = vmul.f32 %v441, %v449
    %v457 = vmul.f32 %v443, %v449
    %v458 = vmul.f32 %v445, %v449
    %v459 = vadd.f32 %v422, %v451
    %v460 = vadd.f32 %v423, %v452
    %v461 = vadd.f32 %v424, %v453
    %v462 = vadd.f32 %v425, %v454
    %v463 = vadd.f32 %v426, %v455
    %v464 = vadd.f32 %v427, %v456
    %v465 = vadd.f32 %v428, %v457
    %v466 = vadd.f32 %v429, %v458
    %467 = vrot.lane.b32.xlu0 %v44, 4
    %v468 = vpop.permute.xlu0 %467
    %469 = vrot.lane.b32.xlu0 %v45, 4
    %v470 = vpop.permute.xlu0 %469
    %471 = vrot.lane.b32.xlu0 %v46, 4
    %v472 = vpop.permute.xlu0 %471
    %473 = vrot.lane.b32.xlu0 %v47, 4
    %v474 = vpop.permute.xlu0 %473
    %475 = vrot.lane.b32.xlu0 %v48, 4
    %v476 = vpop.permute.xlu0 %475
    %477 = vrot.lane.b32.xlu0 %v49, 4
    %v478 = vpop.permute.xlu0 %477
    %479 = vrot.lane.b32.xlu0 %v50, 4
    %v480 = vpop.permute.xlu0 %479
    %481 = vrot.lane.b32.xlu0 %v51, 4
    %v482 = vpop.permute.xlu0 %481
    %s483 = scalar_lea.vmem [#allocation5], 17
    %v484 = vld [vmem:[%s483] sm:$0x1]
    %v486 = vperm.slane %v484, 0
    %v488 = vmul.f32 %v468, %v486
    %v489 = vmul.f32 %v470, %v486
    %v490 = vmul.f32 %v472, %v486
    %v491 = vmul.f32 %v474, %v486
    %v492 = vmul.f32 %v476, %v486
    %v493 = vmul.f32 %v478, %v486
    %v494 = vmul.f32 %v480, %v486
    %v495 = vmul.f32 %v482, %v486
    %v496 = vadd.f32 %v459, %v488
    %v497 = vadd.f32 %v460, %v489
    %v498 = vadd.f32 %v461, %v490
    %v499 = vadd.f32 %v462, %v491
    %v500 = vadd.f32 %v463, %v492
    %v501 = vadd.f32 %v464, %v493
    %v502 = vadd.f32 %v465, %v494
    %v503 = vadd.f32 %v466, %v495
    %s504 = scalar_lea.vmem [#allocation5], 18
    %v505 = vld [vmem:[%s504] sm:$0x1]
    %v507 = vperm.slane %v505, 0
    %v509 = vmul.f32 %v44, %v507
    %v510 = vmul.f32 %v45, %v507
    %v511 = vmul.f32 %v46, %v507
    %v512 = vmul.f32 %v47, %v507
    %v513 = vmul.f32 %v48, %v507
    %v514 = vmul.f32 %v49, %v507
    %v515 = vmul.f32 %v50, %v507
    %v516 = vmul.f32 %v51, %v507
    %v517 = vadd.f32 %v496, %v509
    %v518 = vadd.f32 %v497, %v510
    %v519 = vadd.f32 %v498, %v511
    %v520 = vadd.f32 %v499, %v512
    %v521 = vadd.f32 %v500, %v513
    %v522 = vadd.f32 %v501, %v514
    %v523 = vadd.f32 %v502, %v515
    %v524 = vadd.f32 %v503, %v516
    %525 = vrot.lane.b32.xlu0 %v44, 124
    %v526 = vpop.permute.xlu0 %525
    %527 = vrot.lane.b32.xlu0 %v45, 124
    %v528 = vpop.permute.xlu0 %527
    %529 = vrot.lane.b32.xlu0 %v46, 124
    %v530 = vpop.permute.xlu0 %529
    %531 = vrot.lane.b32.xlu0 %v47, 124
    %v532 = vpop.permute.xlu0 %531
    %533 = vrot.lane.b32.xlu0 %v48, 124
    %v534 = vpop.permute.xlu0 %533
    %535 = vrot.lane.b32.xlu0 %v49, 124
    %v536 = vpop.permute.xlu0 %535
    %537 = vrot.lane.b32.xlu0 %v50, 124
    %v538 = vpop.permute.xlu0 %537
    %539 = vrot.lane.b32.xlu0 %v51, 124
    %v540 = vpop.permute.xlu0 %539
    %s541 = scalar_lea.vmem [#allocation5], 19
    %v542 = vld [vmem:[%s541] sm:$0x1]
    %v544 = vperm.slane %v542, 0
    %v546 = vmul.f32 %v526, %v544
    %v547 = vmul.f32 %v528, %v544
    %v548 = vmul.f32 %v530, %v544
    %v549 = vmul.f32 %v532, %v544
    %v550 = vmul.f32 %v534, %v544
    %v551 = vmul.f32 %v536, %v544
    %v552 = vmul.f32 %v538, %v544
    %v553 = vmul.f32 %v540, %v544
    %v554 = vadd.f32 %v517, %v546
    %v555 = vadd.f32 %v518, %v547
    %v556 = vadd.f32 %v519, %v548
    %v557 = vadd.f32 %v520, %v549
    %v558 = vadd.f32 %v521, %v550
    %v559 = vadd.f32 %v522, %v551
    %v560 = vadd.f32 %v523, %v552
    %v561 = vadd.f32 %v524, %v553
    %562 = vrot.lane.b32.xlu0 %v44, 120
    %v563 = vpop.permute.xlu0 %562
    %564 = vrot.lane.b32.xlu0 %v45, 120
    %v565 = vpop.permute.xlu0 %564
    %566 = vrot.lane.b32.xlu0 %v46, 120
    %v567 = vpop.permute.xlu0 %566
    %568 = vrot.lane.b32.xlu0 %v47, 120
    %v569 = vpop.permute.xlu0 %568
    %570 = vrot.lane.b32.xlu0 %v48, 120
    %v571 = vpop.permute.xlu0 %570
    %572 = vrot.lane.b32.xlu0 %v49, 120
    %v573 = vpop.permute.xlu0 %572
    %574 = vrot.lane.b32.xlu0 %v50, 120
    %v575 = vpop.permute.xlu0 %574
    %576 = vrot.lane.b32.xlu0 %v51, 120
    %v577 = vpop.permute.xlu0 %576
    %s578 = scalar_lea.vmem [#allocation5], 20
    %v579 = vld [vmem:[%s578] sm:$0x1]
    %v581 = vperm.slane %v579, 0
    %v583 = vmul.f32 %v563, %v581
    %v584 = vmul.f32 %v565, %v581
    %v585 = vmul.f32 %v567, %v581
    %v586 = vmul.f32 %v569, %v581
    %v587 = vmul.f32 %v571, %v581
    %v588 = vmul.f32 %v573, %v581
    %v589 = vmul.f32 %v575, %v581
    %v590 = vmul.f32 %v577, %v581
    %v591 = vadd.f32 %v554, %v583
    %v592 = vadd.f32 %v555, %v584
    %v593 = vadd.f32 %v556, %v585
    %v594 = vadd.f32 %v557, %v586
    %v595 = vadd.f32 %v558, %v587
    %v596 = vadd.f32 %v559, %v588
    %v597 = vadd.f32 %v560, %v589
    %v598 = vadd.f32 %v561, %v590
    %v599 = vrot.slane %v44, 1
    %v600 = vrot.slane %v45, 1
    %v601 = vrot.slane %v46, 1
    %v602 = vrot.slane %v47, 1
    %v603 = vrot.slane %v48, 1
    %v604 = vrot.slane %v49, 1
    %v605 = vrot.slane %v50, 1
    %v606 = vrot.slane %v51, 1
    %vm607 = vcmp.lt.s32.totalorder %v62, 7
    %v608 = vsel %vm607, %v605, %v606
    %v609 = vsel %vm607, %v604, %v605
    %v610 = vsel %vm607, %v603, %v604
    %v611 = vsel %vm607, %v602, %v603
    %v612 = vsel %vm607, %v601, %v602
    %v613 = vsel %vm607, %v600, %v601
    %v614 = vsel %vm607, %v599, %v600
    %v615 = vsel %vm607, %v606, %v599
    %616 = vrot.lane.b32.xlu0 %v614, 8
    %v617 = vpop.permute.xlu0 %616
    %618 = vrot.lane.b32.xlu0 %v613, 8
    %v619 = vpop.permute.xlu0 %618
    %620 = vrot.lane.b32.xlu0 %v612, 8
    %v621 = vpop.permute.xlu0 %620
    %622 = vrot.lane.b32.xlu0 %v611, 8
    %v623 = vpop.permute.xlu0 %622
    %624 = vrot.lane.b32.xlu0 %v610, 8
    %v625 = vpop.permute.xlu0 %624
    %626 = vrot.lane.b32.xlu0 %v609, 8
    %v627 = vpop.permute.xlu0 %626
    %628 = vrot.lane.b32.xlu0 %v608, 8
    %v629 = vpop.permute.xlu0 %628
    %630 = vrot.lane.b32.xlu0 %v615, 8
    %v631 = vpop.permute.xlu0 %630
    %s632 = scalar_lea.vmem [#allocation5], 21
    %v633 = vld [vmem:[%s632] sm:$0x1]
    %v635 = vperm.slane %v633, 0
    %v637 = vmul.f32 %v617, %v635
    %v638 = vmul.f32 %v619, %v635
    %v639 = vmul.f32 %v621, %v635
    %v640 = vmul.f32 %v623, %v635
    %v641 = vmul.f32 %v625, %v635
    %v642 = vmul.f32 %v627, %v635
    %v643 = vmul.f32 %v629, %v635
    %v644 = vmul.f32 %v631, %v635
    %v645 = vadd.f32 %v591, %v637
    %v646 = vadd.f32 %v592, %v638
    %v647 = vadd.f32 %v593, %v639
    %v648 = vadd.f32 %v594, %v640
    %v649 = vadd.f32 %v595, %v641
    %v650 = vadd.f32 %v596, %v642
    %v651 = vadd.f32 %v597, %v643
    %v652 = vadd.f32 %v598, %v644
    %653 = vrot.lane.b32.xlu0 %v614, 4
    %v654 = vpop.permute.xlu0 %653
    %655 = vrot.lane.b32.xlu0 %v613, 4
    %v656 = vpop.permute.xlu0 %655
    %657 = vrot.lane.b32.xlu0 %v612, 4
    %v658 = vpop.permute.xlu0 %657
    %659 = vrot.lane.b32.xlu0 %v611, 4
    %v660 = vpop.permute.xlu0 %659
    %661 = vrot.lane.b32.xlu0 %v610, 4
    %v662 = vpop.permute.xlu0 %661
    %663 = vrot.lane.b32.xlu0 %v609, 4
    %v664 = vpop.permute.xlu0 %663
    %665 = vrot.lane.b32.xlu0 %v608, 4
    %v666 = vpop.permute.xlu0 %665
    %667 = vrot.lane.b32.xlu0 %v615, 4
    %v668 = vpop.permute.xlu0 %667
    %s669 = scalar_lea.vmem [#allocation5], 22
    %v670 = vld [vmem:[%s669] sm:$0x1]
    %v672 = vperm.slane %v670, 0
    %v674 = vmul.f32 %v654, %v672
    %v675 = vmul.f32 %v656, %v672
    %v676 = vmul.f32 %v658, %v672
    %v677 = vmul.f32 %v660, %v672
    %v678 = vmul.f32 %v662, %v672
    %v679 = vmul.f32 %v664, %v672
    %v680 = vmul.f32 %v666, %v672
    %v681 = vmul.f32 %v668, %v672
    %v682 = vadd.f32 %v645, %v674
    %v683 = vadd.f32 %v646, %v675
    %v684 = vadd.f32 %v647, %v676
    %v685 = vadd.f32 %v648, %v677
    %v686 = vadd.f32 %v649, %v678
    %v687 = vadd.f32 %v650, %v679
    %v688 = vadd.f32 %v651, %v680
    %v689 = vadd.f32 %v652, %v681
    %s690 = scalar_lea.vmem [#allocation5], 23
    %v691 = vld [vmem:[%s690] sm:$0x1]
    %v693 = vperm.slane %v691, 0
    %v695 = vmul.f32 %v614, %v693
    %v696 = vmul.f32 %v613, %v693
    %v697 = vmul.f32 %v612, %v693
    %v698 = vmul.f32 %v611, %v693
    %v699 = vmul.f32 %v610, %v693
    %v700 = vmul.f32 %v609, %v693
    %v701 = vmul.f32 %v608, %v693
    %v702 = vmul.f32 %v615, %v693
    %v703 = vadd.f32 %v682, %v695
    %v704 = vadd.f32 %v683, %v696
    %v705 = vadd.f32 %v684, %v697
    %v706 = vadd.f32 %v685, %v698
    %v707 = vadd.f32 %v686, %v699
    %v708 = vadd.f32 %v687, %v700
    %v709 = vadd.f32 %v688, %v701
    %v710 = vadd.f32 %v689, %v702
    %711 = vrot.lane.b32.xlu0 %v614, 124
    %v712 = vpop.permute.xlu0 %711
    %713 = vrot.lane.b32.xlu0 %v613, 124
    %v714 = vpop.permute.xlu0 %713
    %715 = vrot.lane.b32.xlu0 %v612, 124
    %v716 = vpop.permute.xlu0 %715
    %717 = vrot.lane.b32.xlu0 %v611, 124
    %v718 = vpop.permute.xlu0 %717
    %719 = vrot.lane.b32.xlu0 %v610, 124
    %v720 = vpop.permute.xlu0 %719
    %721 = vrot.lane.b32.xlu0 %v609, 124
    %v722 = vpop.permute.xlu0 %721
    %723 = vrot.lane.b32.xlu0 %v608, 124
    %v724 = vpop.permute.xlu0 %723
    %725 = vrot.lane.b32.xlu0 %v615, 124
    %v726 = vpop.permute.xlu0 %725
    %s727 = scalar_lea.vmem [#allocation5], 24
    %v728 = vld [vmem:[%s727] sm:$0x1]
    %v730 = vperm.slane %v728, 0
    %v732 = vmul.f32 %v712, %v730
    %v733 = vmul.f32 %v714, %v730
    %v734 = vmul.f32 %v716, %v730
    %v735 = vmul.f32 %v718, %v730
    %v736 = vmul.f32 %v720, %v730
    %v737 = vmul.f32 %v722, %v730
    %v738 = vmul.f32 %v724, %v730
    %v739 = vmul.f32 %v726, %v730
    %v740 = vadd.f32 %v703, %v732
    %v741 = vadd.f32 %v704, %v733
    %v742 = vadd.f32 %v705, %v734
    %v743 = vadd.f32 %v706, %v735
    %v744 = vadd.f32 %v707, %v736
    %v745 = vadd.f32 %v708, %v737
    %v746 = vadd.f32 %v709, %v738
    %v747 = vadd.f32 %v710, %v739
    %748 = vrot.lane.b32.xlu0 %v614, 120
    %v749 = vpop.permute.xlu0 %748
    %750 = vrot.lane.b32.xlu0 %v613, 120
    %v751 = vpop.permute.xlu0 %750
    %752 = vrot.lane.b32.xlu0 %v612, 120
    %v753 = vpop.permute.xlu0 %752
    %754 = vrot.lane.b32.xlu0 %v611, 120
    %v755 = vpop.permute.xlu0 %754
    %756 = vrot.lane.b32.xlu0 %v610, 120
    %v757 = vpop.permute.xlu0 %756
    %758 = vrot.lane.b32.xlu0 %v609, 120
    %v759 = vpop.permute.xlu0 %758
    %760 = vrot.lane.b32.xlu0 %v608, 120
    %v761 = vpop.permute.xlu0 %760
    %762 = vrot.lane.b32.xlu0 %v615, 120
    %v763 = vpop.permute.xlu0 %762
    %s764 = scalar_lea.vmem [#allocation5], 25
    %v765 = vld [vmem:[%s764] sm:$0x1]
    %v767 = vperm.slane %v765, 0
    %v769 = vmul.f32 %v749, %v767
    %v770 = vmul.f32 %v751, %v767
    %v771 = vmul.f32 %v753, %v767
    %v772 = vmul.f32 %v755, %v767
    %v773 = vmul.f32 %v757, %v767
    %v774 = vmul.f32 %v759, %v767
    %v775 = vmul.f32 %v761, %v767
    %v776 = vmul.f32 %v763, %v767
    %v777 = vadd.f32 %v740, %v769
    %v778 = vadd.f32 %v741, %v770
    %v779 = vadd.f32 %v742, %v771
    %v780 = vadd.f32 %v743, %v772
    %v781 = vadd.f32 %v744, %v773
    %v782 = vadd.f32 %v745, %v774
    %v783 = vadd.f32 %v746, %v775
    %v784 = vadd.f32 %v747, %v776
    %v785 = vrot.slane %v44, 2
    %v786 = vrot.slane %v45, 2
    %v787 = vrot.slane %v46, 2
    %v788 = vrot.slane %v47, 2
    %v789 = vrot.slane %v48, 2
    %v790 = vrot.slane %v49, 2
    %v791 = vrot.slane %v50, 2
    %v792 = vrot.slane %v51, 2
    %vm793 = vcmp.lt.s32.totalorder %v62, 6
    %v794 = vsel %vm793, %v791, %v792
    %v795 = vsel %vm793, %v790, %v791
    %v796 = vsel %vm793, %v789, %v790
    %v797 = vsel %vm793, %v788, %v789
    %v798 = vsel %vm793, %v787, %v788
    %v799 = vsel %vm793, %v786, %v787
    %v800 = vsel %vm793, %v785, %v786
    %v801 = vsel %vm793, %v792, %v785
    %802 = vrot.lane.b32.xlu0 %v800, 8
    %v803 = vpop.permute.xlu0 %802
    %804 = vrot.lane.b32.xlu0 %v799, 8
    %v805 = vpop.permute.xlu0 %804
    %806 = vrot.lane.b32.xlu0 %v798, 8
    %v807 = vpop.permute.xlu0 %806
    %808 = vrot.lane.b32.xlu0 %v797, 8
    %v809 = vpop.permute.xlu0 %808
    %810 = vrot.lane.b32.xlu0 %v796, 8
    %v811 = vpop.permute.xlu0 %810
    %812 = vrot.lane.b32.xlu0 %v795, 8
    %v813 = vpop.permute.xlu0 %812
    %814 = vrot.lane.b32.xlu0 %v794, 8
    %v815 = vpop.permute.xlu0 %814
    %816 = vrot.lane.b32.xlu0 %v801, 8
    %v817 = vpop.permute.xlu0 %816
    %s818 = scalar_lea.vmem [#allocation5], 26
    %v819 = vld [vmem:[%s818] sm:$0x1]
    %v821 = vperm.slane %v819, 0
    %v823 = vmul.f32 %v803, %v821
    %v824 = vmul.f32 %v805, %v821
    %v825 = vmul.f32 %v807, %v821
    %v826 = vmul.f32 %v809, %v821
    %v827 = vmul.f32 %v811, %v821
    %v828 = vmul.f32 %v813, %v821
    %v829 = vmul.f32 %v815, %v821
    %v830 = vmul.f32 %v817, %v821
    %v831 = vadd.f32 %v777, %v823
    %v832 = vadd.f32 %v778, %v824
    %v833 = vadd.f32 %v779, %v825
    %v834 = vadd.f32 %v780, %v826
    %v835 = vadd.f32 %v781, %v827
    %v836 = vadd.f32 %v782, %v828
    %v837 = vadd.f32 %v783, %v829
    %v838 = vadd.f32 %v784, %v830
    %839 = vrot.lane.b32.xlu0 %v800, 4
    %v840 = vpop.permute.xlu0 %839
    %841 = vrot.lane.b32.xlu0 %v799, 4
    %v842 = vpop.permute.xlu0 %841
    %843 = vrot.lane.b32.xlu0 %v798, 4
    %v844 = vpop.permute.xlu0 %843
    %845 = vrot.lane.b32.xlu0 %v797, 4
    %v846 = vpop.permute.xlu0 %845
    %847 = vrot.lane.b32.xlu0 %v796, 4
    %v848 = vpop.permute.xlu0 %847
    %849 = vrot.lane.b32.xlu0 %v795, 4
    %v850 = vpop.permute.xlu0 %849
    %851 = vrot.lane.b32.xlu0 %v794, 4
    %v852 = vpop.permute.xlu0 %851
    %853 = vrot.lane.b32.xlu0 %v801, 4
    %v854 = vpop.permute.xlu0 %853
    %s855 = scalar_lea.vmem [#allocation5], 27
    %v856 = vld [vmem:[%s855] sm:$0x1]
    %v858 = vperm.slane %v856, 0
    %v860 = vmul.f32 %v840, %v858
    %v861 = vmul.f32 %v842, %v858
    %v862 = vmul.f32 %v844, %v858
    %v863 = vmul.f32 %v846, %v858
    %v864 = vmul.f32 %v848, %v858
    %v865 = vmul.f32 %v850, %v858
    %v866 = vmul.f32 %v852, %v858
    %v867 = vmul.f32 %v854, %v858
    %v868 = vadd.f32 %v831, %v860
    %v869 = vadd.f32 %v832, %v861
    %v870 = vadd.f32 %v833, %v862
    %v871 = vadd.f32 %v834, %v863
    %v872 = vadd.f32 %v835, %v864
    %v873 = vadd.f32 %v836, %v865
    %v874 = vadd.f32 %v837, %v866
    %v875 = vadd.f32 %v838, %v867
    %s876 = scalar_lea.vmem [#allocation5], 28
    %v877 = vld [vmem:[%s876] sm:$0x1]
    %v879 = vperm.slane %v877, 0
    %v881 = vmul.f32 %v800, %v879
    %v882 = vmul.f32 %v799, %v879
    %v883 = vmul.f32 %v798, %v879
    %v884 = vmul.f32 %v797, %v879
    %v885 = vmul.f32 %v796, %v879
    %v886 = vmul.f32 %v795, %v879
    %v887 = vmul.f32 %v794, %v879
    %v888 = vmul.f32 %v801, %v879
    %v889 = vadd.f32 %v868, %v881
    %v890 = vadd.f32 %v869, %v882
    %v891 = vadd.f32 %v870, %v883
    %v892 = vadd.f32 %v871, %v884
    %v893 = vadd.f32 %v872, %v885
    %v894 = vadd.f32 %v873, %v886
    %v895 = vadd.f32 %v874, %v887
    %v896 = vadd.f32 %v875, %v888
    %897 = vrot.lane.b32.xlu0 %v800, 124
    %v898 = vpop.permute.xlu0 %897
    %899 = vrot.lane.b32.xlu0 %v799, 124
    %v900 = vpop.permute.xlu0 %899
    %901 = vrot.lane.b32.xlu0 %v798, 124
    %v902 = vpop.permute.xlu0 %901
    %903 = vrot.lane.b32.xlu0 %v797, 124
    %v904 = vpop.permute.xlu0 %903
    %905 = vrot.lane.b32.xlu0 %v796, 124
    %v906 = vpop.permute.xlu0 %905
    %907 = vrot.lane.b32.xlu0 %v795, 124
    %v908 = vpop.permute.xlu0 %907
    %909 = vrot.lane.b32.xlu0 %v794, 124
    %v910 = vpop.permute.xlu0 %909
    %911 = vrot.lane.b32.xlu0 %v801, 124
    %v912 = vpop.permute.xlu0 %911
    %s913 = scalar_lea.vmem [#allocation5], 29
    %v914 = vld [vmem:[%s913] sm:$0x1]
    %v916 = vperm.slane %v914, 0
    %v918 = vmul.f32 %v898, %v916
    %v919 = vmul.f32 %v900, %v916
    %v920 = vmul.f32 %v902, %v916
    %v921 = vmul.f32 %v904, %v916
    %v922 = vmul.f32 %v906, %v916
    %v923 = vmul.f32 %v908, %v916
    %v924 = vmul.f32 %v910, %v916
    %v925 = vmul.f32 %v912, %v916
    %v926 = vadd.f32 %v889, %v918
    %v927 = vadd.f32 %v890, %v919
    %v928 = vadd.f32 %v891, %v920
    %v929 = vadd.f32 %v892, %v921
    %v930 = vadd.f32 %v893, %v922
    %v931 = vadd.f32 %v894, %v923
    %v932 = vadd.f32 %v895, %v924
    %v933 = vadd.f32 %v896, %v925
    %934 = vrot.lane.b32.xlu0 %v800, 120
    %v935 = vpop.permute.xlu0 %934
    %936 = vrot.lane.b32.xlu0 %v799, 120
    %v937 = vpop.permute.xlu0 %936
    %938 = vrot.lane.b32.xlu0 %v798, 120
    %v939 = vpop.permute.xlu0 %938
    %940 = vrot.lane.b32.xlu0 %v797, 120
    %v941 = vpop.permute.xlu0 %940
    %942 = vrot.lane.b32.xlu0 %v796, 120
    %v943 = vpop.permute.xlu0 %942
    %944 = vrot.lane.b32.xlu0 %v795, 120
    %v945 = vpop.permute.xlu0 %944
    %946 = vrot.lane.b32.xlu0 %v794, 120
    %v947 = vpop.permute.xlu0 %946
    %948 = vrot.lane.b32.xlu0 %v801, 120
    %v949 = vpop.permute.xlu0 %948
    %s950 = scalar_lea.vmem [#allocation5], 30
    %v951 = vld [vmem:[%s950] sm:$0x1]
    %v953 = vperm.slane %v951, 0
    %v955 = vmul.f32 %v935, %v953
    %v956 = vmul.f32 %v937, %v953
    %v957 = vmul.f32 %v939, %v953
    %v958 = vmul.f32 %v941, %v953
    %v959 = vmul.f32 %v943, %v953
    %v960 = vmul.f32 %v945, %v953
    %v961 = vmul.f32 %v947, %v953
    %v962 = vmul.f32 %v949, %v953
    %v963 = vadd.f32 %v926, %v955
    %v964 = vadd.f32 %v927, %v956
    %v965 = vadd.f32 %v928, %v957
    %v966 = vadd.f32 %v929, %v958
    %v967 = vadd.f32 %v930, %v959
    %v968 = vadd.f32 %v931, %v960
    %v969 = vadd.f32 %v932, %v961
    %v970 = vadd.f32 %v933, %v962
    %s971 = scalar_lea.vmem [#allocation5], 1
    %v972 = vld [vmem:[%s971] sm:$0x1]
    %s973 = scalar_lea.vmem [#allocation5], 2
    %v974 = vld [vmem:[%s973] sm:$0x1]
    %s975 = scalar_lea.vmem [#allocation5], 3
    %v976 = vld [vmem:[%s975] sm:$0x1]
    %977 = vrot.lane.b32.xlu0 %v963, 40
    %v978 = vpop.permute.xlu0 %977
    %979 = vrot.lane.b32.xlu0 %v964, 40
    %v980 = vpop.permute.xlu0 %979
    %981 = vrot.lane.b32.xlu0 %v965, 40
    %v982 = vpop.permute.xlu0 %981
    %983 = vrot.lane.b32.xlu0 %v966, 40
    %v984 = vpop.permute.xlu0 %983
    %985 = vrot.lane.b32.xlu0 %v967, 40
    %v986 = vpop.permute.xlu0 %985
    %987 = vrot.lane.b32.xlu0 %v968, 40
    %v988 = vpop.permute.xlu0 %987
    %989 = vrot.lane.b32.xlu0 %v969, 40
    %v990 = vpop.permute.xlu0 %989
    %991 = vrot.lane.b32.xlu0 %v970, 40
    %v992 = vpop.permute.xlu0 %991
    %s993 = scalar_lea.vmem [#allocation5], 49
    %v994 = vld [vmem:[%s993] sm:$0x1]
    %v996 = vperm.slane %v994, 0
    %v998 = vmul.f32 %v978, %v996
    %v999 = vmul.f32 %v980, %v996
    %v1000 = vmul.f32 %v982, %v996
    %v1001 = vmul.f32 %v984, %v996
    %v1002 = vmul.f32 %v986, %v996
    %v1003 = vmul.f32 %v988, %v996
    %v1004 = vmul.f32 %v990, %v996
    %v1005 = vmul.f32 %v992, %v996
    %v1007 = vperm.slane %v976, 0
    %v1009 = vadd.f32 %v1007, %v998
    %v1010 = vadd.f32 %v1007, %v999
    %v1011 = vadd.f32 %v1007, %v1000
    %v1012 = vadd.f32 %v1007, %v1001
    %v1013 = vadd.f32 %v1007, %v1002
    %v1014 = vadd.f32 %v1007, %v1003
    %v1015 = vadd.f32 %v1007, %v1004
    %v1016 = vadd.f32 %v1007, %v1005
    %1017 = vrot.lane.b32.xlu0 %v963, 36
    %v1018 = vpop.permute.xlu0 %1017
    %1019 = vrot.lane.b32.xlu0 %v964, 36
    %v1020 = vpop.permute.xlu0 %1019
    %1021 = vrot.lane.b32.xlu0 %v965, 36
    %v1022 = vpop.permute.xlu0 %1021
    %1023 = vrot.lane.b32.xlu0 %v966, 36
    %v1024 = vpop.permute.xlu0 %1023
    %1025 = vrot.lane.b32.xlu0 %v967, 36
    %v1026 = vpop.permute.xlu0 %1025
    %1027 = vrot.lane.b32.xlu0 %v968, 36
    %v1028 = vpop.permute.xlu0 %1027
    %1029 = vrot.lane.b32.xlu0 %v969, 36
    %v1030 = vpop.permute.xlu0 %1029
    %1031 = vrot.lane.b32.xlu0 %v970, 36
    %v1032 = vpop.permute.xlu0 %1031
    %s1033 = scalar_lea.vmem [#allocation5], 50
    %v1034 = vld [vmem:[%s1033] sm:$0x1]
    %v1036 = vperm.slane %v1034, 0
    %v1038 = vmul.f32 %v1018, %v1036
    %v1039 = vmul.f32 %v1020, %v1036
    %v1040 = vmul.f32 %v1022, %v1036
    %v1041 = vmul.f32 %v1024, %v1036
    %v1042 = vmul.f32 %v1026, %v1036
    %v1043 = vmul.f32 %v1028, %v1036
    %v1044 = vmul.f32 %v1030, %v1036
    %v1045 = vmul.f32 %v1032, %v1036
    %v1046 = vadd.f32 %v1009, %v1038
    %v1047 = vadd.f32 %v1010, %v1039
    %v1048 = vadd.f32 %v1011, %v1040
    %v1049 = vadd.f32 %v1012, %v1041
    %v1050 = vadd.f32 %v1013, %v1042
    %v1051 = vadd.f32 %v1014, %v1043
    %v1052 = vadd.f32 %v1015, %v1044
    %v1053 = vadd.f32 %v1016, %v1045
    %1054 = vrot.lane.b32.xlu0 %v963, 32
    %v1055 = vpop.permute.xlu0 %1054
    %1056 = vrot.lane.b32.xlu0 %v964, 32
    %v1057 = vpop.permute.xlu0 %1056
    %1058 = vrot.lane.b32.xlu0 %v965, 32
    %v1059 = vpop.permute.xlu0 %1058
    %1060 = vrot.lane.b32.xlu0 %v966, 32
    %v1061 = vpop.permute.xlu0 %1060
    %1062 = vrot.lane.b32.xlu0 %v967, 32
    %v1063 = vpop.permute.xlu0 %1062
    %1064 = vrot.lane.b32.xlu0 %v968, 32
    %v1065 = vpop.permute.xlu0 %1064
    %1066 = vrot.lane.b32.xlu0 %v969, 32
    %v1067 = vpop.permute.xlu0 %1066
    %1068 = vrot.lane.b32.xlu0 %v970, 32
    %v1069 = vpop.permute.xlu0 %1068
    %s1070 = scalar_lea.vmem [#allocation5], 51
    %v1071 = vld [vmem:[%s1070] sm:$0x1]
    %v1073 = vperm.slane %v1071, 0
    %v1075 = vmul.f32 %v1055, %v1073
    %v1076 = vmul.f32 %v1057, %v1073
    %v1077 = vmul.f32 %v1059, %v1073
    %v1078 = vmul.f32 %v1061, %v1073
    %v1079 = vmul.f32 %v1063, %v1073
    %v1080 = vmul.f32 %v1065, %v1073
    %v1081 = vmul.f32 %v1067, %v1073
    %v1082 = vmul.f32 %v1069, %v1073
    %v1083 = vadd.f32 %v1046, %v1075
    %v1084 = vadd.f32 %v1047, %v1076
    %v1085 = vadd.f32 %v1048, %v1077
    %v1086 = vadd.f32 %v1049, %v1078
    %v1087 = vadd.f32 %v1050, %v1079
    %v1088 = vadd.f32 %v1051, %v1080
    %v1089 = vadd.f32 %v1052, %v1081
    %v1090 = vadd.f32 %v1053, %v1082
    %1091 = vrot.lane.b32.xlu0 %v963, 28
    %v1092 = vpop.permute.xlu0 %1091
    %1093 = vrot.lane.b32.xlu0 %v964, 28
    %v1094 = vpop.permute.xlu0 %1093
    %1095 = vrot.lane.b32.xlu0 %v965, 28
    %v1096 = vpop.permute.xlu0 %1095
    %1097 = vrot.lane.b32.xlu0 %v966, 28
    %v1098 = vpop.permute.xlu0 %1097
    %1099 = vrot.lane.b32.xlu0 %v967, 28
    %v1100 = vpop.permute.xlu0 %1099
    %1101 = vrot.lane.b32.xlu0 %v968, 28
    %v1102 = vpop.permute.xlu0 %1101
    %1103 = vrot.lane.b32.xlu0 %v969, 28
    %v1104 = vpop.permute.xlu0 %1103
    %1105 = vrot.lane.b32.xlu0 %v970, 28
    %v1106 = vpop.permute.xlu0 %1105
    %s1107 = scalar_lea.vmem [#allocation5], 52
    %v1108 = vld [vmem:[%s1107] sm:$0x1]
    %v1110 = vperm.slane %v1108, 0
    %v1112 = vmul.f32 %v1092, %v1110
    %v1113 = vmul.f32 %v1094, %v1110
    %v1114 = vmul.f32 %v1096, %v1110
    %v1115 = vmul.f32 %v1098, %v1110
    %v1116 = vmul.f32 %v1100, %v1110
    %v1117 = vmul.f32 %v1102, %v1110
    %v1118 = vmul.f32 %v1104, %v1110
    %v1119 = vmul.f32 %v1106, %v1110
    %v1120 = vadd.f32 %v1083, %v1112
    %v1121 = vadd.f32 %v1084, %v1113
    %v1122 = vadd.f32 %v1085, %v1114
    %v1123 = vadd.f32 %v1086, %v1115
    %v1124 = vadd.f32 %v1087, %v1116
    %v1125 = vadd.f32 %v1088, %v1117
    %v1126 = vadd.f32 %v1089, %v1118
    %v1127 = vadd.f32 %v1090, %v1119
    %1128 = vrot.lane.b32.xlu0 %v963, 24
    %v1129 = vpop.permute.xlu0 %1128
    %1130 = vrot.lane.b32.xlu0 %v964, 24
    %v1131 = vpop.permute.xlu0 %1130
    %1132 = vrot.lane.b32.xlu0 %v965, 24
    %v1133 = vpop.permute.xlu0 %1132
    %1134 = vrot.lane.b32.xlu0 %v966, 24
    %v1135 = vpop.permute.xlu0 %1134
    %1136 = vrot.lane.b32.xlu0 %v967, 24
    %v1137 = vpop.permute.xlu0 %1136
    %1138 = vrot.lane.b32.xlu0 %v968, 24
    %v1139 = vpop.permute.xlu0 %1138
    %1140 = vrot.lane.b32.xlu0 %v969, 24
    %v1141 = vpop.permute.xlu0 %1140
    %1142 = vrot.lane.b32.xlu0 %v970, 24
    %v1143 = vpop.permute.xlu0 %1142
    %s1144 = scalar_lea.vmem [#allocation5], 53
    %v1145 = vld [vmem:[%s1144] sm:$0x1]
    %v1147 = vperm.slane %v1145, 0
    %v1149 = vmul.f32 %v1129, %v1147
    %v1150 = vmul.f32 %v1131, %v1147
    %v1151 = vmul.f32 %v1133, %v1147
    %v1152 = vmul.f32 %v1135, %v1147
    %v1153 = vmul.f32 %v1137, %v1147
    %v1154 = vmul.f32 %v1139, %v1147
    %v1155 = vmul.f32 %v1141, %v1147
    %v1156 = vmul.f32 %v1143, %v1147
    %v1157 = vadd.f32 %v1120, %v1149
    %v1158 = vadd.f32 %v1121, %v1150
    %v1159 = vadd.f32 %v1122, %v1151
    %v1160 = vadd.f32 %v1123, %v1152
    %v1161 = vadd.f32 %v1124, %v1153
    %v1162 = vadd.f32 %v1125, %v1154
    %v1163 = vadd.f32 %v1126, %v1155
    %v1164 = vadd.f32 %v1127, %v1156
    %1165 = vrot.lane.b32.xlu0 %v963, 20
    %v1166 = vpop.permute.xlu0 %1165
    %1167 = vrot.lane.b32.xlu0 %v964, 20
    %v1168 = vpop.permute.xlu0 %1167
    %1169 = vrot.lane.b32.xlu0 %v965, 20
    %v1170 = vpop.permute.xlu0 %1169
    %1171 = vrot.lane.b32.xlu0 %v966, 20
    %v1172 = vpop.permute.xlu0 %1171
    %1173 = vrot.lane.b32.xlu0 %v967, 20
    %v1174 = vpop.permute.xlu0 %1173
    %1175 = vrot.lane.b32.xlu0 %v968, 20
    %v1176 = vpop.permute.xlu0 %1175
    %1177 = vrot.lane.b32.xlu0 %v969, 20
    %v1178 = vpop.permute.xlu0 %1177
    %1179 = vrot.lane.b32.xlu0 %v970, 20
    %v1180 = vpop.permute.xlu0 %1179
    %s1181 = scalar_lea.vmem [#allocation5], 38
    %v1182 = vld [vmem:[%s1181] sm:$0x1]
    %v1184 = vperm.slane %v1182, 0
    %v1186 = vmul.f32 %v1166, %v1184
    %v1187 = vmul.f32 %v1168, %v1184
    %v1188 = vmul.f32 %v1170, %v1184
    %v1189 = vmul.f32 %v1172, %v1184
    %v1190 = vmul.f32 %v1174, %v1184
    %v1191 = vmul.f32 %v1176, %v1184
    %v1192 = vmul.f32 %v1178, %v1184
    %v1193 = vmul.f32 %v1180, %v1184
    %v1195 = vperm.slane %v974, 0
    %v1197 = vadd.f32 %v1195, %v1186
    %v1198 = vadd.f32 %v1195, %v1187
    %v1199 = vadd.f32 %v1195, %v1188
    %v1200 = vadd.f32 %v1195, %v1189
    %v1201 = vadd.f32 %v1195, %v1190
    %v1202 = vadd.f32 %v1195, %v1191
    %v1203 = vadd.f32 %v1195, %v1192
    %v1204 = vadd.f32 %v1195, %v1193
    %s1205 = scalar_lea.vmem [#allocation5], 54
    %v1206 = vld [vmem:[%s1205] sm:$0x1]
    %v1208 = vperm.slane %v1206, 0
    %v1210 = vmul.f32 %v1166, %v1208
    %v1211 = vmul.f32 %v1168, %v1208
    %v1212 = vmul.f32 %v1170, %v1208
    %v1213 = vmul.f32 %v1172, %v1208
    %v1214 = vmul.f32 %v1174, %v1208
    %v1215 = vmul.f32 %v1176, %v1208
    %v1216 = vmul.f32 %v1178, %v1208
    %v1217 = vmul.f32 %v1180, %v1208
    %v1218 = vadd.f32 %v1157, %v1210
    %v1219 = vadd.f32 %v1158, %v1211
    %v1220 = vadd.f32 %v1159, %v1212
    %v1221 = vadd.f32 %v1160, %v1213
    %v1222 = vadd.f32 %v1161, %v1214
    %v1223 = vadd.f32 %v1162, %v1215
    %v1224 = vadd.f32 %v1163, %v1216
    %v1225 = vadd.f32 %v1164, %v1217
    %1226 = vrot.lane.b32.xlu0 %v963, 16
    %v1227 = vpop.permute.xlu0 %1226
    %1228 = vrot.lane.b32.xlu0 %v964, 16
    %v1229 = vpop.permute.xlu0 %1228
    %1230 = vrot.lane.b32.xlu0 %v965, 16
    %v1231 = vpop.permute.xlu0 %1230
    %1232 = vrot.lane.b32.xlu0 %v966, 16
    %v1233 = vpop.permute.xlu0 %1232
    %1234 = vrot.lane.b32.xlu0 %v967, 16
    %v1235 = vpop.permute.xlu0 %1234
    %1236 = vrot.lane.b32.xlu0 %v968, 16
    %v1237 = vpop.permute.xlu0 %1236
    %1238 = vrot.lane.b32.xlu0 %v969, 16
    %v1239 = vpop.permute.xlu0 %1238
    %1240 = vrot.lane.b32.xlu0 %v970, 16
    %v1241 = vpop.permute.xlu0 %1240
    %s1242 = scalar_lea.vmem [#allocation5], 39
    %v1243 = vld [vmem:[%s1242] sm:$0x1]
    %v1245 = vperm.slane %v1243, 0
    %v1247 = vmul.f32 %v1227, %v1245
    %v1248 = vmul.f32 %v1229, %v1245
    %v1249 = vmul.f32 %v1231, %v1245
    %v1250 = vmul.f32 %v1233, %v1245
    %v1251 = vmul.f32 %v1235, %v1245
    %v1252 = vmul.f32 %v1237, %v1245
    %v1253 = vmul.f32 %v1239, %v1245
    %v1254 = vmul.f32 %v1241, %v1245
    %v1255 = vadd.f32 %v1197, %v1247
    %v1256 = vadd.f32 %v1198, %v1248
    %v1257 = vadd.f32 %v1199, %v1249
    %v1258 = vadd.f32 %v1200, %v1250
    %v1259 = vadd.f32 %v1201, %v1251
    %v1260 = vadd.f32 %v1202, %v1252
    %v1261 = vadd.f32 %v1203, %v1253
    %v1262 = vadd.f32 %v1204, %v1254
    %s1263 = scalar_lea.vmem [#allocation5], 55
    %v1264 = vld [vmem:[%s1263] sm:$0x1]
    %v1266 = vperm.slane %v1264, 0
    %v1268 = vmul.f32 %v1227, %v1266
    %v1269 = vmul.f32 %v1229, %v1266
    %v1270 = vmul.f32 %v1231, %v1266
    %v1271 = vmul.f32 %v1233, %v1266
    %v1272 = vmul.f32 %v1235, %v1266
    %v1273 = vmul.f32 %v1237, %v1266
    %v1274 = vmul.f32 %v1239, %v1266
    %v1275 = vmul.f32 %v1241, %v1266
    %v1276 = vadd.f32 %v1218, %v1268
    %v1277 = vadd.f32 %v1219, %v1269
    %v1278 = vadd.f32 %v1220, %v1270
    %v1279 = vadd.f32 %v1221, %v1271
    %v1280 = vadd.f32 %v1222, %v1272
    %v1281 = vadd.f32 %v1223, %v1273
    %v1282 = vadd.f32 %v1224, %v1274
    %v1283 = vadd.f32 %v1225, %v1275
    %1284 = vrot.lane.b32.xlu0 %v963, 12
    %v1285 = vpop.permute.xlu0 %1284
    %1286 = vrot.lane.b32.xlu0 %v964, 12
    %v1287 = vpop.permute.xlu0 %1286
    %1288 = vrot.lane.b32.xlu0 %v965, 12
    %v1289 = vpop.permute.xlu0 %1288
    %1290 = vrot.lane.b32.xlu0 %v966, 12
    %v1291 = vpop.permute.xlu0 %1290
    %1292 = vrot.lane.b32.xlu0 %v967, 12
    %v1293 = vpop.permute.xlu0 %1292
    %1294 = vrot.lane.b32.xlu0 %v968, 12
    %v1295 = vpop.permute.xlu0 %1294
    %1296 = vrot.lane.b32.xlu0 %v969, 12
    %v1297 = vpop.permute.xlu0 %1296
    %1298 = vrot.lane.b32.xlu0 %v970, 12
    %v1299 = vpop.permute.xlu0 %1298
    %s1300 = scalar_lea.vmem [#allocation5], 31
    %v1301 = vld [vmem:[%s1300] sm:$0x1]
    %v1303 = vperm.slane %v1301, 0
    %v1305 = vmul.f32 %v1285, %v1303
    %v1306 = vmul.f32 %v1287, %v1303
    %v1307 = vmul.f32 %v1289, %v1303
    %v1308 = vmul.f32 %v1291, %v1303
    %v1309 = vmul.f32 %v1293, %v1303
    %v1310 = vmul.f32 %v1295, %v1303
    %v1311 = vmul.f32 %v1297, %v1303
    %v1312 = vmul.f32 %v1299, %v1303
    %v1314 = vperm.slane %v972, 0
    %v1316 = vadd.f32 %v1314, %v1305
    %v1317 = vadd.f32 %v1314, %v1306
    %v1318 = vadd.f32 %v1314, %v1307
    %v1319 = vadd.f32 %v1314, %v1308
    %v1320 = vadd.f32 %v1314, %v1309
    %v1321 = vadd.f32 %v1314, %v1310
    %v1322 = vadd.f32 %v1314, %v1311
    %v1323 = vadd.f32 %v1314, %v1312
    %s1324 = scalar_lea.vmem [#allocation5], 40
    %v1325 = vld [vmem:[%s1324] sm:$0x1]
    %v1327 = vperm.slane %v1325, 0
    %v1329 = vmul.f32 %v1285, %v1327
    %v1330 = vmul.f32 %v1287, %v1327
    %v1331 = vmul.f32 %v1289, %v1327
    %v1332 = vmul.f32 %v1291, %v1327
    %v1333 = vmul.f32 %v1293, %v1327
    %v1334 = vmul.f32 %v1295, %v1327
    %v1335 = vmul.f32 %v1297, %v1327
    %v1336 = vmul.f32 %v1299, %v1327
    %v1337 = vadd.f32 %v1255, %v1329
    %v1338 = vadd.f32 %v1256, %v1330
    %v1339 = vadd.f32 %v1257, %v1331
    %v1340 = vadd.f32 %v1258, %v1332
    %v1341 = vadd.f32 %v1259, %v1333
    %v1342 = vadd.f32 %v1260, %v1334
    %v1343 = vadd.f32 %v1261, %v1335
    %v1344 = vadd.f32 %v1262, %v1336
    %s1345 = scalar_lea.vmem [#allocation5], 56
    %v1346 = vld [vmem:[%s1345] sm:$0x1]
    %v1348 = vperm.slane %v1346, 0
    %v1350 = vmul.f32 %v1285, %v1348
    %v1351 = vmul.f32 %v1287, %v1348
    %v1352 = vmul.f32 %v1289, %v1348
    %v1353 = vmul.f32 %v1291, %v1348
    %v1354 = vmul.f32 %v1293, %v1348
    %v1355 = vmul.f32 %v1295, %v1348
    %v1356 = vmul.f32 %v1297, %v1348
    %v1357 = vmul.f32 %v1299, %v1348
    %v1358 = vadd.f32 %v1276, %v1350
    %v1359 = vadd.f32 %v1277, %v1351
    %v1360 = vadd.f32 %v1278, %v1352
    %v1361 = vadd.f32 %v1279, %v1353
    %v1362 = vadd.f32 %v1280, %v1354
    %v1363 = vadd.f32 %v1281, %v1355
    %v1364 = vadd.f32 %v1282, %v1356
    %v1365 = vadd.f32 %v1283, %v1357
    %1366 = vrot.lane.b32.xlu0 %v963, 8
    %v1367 = vpop.permute.xlu0 %1366
    %1368 = vrot.lane.b32.xlu0 %v964, 8
    %v1369 = vpop.permute.xlu0 %1368
    %1370 = vrot.lane.b32.xlu0 %v965, 8
    %v1371 = vpop.permute.xlu0 %1370
    %1372 = vrot.lane.b32.xlu0 %v966, 8
    %v1373 = vpop.permute.xlu0 %1372
    %1374 = vrot.lane.b32.xlu0 %v967, 8
    %v1375 = vpop.permute.xlu0 %1374
    %1376 = vrot.lane.b32.xlu0 %v968, 8
    %v1377 = vpop.permute.xlu0 %1376
    %1378 = vrot.lane.b32.xlu0 %v969, 8
    %v1379 = vpop.permute.xlu0 %1378
    %1380 = vrot.lane.b32.xlu0 %v970, 8
    %v1381 = vpop.permute.xlu0 %1380
    %s1382 = scalar_lea.vmem [#allocation5], 32
    %v1383 = vld [vmem:[%s1382] sm:$0x1]
    %v1385 = vperm.slane %v1383, 0
    %v1387 = vmul.f32 %v1367, %v1385
    %v1388 = vmul.f32 %v1369, %v1385
    %v1389 = vmul.f32 %v1371, %v1385
    %v1390 = vmul.f32 %v1373, %v1385
    %v1391 = vmul.f32 %v1375, %v1385
    %v1392 = vmul.f32 %v1377, %v1385
    %v1393 = vmul.f32 %v1379, %v1385
    %v1394 = vmul.f32 %v1381, %v1385
    %v1395 = vadd.f32 %v1316, %v1387
    %v1396 = vadd.f32 %v1317, %v1388
    %v1397 = vadd.f32 %v1318, %v1389
    %v1398 = vadd.f32 %v1319, %v1390
    %v1399 = vadd.f32 %v1320, %v1391
    %v1400 = vadd.f32 %v1321, %v1392
    %v1401 = vadd.f32 %v1322, %v1393
    %v1402 = vadd.f32 %v1323, %v1394
    %s1403 = scalar_lea.vmem [#allocation5], 41
    %v1404 = vld [vmem:[%s1403] sm:$0x1]
    %v1406 = vperm.slane %v1404, 0
    %v1408 = vmul.f32 %v1367, %v1406
    %v1409 = vmul.f32 %v1369, %v1406
    %v1410 = vmul.f32 %v1371, %v1406
    %v1411 = vmul.f32 %v1373, %v1406
    %v1412 = vmul.f32 %v1375, %v1406
    %v1413 = vmul.f32 %v1377, %v1406
    %v1414 = vmul.f32 %v1379, %v1406
    %v1415 = vmul.f32 %v1381, %v1406
    %v1416 = vadd.f32 %v1337, %v1408
    %v1417 = vadd.f32 %v1338, %v1409
    %v1418 = vadd.f32 %v1339, %v1410
    %v1419 = vadd.f32 %v1340, %v1411
    %v1420 = vadd.f32 %v1341, %v1412
    %v1421 = vadd.f32 %v1342, %v1413
    %v1422 = vadd.f32 %v1343, %v1414
    %v1423 = vadd.f32 %v1344, %v1415
    %s1424 = scalar_lea.vmem [#allocation5], 57
    %v1425 = vld [vmem:[%s1424] sm:$0x1]
    %v1427 = vperm.slane %v1425, 0
    %v1429 = vmul.f32 %v1367, %v1427
    %v1430 = vmul.f32 %v1369, %v1427
    %v1431 = vmul.f32 %v1371, %v1427
    %v1432 = vmul.f32 %v1373, %v1427
    %v1433 = vmul.f32 %v1375, %v1427
    %v1434 = vmul.f32 %v1377, %v1427
    %v1435 = vmul.f32 %v1379, %v1427
    %v1436 = vmul.f32 %v1381, %v1427
    %v1437 = vadd.f32 %v1358, %v1429
    %v1438 = vadd.f32 %v1359, %v1430
    %v1439 = vadd.f32 %v1360, %v1431
    %v1440 = vadd.f32 %v1361, %v1432
    %v1441 = vadd.f32 %v1362, %v1433
    %v1442 = vadd.f32 %v1363, %v1434
    %v1443 = vadd.f32 %v1364, %v1435
    %v1444 = vadd.f32 %v1365, %v1436
    %1445 = vrot.lane.b32.xlu0 %v963, 4
    %v1446 = vpop.permute.xlu0 %1445
    %1447 = vrot.lane.b32.xlu0 %v964, 4
    %v1448 = vpop.permute.xlu0 %1447
    %1449 = vrot.lane.b32.xlu0 %v965, 4
    %v1450 = vpop.permute.xlu0 %1449
    %1451 = vrot.lane.b32.xlu0 %v966, 4
    %v1452 = vpop.permute.xlu0 %1451
    %1453 = vrot.lane.b32.xlu0 %v967, 4
    %v1454 = vpop.permute.xlu0 %1453
    %1455 = vrot.lane.b32.xlu0 %v968, 4
    %v1456 = vpop.permute.xlu0 %1455
    %1457 = vrot.lane.b32.xlu0 %v969, 4
    %v1458 = vpop.permute.xlu0 %1457
    %1459 = vrot.lane.b32.xlu0 %v970, 4
    %v1460 = vpop.permute.xlu0 %1459
    %s1461 = scalar_lea.vmem [#allocation5], 33
    %v1462 = vld [vmem:[%s1461] sm:$0x1]
    %v1464 = vperm.slane %v1462, 0
    %v1466 = vmul.f32 %v1446, %v1464
    %v1467 = vmul.f32 %v1448, %v1464
    %v1468 = vmul.f32 %v1450, %v1464
    %v1469 = vmul.f32 %v1452, %v1464
    %v1470 = vmul.f32 %v1454, %v1464
    %v1471 = vmul.f32 %v1456, %v1464
    %v1472 = vmul.f32 %v1458, %v1464
    %v1473 = vmul.f32 %v1460, %v1464
    %v1474 = vadd.f32 %v1395, %v1466
    %v1475 = vadd.f32 %v1396, %v1467
    %v1476 = vadd.f32 %v1397, %v1468
    %v1477 = vadd.f32 %v1398, %v1469
    %v1478 = vadd.f32 %v1399, %v1470
    %v1479 = vadd.f32 %v1400, %v1471
    %v1480 = vadd.f32 %v1401, %v1472
    %v1481 = vadd.f32 %v1402, %v1473
    %s1482 = scalar_lea.vmem [#allocation5], 42
    %v1483 = vld [vmem:[%s1482] sm:$0x1]
    %v1485 = vperm.slane %v1483, 0
    %v1487 = vmul.f32 %v1446, %v1485
    %v1488 = vmul.f32 %v1448, %v1485
    %v1489 = vmul.f32 %v1450, %v1485
    %v1490 = vmul.f32 %v1452, %v1485
    %v1491 = vmul.f32 %v1454, %v1485
    %v1492 = vmul.f32 %v1456, %v1485
    %v1493 = vmul.f32 %v1458, %v1485
    %v1494 = vmul.f32 %v1460, %v1485
    %v1495 = vadd.f32 %v1416, %v1487
    %v1496 = vadd.f32 %v1417, %v1488
    %v1497 = vadd.f32 %v1418, %v1489
    %v1498 = vadd.f32 %v1419, %v1490
    %v1499 = vadd.f32 %v1420, %v1491
    %v1500 = vadd.f32 %v1421, %v1492
    %v1501 = vadd.f32 %v1422, %v1493
    %v1502 = vadd.f32 %v1423, %v1494
    %s1503 = scalar_lea.vmem [#allocation5], 58
    %v1504 = vld [vmem:[%s1503] sm:$0x1]
    %v1506 = vperm.slane %v1504, 0
    %v1508 = vmul.f32 %v1446, %v1506
    %v1509 = vmul.f32 %v1448, %v1506
    %v1510 = vmul.f32 %v1450, %v1506
    %v1511 = vmul.f32 %v1452, %v1506
    %v1512 = vmul.f32 %v1454, %v1506
    %v1513 = vmul.f32 %v1456, %v1506
    %v1514 = vmul.f32 %v1458, %v1506
    %v1515 = vmul.f32 %v1460, %v1506
    %v1516 = vadd.f32 %v1437, %v1508
    %v1517 = vadd.f32 %v1438, %v1509
    %v1518 = vadd.f32 %v1439, %v1510
    %v1519 = vadd.f32 %v1440, %v1511
    %v1520 = vadd.f32 %v1441, %v1512
    %v1521 = vadd.f32 %v1442, %v1513
    %v1522 = vadd.f32 %v1443, %v1514
    %v1523 = vadd.f32 %v1444, %v1515
    %s1524 = scalar_lea.vmem [#allocation5], 34
    %v1525 = vld [vmem:[%s1524] sm:$0x1]
    %v1527 = vperm.slane %v1525, 0
    %v1529 = vmul.f32 %v963, %v1527
    %v1530 = vmul.f32 %v964, %v1527
    %v1531 = vmul.f32 %v965, %v1527
    %v1532 = vmul.f32 %v966, %v1527
    %v1533 = vmul.f32 %v967, %v1527
    %v1534 = vmul.f32 %v968, %v1527
    %v1535 = vmul.f32 %v969, %v1527
    %v1536 = vmul.f32 %v970, %v1527
    %v1537 = vadd.f32 %v1474, %v1529
    %v1538 = vadd.f32 %v1475, %v1530
    %v1539 = vadd.f32 %v1476, %v1531
    %v1540 = vadd.f32 %v1477, %v1532
    %v1541 = vadd.f32 %v1478, %v1533
    %v1542 = vadd.f32 %v1479, %v1534
    %v1543 = vadd.f32 %v1480, %v1535
    %v1544 = vadd.f32 %v1481, %v1536
    %s1545 = scalar_lea.vmem [#allocation5], 43
    %v1546 = vld [vmem:[%s1545] sm:$0x1]
    %v1548 = vperm.slane %v1546, 0
    %v1550 = vmul.f32 %v963, %v1548
    %v1551 = vmul.f32 %v964, %v1548
    %v1552 = vmul.f32 %v965, %v1548
    %v1553 = vmul.f32 %v966, %v1548
    %v1554 = vmul.f32 %v967, %v1548
    %v1555 = vmul.f32 %v968, %v1548
    %v1556 = vmul.f32 %v969, %v1548
    %v1557 = vmul.f32 %v970, %v1548
    %v1558 = vadd.f32 %v1495, %v1550
    %v1559 = vadd.f32 %v1496, %v1551
    %v1560 = vadd.f32 %v1497, %v1552
    %v1561 = vadd.f32 %v1498, %v1553
    %v1562 = vadd.f32 %v1499, %v1554
    %v1563 = vadd.f32 %v1500, %v1555
    %v1564 = vadd.f32 %v1501, %v1556
    %v1565 = vadd.f32 %v1502, %v1557
    %s1566 = scalar_lea.vmem [#allocation5], 59
    %v1567 = vld [vmem:[%s1566] sm:$0x1]
    %v1569 = vperm.slane %v1567, 0
    %v1571 = vmul.f32 %v963, %v1569
    %v1572 = vmul.f32 %v964, %v1569
    %v1573 = vmul.f32 %v965, %v1569
    %v1574 = vmul.f32 %v966, %v1569
    %v1575 = vmul.f32 %v967, %v1569
    %v1576 = vmul.f32 %v968, %v1569
    %v1577 = vmul.f32 %v969, %v1569
    %v1578 = vmul.f32 %v970, %v1569
    %v1579 = vadd.f32 %v1516, %v1571
    %v1580 = vadd.f32 %v1517, %v1572
    %v1581 = vadd.f32 %v1518, %v1573
    %v1582 = vadd.f32 %v1519, %v1574
    %v1583 = vadd.f32 %v1520, %v1575
    %v1584 = vadd.f32 %v1521, %v1576
    %v1585 = vadd.f32 %v1522, %v1577
    %v1586 = vadd.f32 %v1523, %v1578
    %1587 = vrot.lane.b32.xlu0 %v963, 124
    %v1588 = vpop.permute.xlu0 %1587
    %1589 = vrot.lane.b32.xlu0 %v964, 124
    %v1590 = vpop.permute.xlu0 %1589
    %1591 = vrot.lane.b32.xlu0 %v965, 124
    %v1592 = vpop.permute.xlu0 %1591
    %1593 = vrot.lane.b32.xlu0 %v966, 124
    %v1594 = vpop.permute.xlu0 %1593
    %1595 = vrot.lane.b32.xlu0 %v967, 124
    %v1596 = vpop.permute.xlu0 %1595
    %1597 = vrot.lane.b32.xlu0 %v968, 124
    %v1598 = vpop.permute.xlu0 %1597
    %1599 = vrot.lane.b32.xlu0 %v969, 124
    %v1600 = vpop.permute.xlu0 %1599
    %1601 = vrot.lane.b32.xlu0 %v970, 124
    %v1602 = vpop.permute.xlu0 %1601
    %s1603 = scalar_lea.vmem [#allocation5], 35
    %v1604 = vld [vmem:[%s1603] sm:$0x1]
    %v1606 = vperm.slane %v1604, 0
    %v1608 = vmul.f32 %v1588, %v1606
    %v1609 = vmul.f32 %v1590, %v1606
    %v1610 = vmul.f32 %v1592, %v1606
    %v1611 = vmul.f32 %v1594, %v1606
    %v1612 = vmul.f32 %v1596, %v1606
    %v1613 = vmul.f32 %v1598, %v1606
    %v1614 = vmul.f32 %v1600, %v1606
    %v1615 = vmul.f32 %v1602, %v1606
    %v1616 = vadd.f32 %v1537, %v1608
    %v1617 = vadd.f32 %v1538, %v1609
    %v1618 = vadd.f32 %v1539, %v1610
    %v1619 = vadd.f32 %v1540, %v1611
    %v1620 = vadd.f32 %v1541, %v1612
    %v1621 = vadd.f32 %v1542, %v1613
    %v1622 = vadd.f32 %v1543, %v1614
    %v1623 = vadd.f32 %v1544, %v1615
    %s1624 = scalar_lea.vmem [#allocation5], 44
    %v1625 = vld [vmem:[%s1624] sm:$0x1]
    %v1627 = vperm.slane %v1625, 0
    %v1629 = vmul.f32 %v1588, %v1627
    %v1630 = vmul.f32 %v1590, %v1627
    %v1631 = vmul.f32 %v1592, %v1627
    %v1632 = vmul.f32 %v1594, %v1627
    %v1633 = vmul.f32 %v1596, %v1627
    %v1634 = vmul.f32 %v1598, %v1627
    %v1635 = vmul.f32 %v1600, %v1627
    %v1636 = vmul.f32 %v1602, %v1627
    %v1637 = vadd.f32 %v1558, %v1629
    %v1638 = vadd.f32 %v1559, %v1630
    %v1639 = vadd.f32 %v1560, %v1631
    %v1640 = vadd.f32 %v1561, %v1632
    %v1641 = vadd.f32 %v1562, %v1633
    %v1642 = vadd.f32 %v1563, %v1634
    %v1643 = vadd.f32 %v1564, %v1635
    %v1644 = vadd.f32 %v1565, %v1636
    %s1645 = scalar_lea.vmem [#allocation5], 60
    %v1646 = vld [vmem:[%s1645] sm:$0x1]
    %v1648 = vperm.slane %v1646, 0
    %v1650 = vmul.f32 %v1588, %v1648
    %v1651 = vmul.f32 %v1590, %v1648
    %v1652 = vmul.f32 %v1592, %v1648
    %v1653 = vmul.f32 %v1594, %v1648
    %v1654 = vmul.f32 %v1596, %v1648
    %v1655 = vmul.f32 %v1598, %v1648
    %v1656 = vmul.f32 %v1600, %v1648
    %v1657 = vmul.f32 %v1602, %v1648
    %v1658 = vadd.f32 %v1579, %v1650
    %v1659 = vadd.f32 %v1580, %v1651
    %v1660 = vadd.f32 %v1581, %v1652
    %v1661 = vadd.f32 %v1582, %v1653
    %v1662 = vadd.f32 %v1583, %v1654
    %v1663 = vadd.f32 %v1584, %v1655
    %v1664 = vadd.f32 %v1585, %v1656
    %v1665 = vadd.f32 %v1586, %v1657
    %1666 = vrot.lane.b32.xlu0 %v963, 120
    %v1667 = vpop.permute.xlu0 %1666
    %1668 = vrot.lane.b32.xlu0 %v964, 120
    %v1669 = vpop.permute.xlu0 %1668
    %1670 = vrot.lane.b32.xlu0 %v965, 120
    %v1671 = vpop.permute.xlu0 %1670
    %1672 = vrot.lane.b32.xlu0 %v966, 120
    %v1673 = vpop.permute.xlu0 %1672
    %1674 = vrot.lane.b32.xlu0 %v967, 120
    %v1675 = vpop.permute.xlu0 %1674
    %1676 = vrot.lane.b32.xlu0 %v968, 120
    %v1677 = vpop.permute.xlu0 %1676
    %1678 = vrot.lane.b32.xlu0 %v969, 120
    %v1679 = vpop.permute.xlu0 %1678
    %1680 = vrot.lane.b32.xlu0 %v970, 120
    %v1681 = vpop.permute.xlu0 %1680
    %s1682 = scalar_lea.vmem [#allocation5], 36
    %v1683 = vld [vmem:[%s1682] sm:$0x1]
    %v1685 = vperm.slane %v1683, 0
    %v1687 = vmul.f32 %v1667, %v1685
    %v1688 = vmul.f32 %v1669, %v1685
    %v1689 = vmul.f32 %v1671, %v1685
    %v1690 = vmul.f32 %v1673, %v1685
    %v1691 = vmul.f32 %v1675, %v1685
    %v1692 = vmul.f32 %v1677, %v1685
    %v1693 = vmul.f32 %v1679, %v1685
    %v1694 = vmul.f32 %v1681, %v1685
    %v1695 = vadd.f32 %v1616, %v1687
    %v1696 = vadd.f32 %v1617, %v1688
    %v1697 = vadd.f32 %v1618, %v1689
    %v1698 = vadd.f32 %v1619, %v1690
    %v1699 = vadd.f32 %v1620, %v1691
    %v1700 = vadd.f32 %v1621, %v1692
    %v1701 = vadd.f32 %v1622, %v1693
    %v1702 = vadd.f32 %v1623, %v1694
    %s1703 = scalar_lea.vmem [#allocation5], 45
    %v1704 = vld [vmem:[%s1703] sm:$0x1]
    %v1706 = vperm.slane %v1704, 0
    %v1708 = vmul.f32 %v1667, %v1706
    %v1709 = vmul.f32 %v1669, %v1706
    %v1710 = vmul.f32 %v1671, %v1706
    %v1711 = vmul.f32 %v1673, %v1706
    %v1712 = vmul.f32 %v1675, %v1706
    %v1713 = vmul.f32 %v1677, %v1706
    %v1714 = vmul.f32 %v1679, %v1706
    %v1715 = vmul.f32 %v1681, %v1706
    %v1716 = vadd.f32 %v1637, %v1708
    %v1717 = vadd.f32 %v1638, %v1709
    %v1718 = vadd.f32 %v1639, %v1710
    %v1719 = vadd.f32 %v1640, %v1711
    %v1720 = vadd.f32 %v1641, %v1712
    %v1721 = vadd.f32 %v1642, %v1713
    %v1722 = vadd.f32 %v1643, %v1714
    %v1723 = vadd.f32 %v1644, %v1715
    %s1724 = scalar_lea.vmem [#allocation5], 61
    %v1725 = vld [vmem:[%s1724] sm:$0x1]
    %v1727 = vperm.slane %v1725, 0
    %v1729 = vmul.f32 %v1667, %v1727
    %v1730 = vmul.f32 %v1669, %v1727
    %v1731 = vmul.f32 %v1671, %v1727
    %v1732 = vmul.f32 %v1673, %v1727
    %v1733 = vmul.f32 %v1675, %v1727
    %v1734 = vmul.f32 %v1677, %v1727
    %v1735 = vmul.f32 %v1679, %v1727
    %v1736 = vmul.f32 %v1681, %v1727
    %v1737 = vadd.f32 %v1658, %v1729
    %v1738 = vadd.f32 %v1659, %v1730
    %v1739 = vadd.f32 %v1660, %v1731
    %v1740 = vadd.f32 %v1661, %v1732
    %v1741 = vadd.f32 %v1662, %v1733
    %v1742 = vadd.f32 %v1663, %v1734
    %v1743 = vadd.f32 %v1664, %v1735
    %v1744 = vadd.f32 %v1665, %v1736
    %1745 = vrot.lane.b32.xlu0 %v963, 116
    %v1746 = vpop.permute.xlu0 %1745
    %1747 = vrot.lane.b32.xlu0 %v964, 116
    %v1748 = vpop.permute.xlu0 %1747
    %1749 = vrot.lane.b32.xlu0 %v965, 116
    %v1750 = vpop.permute.xlu0 %1749
    %1751 = vrot.lane.b32.xlu0 %v966, 116
    %v1752 = vpop.permute.xlu0 %1751
    %1753 = vrot.lane.b32.xlu0 %v967, 116
    %v1754 = vpop.permute.xlu0 %1753
    %1755 = vrot.lane.b32.xlu0 %v968, 116
    %v1756 = vpop.permute.xlu0 %1755
    %1757 = vrot.lane.b32.xlu0 %v969, 116
    %v1758 = vpop.permute.xlu0 %1757
    %1759 = vrot.lane.b32.xlu0 %v970, 116
    %v1760 = vpop.permute.xlu0 %1759
    %s1761 = scalar_lea.vmem [#allocation5], 37
    %v1762 = vld [vmem:[%s1761] sm:$0x1]
    %v1764 = vperm.slane %v1762, 0
    %v1766 = vmul.f32 %v1746, %v1764
    %v1767 = vmul.f32 %v1748, %v1764
    %v1768 = vmul.f32 %v1750, %v1764
    %v1769 = vmul.f32 %v1752, %v1764
    %v1770 = vmul.f32 %v1754, %v1764
    %v1771 = vmul.f32 %v1756, %v1764
    %v1772 = vmul.f32 %v1758, %v1764
    %v1773 = vmul.f32 %v1760, %v1764
    %v1774 = vadd.f32 %v1695, %v1766
    %v1775 = vadd.f32 %v1696, %v1767
    %v1776 = vadd.f32 %v1697, %v1768
    %v1777 = vadd.f32 %v1698, %v1769
    %v1778 = vadd.f32 %v1699, %v1770
    %v1779 = vadd.f32 %v1700, %v1771
    %v1780 = vadd.f32 %v1701, %v1772
    %v1781 = vadd.f32 %v1702, %v1773
    %s1782 = scalar_lea.vmem [#allocation5], 46
    %v1783 = vld [vmem:[%s1782] sm:$0x1]
    %v1785 = vperm.slane %v1783, 0
    %v1787 = vmul.f32 %v1746, %v1785
    %v1788 = vmul.f32 %v1748, %v1785
    %v1789 = vmul.f32 %v1750, %v1785
    %v1790 = vmul.f32 %v1752, %v1785
    %v1791 = vmul.f32 %v1754, %v1785
    %v1792 = vmul.f32 %v1756, %v1785
    %v1793 = vmul.f32 %v1758, %v1785
    %v1794 = vmul.f32 %v1760, %v1785
    %v1795 = vadd.f32 %v1716, %v1787
    %v1796 = vadd.f32 %v1717, %v1788
    %v1797 = vadd.f32 %v1718, %v1789
    %v1798 = vadd.f32 %v1719, %v1790
    %v1799 = vadd.f32 %v1720, %v1791
    %v1800 = vadd.f32 %v1721, %v1792
    %v1801 = vadd.f32 %v1722, %v1793
    %v1802 = vadd.f32 %v1723, %v1794
    %s1803 = scalar_lea.vmem [#allocation5], 62
    %v1804 = vld [vmem:[%s1803] sm:$0x1]
    %v1806 = vperm.slane %v1804, 0
    %v1808 = vmul.f32 %v1746, %v1806
    %v1809 = vmul.f32 %v1748, %v1806
    %v1810 = vmul.f32 %v1750, %v1806
    %v1811 = vmul.f32 %v1752, %v1806
    %v1812 = vmul.f32 %v1754, %v1806
    %v1813 = vmul.f32 %v1756, %v1806
    %v1814 = vmul.f32 %v1758, %v1806
    %v1815 = vmul.f32 %v1760, %v1806
    %v1816 = vadd.f32 %v1737, %v1808
    %v1817 = vadd.f32 %v1738, %v1809
    %v1818 = vadd.f32 %v1739, %v1810
    %v1819 = vadd.f32 %v1740, %v1811
    %v1820 = vadd.f32 %v1741, %v1812
    %v1821 = vadd.f32 %v1742, %v1813
    %v1822 = vadd.f32 %v1743, %v1814
    %v1823 = vadd.f32 %v1744, %v1815
    %1824 = vrot.lane.b32.xlu0 %v963, 112
    %v1825 = vpop.permute.xlu0 %1824
    %1826 = vrot.lane.b32.xlu0 %v964, 112
    %v1827 = vpop.permute.xlu0 %1826
    %1828 = vrot.lane.b32.xlu0 %v965, 112
    %v1829 = vpop.permute.xlu0 %1828
    %1830 = vrot.lane.b32.xlu0 %v966, 112
    %v1831 = vpop.permute.xlu0 %1830
    %1832 = vrot.lane.b32.xlu0 %v967, 112
    %v1833 = vpop.permute.xlu0 %1832
    %1834 = vrot.lane.b32.xlu0 %v968, 112
    %v1835 = vpop.permute.xlu0 %1834
    %1836 = vrot.lane.b32.xlu0 %v969, 112
    %v1837 = vpop.permute.xlu0 %1836
    %1838 = vrot.lane.b32.xlu0 %v970, 112
    %v1839 = vpop.permute.xlu0 %1838
    %s1840 = scalar_lea.vmem [#allocation5], 47
    %v1841 = vld [vmem:[%s1840] sm:$0x1]
    %v1843 = vperm.slane %v1841, 0
    %v1845 = vmul.f32 %v1825, %v1843
    %v1846 = vmul.f32 %v1827, %v1843
    %v1847 = vmul.f32 %v1829, %v1843
    %v1848 = vmul.f32 %v1831, %v1843
    %v1849 = vmul.f32 %v1833, %v1843
    %v1850 = vmul.f32 %v1835, %v1843
    %v1851 = vmul.f32 %v1837, %v1843
    %v1852 = vmul.f32 %v1839, %v1843
    %v1853 = vadd.f32 %v1795, %v1845
    %v1854 = vadd.f32 %v1796, %v1846
    %v1855 = vadd.f32 %v1797, %v1847
    %v1856 = vadd.f32 %v1798, %v1848
    %v1857 = vadd.f32 %v1799, %v1849
    %v1858 = vadd.f32 %v1800, %v1850
    %v1859 = vadd.f32 %v1801, %v1851
    %v1860 = vadd.f32 %v1802, %v1852
    %s1861 = scalar_lea.vmem [#allocation5], 63
    %v1862 = vld [vmem:[%s1861] sm:$0x1]
    %v1864 = vperm.slane %v1862, 0
    %v1866 = vmul.f32 %v1825, %v1864
    %v1867 = vmul.f32 %v1827, %v1864
    %v1868 = vmul.f32 %v1829, %v1864
    %v1869 = vmul.f32 %v1831, %v1864
    %v1870 = vmul.f32 %v1833, %v1864
    %v1871 = vmul.f32 %v1835, %v1864
    %v1872 = vmul.f32 %v1837, %v1864
    %v1873 = vmul.f32 %v1839, %v1864
    %v1874 = vadd.f32 %v1816, %v1866
    %v1875 = vadd.f32 %v1817, %v1867
    %v1876 = vadd.f32 %v1818, %v1868
    %v1877 = vadd.f32 %v1819, %v1869
    %v1878 = vadd.f32 %v1820, %v1870
    %v1879 = vadd.f32 %v1821, %v1871
    %v1880 = vadd.f32 %v1822, %v1872
    %v1881 = vadd.f32 %v1823, %v1873
    %1882 = vrot.lane.b32.xlu0 %v963, 108
    %v1883 = vpop.permute.xlu0 %1882
    %1884 = vrot.lane.b32.xlu0 %v964, 108
    %v1885 = vpop.permute.xlu0 %1884
    %1886 = vrot.lane.b32.xlu0 %v965, 108
    %v1887 = vpop.permute.xlu0 %1886
    %1888 = vrot.lane.b32.xlu0 %v966, 108
    %v1889 = vpop.permute.xlu0 %1888
    %1890 = vrot.lane.b32.xlu0 %v967, 108
    %v1891 = vpop.permute.xlu0 %1890
    %1892 = vrot.lane.b32.xlu0 %v968, 108
    %v1893 = vpop.permute.xlu0 %1892
    %1894 = vrot.lane.b32.xlu0 %v969, 108
    %v1895 = vpop.permute.xlu0 %1894
    %1896 = vrot.lane.b32.xlu0 %v970, 108
    %v1897 = vpop.permute.xlu0 %1896
    %s1898 = scalar_lea.vmem [#allocation5], 48
    %v1899 = vld [vmem:[%s1898] sm:$0x1]
    %v1901 = vperm.slane %v1899, 0
    %v1903 = vmul.f32 %v1883, %v1901
    %v1904 = vmul.f32 %v1885, %v1901
    %v1905 = vmul.f32 %v1887, %v1901
    %v1906 = vmul.f32 %v1889, %v1901
    %v1907 = vmul.f32 %v1891, %v1901
    %v1908 = vmul.f32 %v1893, %v1901
    %v1909 = vmul.f32 %v1895, %v1901
    %v1910 = vmul.f32 %v1897, %v1901
    %v1911 = vadd.f32 %v1853, %v1903
    %v1912 = vadd.f32 %v1854, %v1904
    %v1913 = vadd.f32 %v1855, %v1905
    %v1914 = vadd.f32 %v1856, %v1906
    %v1915 = vadd.f32 %v1857, %v1907
    %v1916 = vadd.f32 %v1858, %v1908
    %v1917 = vadd.f32 %v1859, %v1909
    %v1918 = vadd.f32 %v1860, %v1910
    %s1919 = scalar_lea.vmem [#allocation5], 64
    %v1920 = vld [vmem:[%s1919] sm:$0x1]
    %v1922 = vperm.slane %v1920, 0
    %v1924 = vmul.f32 %v1883, %v1922
    %v1925 = vmul.f32 %v1885, %v1922
    %v1926 = vmul.f32 %v1887, %v1922
    %v1927 = vmul.f32 %v1889, %v1922
    %v1928 = vmul.f32 %v1891, %v1922
    %v1929 = vmul.f32 %v1893, %v1922
    %v1930 = vmul.f32 %v1895, %v1922
    %v1931 = vmul.f32 %v1897, %v1922
    %v1932 = vadd.f32 %v1874, %v1924
    %v1933 = vadd.f32 %v1875, %v1925
    %v1934 = vadd.f32 %v1876, %v1926
    %v1935 = vadd.f32 %v1877, %v1927
    %v1936 = vadd.f32 %v1878, %v1928
    %v1937 = vadd.f32 %v1879, %v1929
    %v1938 = vadd.f32 %v1880, %v1930
    %v1939 = vadd.f32 %v1881, %v1931
    %1940 = vrot.lane.b32.xlu0 %v963, 104
    %v1941 = vpop.permute.xlu0 %1940
    %1942 = vrot.lane.b32.xlu0 %v964, 104
    %v1943 = vpop.permute.xlu0 %1942
    %1944 = vrot.lane.b32.xlu0 %v965, 104
    %v1945 = vpop.permute.xlu0 %1944
    %1946 = vrot.lane.b32.xlu0 %v966, 104
    %v1947 = vpop.permute.xlu0 %1946
    %1948 = vrot.lane.b32.xlu0 %v967, 104
    %v1949 = vpop.permute.xlu0 %1948
    %1950 = vrot.lane.b32.xlu0 %v968, 104
    %v1951 = vpop.permute.xlu0 %1950
    %1952 = vrot.lane.b32.xlu0 %v969, 104
    %v1953 = vpop.permute.xlu0 %1952
    %1954 = vrot.lane.b32.xlu0 %v970, 104
    %v1955 = vpop.permute.xlu0 %1954
    %s1956 = scalar_lea.vmem [#allocation5], 65
    %v1957 = vld [vmem:[%s1956] sm:$0x1]
    %v1959 = vperm.slane %v1957, 0
    %v1961 = vmul.f32 %v1941, %v1959
    %v1962 = vmul.f32 %v1943, %v1959
    %v1963 = vmul.f32 %v1945, %v1959
    %v1964 = vmul.f32 %v1947, %v1959
    %v1965 = vmul.f32 %v1949, %v1959
    %v1966 = vmul.f32 %v1951, %v1959
    %v1967 = vmul.f32 %v1953, %v1959
    %v1968 = vmul.f32 %v1955, %v1959
    %v1969 = vadd.f32 %v1932, %v1961
    %v1970 = vadd.f32 %v1933, %v1962
    %v1971 = vadd.f32 %v1934, %v1963
    %v1972 = vadd.f32 %v1935, %v1964
    %v1973 = vadd.f32 %v1936, %v1965
    %v1974 = vadd.f32 %v1937, %v1966
    %v1975 = vadd.f32 %v1938, %v1967
    %v1976 = vadd.f32 %v1939, %v1968
    %1977 = vrot.lane.b32.xlu0 %v963, 100
    %v1978 = vpop.permute.xlu0 %1977
    %1979 = vrot.lane.b32.xlu0 %v964, 100
    %v1980 = vpop.permute.xlu0 %1979
    %1981 = vrot.lane.b32.xlu0 %v965, 100
    %v1982 = vpop.permute.xlu0 %1981
    %1983 = vrot.lane.b32.xlu0 %v966, 100
    %v1984 = vpop.permute.xlu0 %1983
    %1985 = vrot.lane.b32.xlu0 %v967, 100
    %v1986 = vpop.permute.xlu0 %1985
    %1987 = vrot.lane.b32.xlu0 %v968, 100
    %v1988 = vpop.permute.xlu0 %1987
    %1989 = vrot.lane.b32.xlu0 %v969, 100
    %v1990 = vpop.permute.xlu0 %1989
    %1991 = vrot.lane.b32.xlu0 %v970, 100
    %v1992 = vpop.permute.xlu0 %1991
    %s1993 = scalar_lea.vmem [#allocation5], 66
    %v1994 = vld [vmem:[%s1993] sm:$0x1]
    %v1996 = vperm.slane %v1994, 0
    %v1998 = vmul.f32 %v1978, %v1996
    %v1999 = vmul.f32 %v1980, %v1996
    %v2000 = vmul.f32 %v1982, %v1996
    %v2001 = vmul.f32 %v1984, %v1996
    %v2002 = vmul.f32 %v1986, %v1996
    %v2003 = vmul.f32 %v1988, %v1996
    %v2004 = vmul.f32 %v1990, %v1996
    %v2005 = vmul.f32 %v1992, %v1996
    %v2006 = vadd.f32 %v1969, %v1998
    %v2007 = vadd.f32 %v1970, %v1999
    %v2008 = vadd.f32 %v1971, %v2000
    %v2009 = vadd.f32 %v1972, %v2001
    %v2010 = vadd.f32 %v1973, %v2002
    %v2011 = vadd.f32 %v1974, %v2003
    %v2012 = vadd.f32 %v1975, %v2004
    %v2013 = vadd.f32 %v1976, %v2005
    %2014 = vrot.lane.b32.xlu0 %v963, 96
    %v2015 = vpop.permute.xlu0 %2014
    %2016 = vrot.lane.b32.xlu0 %v964, 96
    %v2017 = vpop.permute.xlu0 %2016
    %2018 = vrot.lane.b32.xlu0 %v965, 96
    %v2019 = vpop.permute.xlu0 %2018
    %2020 = vrot.lane.b32.xlu0 %v966, 96
    %v2021 = vpop.permute.xlu0 %2020
    %2022 = vrot.lane.b32.xlu0 %v967, 96
    %v2023 = vpop.permute.xlu0 %2022
    %2024 = vrot.lane.b32.xlu0 %v968, 96
    %v2025 = vpop.permute.xlu0 %2024
    %2026 = vrot.lane.b32.xlu0 %v969, 96
    %v2027 = vpop.permute.xlu0 %2026
    %2028 = vrot.lane.b32.xlu0 %v970, 96
    %v2029 = vpop.permute.xlu0 %2028
    %s2030 = scalar_lea.vmem [#allocation5], 67
    %v2031 = vld [vmem:[%s2030] sm:$0x1]
    %v2033 = vperm.slane %v2031, 0
    %v2035 = vmul.f32 %v2015, %v2033
    %v2036 = vmul.f32 %v2017, %v2033
    %v2037 = vmul.f32 %v2019, %v2033
    %v2038 = vmul.f32 %v2021, %v2033
    %v2039 = vmul.f32 %v2023, %v2033
    %v2040 = vmul.f32 %v2025, %v2033
    %v2041 = vmul.f32 %v2027, %v2033
    %v2042 = vmul.f32 %v2029, %v2033
    %v2043 = vadd.f32 %v2006, %v2035
    %v2044 = vadd.f32 %v2007, %v2036
    %v2045 = vadd.f32 %v2008, %v2037
    %v2046 = vadd.f32 %v2009, %v2038
    %v2047 = vadd.f32 %v2010, %v2039
    %v2048 = vadd.f32 %v2011, %v2040
    %v2049 = vadd.f32 %v2012, %v2041
    %v2050 = vadd.f32 %v2013, %v2042
    %2051 = vrot.lane.b32.xlu0 %v963, 92
    %v2052 = vpop.permute.xlu0 %2051
    %2053 = vrot.lane.b32.xlu0 %v964, 92
    %v2054 = vpop.permute.xlu0 %2053
    %2055 = vrot.lane.b32.xlu0 %v965, 92
    %v2056 = vpop.permute.xlu0 %2055
    %2057 = vrot.lane.b32.xlu0 %v966, 92
    %v2058 = vpop.permute.xlu0 %2057
    %2059 = vrot.lane.b32.xlu0 %v967, 92
    %v2060 = vpop.permute.xlu0 %2059
    %2061 = vrot.lane.b32.xlu0 %v968, 92
    %v2062 = vpop.permute.xlu0 %2061
    %2063 = vrot.lane.b32.xlu0 %v969, 92
    %v2064 = vpop.permute.xlu0 %2063
    %2065 = vrot.lane.b32.xlu0 %v970, 92
    %v2066 = vpop.permute.xlu0 %2065
    %s2067 = scalar_lea.vmem [#allocation5], 68
    %v2068 = vld [vmem:[%s2067] sm:$0x1]
    %v2070 = vperm.slane %v2068, 0
    %v2072 = vmul.f32 %v2052, %v2070
    %v2073 = vmul.f32 %v2054, %v2070
    %v2074 = vmul.f32 %v2056, %v2070
    %v2075 = vmul.f32 %v2058, %v2070
    %v2076 = vmul.f32 %v2060, %v2070
    %v2077 = vmul.f32 %v2062, %v2070
    %v2078 = vmul.f32 %v2064, %v2070
    %v2079 = vmul.f32 %v2066, %v2070
    %v2080 = vadd.f32 %v2043, %v2072
    %v2081 = vadd.f32 %v2044, %v2073
    %v2082 = vadd.f32 %v2045, %v2074
    %v2083 = vadd.f32 %v2046, %v2075
    %v2084 = vadd.f32 %v2047, %v2076
    %v2085 = vadd.f32 %v2048, %v2077
    %v2086 = vadd.f32 %v2049, %v2078
    %v2087 = vadd.f32 %v2050, %v2079
    %2088 = vrot.lane.b32.xlu0 %v963, 88
    %v2089 = vpop.permute.xlu0 %2088
    %2090 = vrot.lane.b32.xlu0 %v964, 88
    %v2091 = vpop.permute.xlu0 %2090
    %2092 = vrot.lane.b32.xlu0 %v965, 88
    %v2093 = vpop.permute.xlu0 %2092
    %2094 = vrot.lane.b32.xlu0 %v966, 88
    %v2095 = vpop.permute.xlu0 %2094
    %2096 = vrot.lane.b32.xlu0 %v967, 88
    %v2097 = vpop.permute.xlu0 %2096
    %2098 = vrot.lane.b32.xlu0 %v968, 88
    %v2099 = vpop.permute.xlu0 %2098
    %2100 = vrot.lane.b32.xlu0 %v969, 88
    %v2101 = vpop.permute.xlu0 %2100
    %2102 = vrot.lane.b32.xlu0 %v970, 88
    %v2103 = vpop.permute.xlu0 %2102
    %s2104 = scalar_lea.vmem [#allocation5], 69
    %v2105 = vld [vmem:[%s2104] sm:$0x1]
    %v2107 = vperm.slane %v2105, 0
    %v2109 = vmul.f32 %v2089, %v2107
    %v2110 = vmul.f32 %v2091, %v2107
    %v2111 = vmul.f32 %v2093, %v2107
    %v2112 = vmul.f32 %v2095, %v2107
    %v2113 = vmul.f32 %v2097, %v2107
    %v2114 = vmul.f32 %v2099, %v2107
    %v2115 = vmul.f32 %v2101, %v2107
    %v2116 = vmul.f32 %v2103, %v2107
    %v2117 = vadd.f32 %v2080, %v2109
    %v2118 = vadd.f32 %v2081, %v2110
    %v2119 = vadd.f32 %v2082, %v2111
    %v2120 = vadd.f32 %v2083, %v2112
    %v2121 = vadd.f32 %v2084, %v2113
    %v2122 = vadd.f32 %v2085, %v2114
    %v2123 = vadd.f32 %v2086, %v2115
    %v2124 = vadd.f32 %v2087, %v2116
    %v2125 = vadd.s32 %v62, 8
    %v2126 = vadd.s32 %v62, 16
    %v2127 = vadd.s32 %v62, 24
    %v2128 = vadd.s32 %v62, 32
    %v2129 = vadd.s32 %v62, 40
    %v2130 = vadd.s32 %v62, 48
    %v2131 = vadd.s32 %v62, 56
    %vm2132 = vcmp.lt.s32.totalorder %v62, 16
    %vm2133 = vcmp.lt.s32.totalorder %v2125, 16
    %vm2134 = vcmp.lt.s32.totalorder %v2126, 16
    %vm2135 = vcmp.lt.s32.totalorder %v2127, 16
    %vm2136 = vcmp.lt.s32.totalorder %v2128, 16
    %vm2137 = vcmp.lt.s32.totalorder %v2129, 16
    %vm2138 = vcmp.lt.s32.totalorder %v2130, 16
    %vm2139 = vcmp.lt.s32.totalorder %v2131, 16
    %vm2140 = vcmp.ge.s32.totalorder %v62, 32
    %vm2141 = vcmp.ge.s32.totalorder %v2125, 32
    %vm2142 = vcmp.ge.s32.totalorder %v2126, 32
    %vm2143 = vcmp.ge.s32.totalorder %v2127, 32
    %vm2144 = vcmp.ge.s32.totalorder %v2128, 32
    %vm2145 = vcmp.ge.s32.totalorder %v2129, 32
    %vm2146 = vcmp.ge.s32.totalorder %v2130, 32
    %vm2147 = vcmp.ge.s32.totalorder %v2131, 32
    %vm2148 = vcmp.lt.s32.totalorder %v62, 48
    %vm2149 = vcmp.lt.s32.totalorder %v2125, 48
    %vm2150 = vcmp.lt.s32.totalorder %v2126, 48
    %vm2151 = vcmp.lt.s32.totalorder %v2127, 48
    %vm2152 = vcmp.lt.s32.totalorder %v2128, 48
    %vm2153 = vcmp.lt.s32.totalorder %v2129, 48
    %vm2154 = vcmp.lt.s32.totalorder %v2130, 48
    %vm2155 = vcmp.lt.s32.totalorder %v2131, 48
    %vm2156 = vmand %vm2140, %vm2148
    %vm2157 = vmand %vm2141, %vm2149
    %vm2158 = vmand %vm2142, %vm2150
    %vm2159 = vmand %vm2143, %vm2151
    %vm2160 = vmand %vm2144, %vm2152
    %vm2161 = vmand %vm2145, %vm2153
    %vm2162 = vmand %vm2146, %vm2154
    %vm2163 = vmand %vm2147, %vm2155
    %vm2164 = vmor %vm2132, %vm2156
    %vm2165 = vmor %vm2133, %vm2157
    %vm2166 = vmor %vm2134, %vm2158
    %vm2167 = vmor %vm2135, %vm2159
    %vm2168 = vmor %vm2136, %vm2160
    %vm2169 = vmor %vm2137, %vm2161
    %vm2170 = vmor %vm2138, %vm2162
    %vm2171 = vmor %vm2139, %vm2163
    %v2172 = vsel %vm2164, %v1774, 0.0
    %v2173 = vsel %vm2165, %v1775, 0.0
    %v2174 = vsel %vm2166, %v1776, 0.0
    %v2175 = vsel %vm2167, %v1777, 0.0
    %v2176 = vsel %vm2168, %v1778, 0.0
    %v2177 = vsel %vm2169, %v1779, 0.0
    %v2178 = vsel %vm2170, %v1780, 0.0
    %v2179 = vsel %vm2171, %v1781, 0.0
    %v2180 = vsel %vm2164, %v1911, 0.0
    %v2181 = vsel %vm2165, %v1912, 0.0
    %v2182 = vsel %vm2166, %v1913, 0.0
    %v2183 = vsel %vm2167, %v1914, 0.0
    %v2184 = vsel %vm2168, %v1915, 0.0
    %v2185 = vsel %vm2169, %v1916, 0.0
    %v2186 = vsel %vm2170, %v1917, 0.0
    %v2187 = vsel %vm2171, %v1918, 0.0
    %v2188 = vsel %vm2164, %v2117, 0.0
    %v2189 = vsel %vm2165, %v2118, 0.0
    %v2190 = vsel %vm2166, %v2119, 0.0
    %v2191 = vsel %vm2167, %v2120, 0.0
    %v2192 = vsel %vm2168, %v2121, 0.0
    %v2193 = vsel %vm2169, %v2122, 0.0
    %v2194 = vsel %vm2170, %v2123, 0.0
    %v2195 = vsel %vm2171, %v2124, 0.0
    %s2196 = scalar_lea.vmem [#allocation5], 4
    %v2197 = vld [vmem:[%s2196] sm:$0x1]
    %v2199 = vperm.slane %v2197, 0
    %v2201 = vadd.f32 %v963, %v2199
    %v2202 = vadd.f32 %v964, %v2199
    %v2203 = vadd.f32 %v965, %v2199
    %v2204 = vadd.f32 %v966, %v2199
    %v2205 = vadd.f32 %v967, %v2199
    %v2206 = vadd.f32 %v968, %v2199
    %v2207 = vadd.f32 %v969, %v2199
    %v2208 = vadd.f32 %v970, %v2199
    %v2209 = vrot.slane %v2172, 5
    %v2210 = vrot.slane %v2173, 5
    %v2211 = vrot.slane %v2174, 5
    %v2212 = vrot.slane %v2175, 5
    %v2213 = vrot.slane %v2176, 5
    %v2214 = vrot.slane %v2177, 5
    %v2215 = vrot.slane %v2178, 5
    %v2216 = vrot.slane %v2179, 5
    %vm2217 = vcmp.lt.s32.totalorder %v62, 3
    %v2218 = vsel %vm2217, %v2215, %v2216
    %v2219 = vsel %vm2217, %v2214, %v2215
    %v2220 = vsel %vm2217, %v2213, %v2214
    %v2221 = vsel %vm2217, %v2212, %v2213
    %v2222 = vsel %vm2217, %v2211, %v2212
    %v2223 = vsel %vm2217, %v2210, %v2211
    %v2224 = vsel %vm2217, %v2209, %v2210
    %v2225 = vsel %vm2217, %v2216, %v2209
    %s2226 = scalar_lea.vmem [#allocation5], 70
    %v2227 = vld [vmem:[%s2226] sm:$0x1]
    %v2229 = vperm.slane %v2227, 0
    %v2231 = vmul.f32 %v2225, %v2229
    %v2232 = vmul.f32 %v2224, %v2229
    %v2233 = vmul.f32 %v2223, %v2229
    %v2234 = vmul.f32 %v2222, %v2229
    %v2235 = vmul.f32 %v2221, %v2229
    %v2236 = vmul.f32 %v2220, %v2229
    %v2237 = vmul.f32 %v2219, %v2229
    %v2238 = vmul.f32 %v2218, %v2229
    %v2239 = vadd.f32 %v2201, %v2231
    %v2240 = vadd.f32 %v2202, %v2232
    %v2241 = vadd.f32 %v2203, %v2233
    %v2242 = vadd.f32 %v2204, %v2234
    %v2243 = vadd.f32 %v2205, %v2235
    %v2244 = vadd.f32 %v2206, %v2236
    %v2245 = vadd.f32 %v2207, %v2237
    %v2246 = vadd.f32 %v2208, %v2238
    %v2247 = vrot.slane %v2172, 6
    %v2248 = vrot.slane %v2173, 6
    %v2249 = vrot.slane %v2174, 6
    %v2250 = vrot.slane %v2175, 6
    %v2251 = vrot.slane %v2176, 6
    %v2252 = vrot.slane %v2177, 6
    %v2253 = vrot.slane %v2178, 6
    %v2254 = vrot.slane %v2179, 6
    %v2255 = vsel %vm63, %v2253, %v2254
    %v2256 = vsel %vm63, %v2252, %v2253
    %v2257 = vsel %vm63, %v2251, %v2252
    %v2258 = vsel %vm63, %v2250, %v2251
    %v2259 = vsel %vm63, %v2249, %v2250
    %v2260 = vsel %vm63, %v2248, %v2249
    %v2261 = vsel %vm63, %v2247, %v2248
    %v2262 = vsel %vm63, %v2254, %v2247
    %s2263 = scalar_lea.vmem [#allocation5], 71
    %v2264 = vld [vmem:[%s2263] sm:$0x1]
    %v2266 = vperm.slane %v2264, 0
    %v2268 = vmul.f32 %v2262, %v2266
    %v2269 = vmul.f32 %v2261, %v2266
    %v2270 = vmul.f32 %v2260, %v2266
    %v2271 = vmul.f32 %v2259, %v2266
    %v2272 = vmul.f32 %v2258, %v2266
    %v2273 = vmul.f32 %v2257, %v2266
    %v2274 = vmul.f32 %v2256, %v2266
    %v2275 = vmul.f32 %v2255, %v2266
    %v2276 = vadd.f32 %v2239, %v2268
    %v2277 = vadd.f32 %v2240, %v2269
    %v2278 = vadd.f32 %v2241, %v2270
    %v2279 = vadd.f32 %v2242, %v2271
    %v2280 = vadd.f32 %v2243, %v2272
    %v2281 = vadd.f32 %v2244, %v2273
    %v2282 = vadd.f32 %v2245, %v2274
    %v2283 = vadd.f32 %v2246, %v2275
    %v2284 = vrot.slane %v2172, 7
    %v2285 = vrot.slane %v2173, 7
    %v2286 = vrot.slane %v2174, 7
    %v2287 = vrot.slane %v2175, 7
    %v2288 = vrot.slane %v2176, 7
    %v2289 = vrot.slane %v2177, 7
    %v2290 = vrot.slane %v2178, 7
    %v2291 = vrot.slane %v2179, 7
    %v2292 = vsel %vm252, %v2290, %v2291
    %v2293 = vsel %vm252, %v2289, %v2290
    %v2294 = vsel %vm252, %v2288, %v2289
    %v2295 = vsel %vm252, %v2287, %v2288
    %v2296 = vsel %vm252, %v2286, %v2287
    %v2297 = vsel %vm252, %v2285, %v2286
    %v2298 = vsel %vm252, %v2284, %v2285
    %v2299 = vsel %vm252, %v2291, %v2284
    %s2300 = scalar_lea.vmem [#allocation5], 72
    %v2301 = vld [vmem:[%s2300] sm:$0x1]
    %v2303 = vperm.slane %v2301, 0
    %v2305 = vmul.f32 %v2299, %v2303
    %v2306 = vmul.f32 %v2298, %v2303
    %v2307 = vmul.f32 %v2297, %v2303
    %v2308 = vmul.f32 %v2296, %v2303
    %v2309 = vmul.f32 %v2295, %v2303
    %v2310 = vmul.f32 %v2294, %v2303
    %v2311 = vmul.f32 %v2293, %v2303
    %v2312 = vmul.f32 %v2292, %v2303
    %v2313 = vadd.f32 %v2276, %v2305
    %v2314 = vadd.f32 %v2277, %v2306
    %v2315 = vadd.f32 %v2278, %v2307
    %v2316 = vadd.f32 %v2279, %v2308
    %v2317 = vadd.f32 %v2280, %v2309
    %v2318 = vadd.f32 %v2281, %v2310
    %v2319 = vadd.f32 %v2282, %v2311
    %v2320 = vadd.f32 %v2283, %v2312
    %s2321 = scalar_lea.vmem [#allocation5], 73
    %v2322 = vld [vmem:[%s2321] sm:$0x1]
    %v2324 = vperm.slane %v2322, 0
    %v2326 = vmul.f32 %v2172, %v2324
    %v2327 = vmul.f32 %v2173, %v2324
    %v2328 = vmul.f32 %v2174, %v2324
    %v2329 = vmul.f32 %v2175, %v2324
    %v2330 = vmul.f32 %v2176, %v2324
    %v2331 = vmul.f32 %v2177, %v2324
    %v2332 = vmul.f32 %v2178, %v2324
    %v2333 = vmul.f32 %v2179, %v2324
    %v2334 = vadd.f32 %v2313, %v2326
    %v2335 = vadd.f32 %v2314, %v2327
    %v2336 = vadd.f32 %v2315, %v2328
    %v2337 = vadd.f32 %v2316, %v2329
    %v2338 = vadd.f32 %v2317, %v2330
    %v2339 = vadd.f32 %v2318, %v2331
    %v2340 = vadd.f32 %v2319, %v2332
    %v2341 = vadd.f32 %v2320, %v2333
    %v2342 = vrot.slane %v2172, 1
    %v2343 = vrot.slane %v2173, 1
    %v2344 = vrot.slane %v2174, 1
    %v2345 = vrot.slane %v2175, 1
    %v2346 = vrot.slane %v2176, 1
    %v2347 = vrot.slane %v2177, 1
    %v2348 = vrot.slane %v2178, 1
    %v2349 = vrot.slane %v2179, 1
    %v2350 = vsel %vm607, %v2348, %v2349
    %v2351 = vsel %vm607, %v2347, %v2348
    %v2352 = vsel %vm607, %v2346, %v2347
    %v2353 = vsel %vm607, %v2345, %v2346
    %v2354 = vsel %vm607, %v2344, %v2345
    %v2355 = vsel %vm607, %v2343, %v2344
    %v2356 = vsel %vm607, %v2342, %v2343
    %v2357 = vsel %vm607, %v2349, %v2342
    %s2358 = scalar_lea.vmem [#allocation5], 74
    %v2359 = vld [vmem:[%s2358] sm:$0x1]
    %v2361 = vperm.slane %v2359, 0
    %v2363 = vmul.f32 %v2356, %v2361
    %v2364 = vmul.f32 %v2355, %v2361
    %v2365 = vmul.f32 %v2354, %v2361
    %v2366 = vmul.f32 %v2353, %v2361
    %v2367 = vmul.f32 %v2352, %v2361
    %v2368 = vmul.f32 %v2351, %v2361
    %v2369 = vmul.f32 %v2350, %v2361
    %v2370 = vmul.f32 %v2357, %v2361
    %v2371 = vadd.f32 %v2334, %v2363
    %v2372 = vadd.f32 %v2335, %v2364
    %v2373 = vadd.f32 %v2336, %v2365
    %v2374 = vadd.f32 %v2337, %v2366
    %v2375 = vadd.f32 %v2338, %v2367
    %v2376 = vadd.f32 %v2339, %v2368
    %v2377 = vadd.f32 %v2340, %v2369
    %v2378 = vadd.f32 %v2341, %v2370
    %v2379 = vrot.slane %v2172, 2
    %v2380 = vrot.slane %v2173, 2
    %v2381 = vrot.slane %v2174, 2
    %v2382 = vrot.slane %v2175, 2
    %v2383 = vrot.slane %v2176, 2
    %v2384 = vrot.slane %v2177, 2
    %v2385 = vrot.slane %v2178, 2
    %v2386 = vrot.slane %v2179, 2
    %v2387 = vsel %vm793, %v2385, %v2386
    %v2388 = vsel %vm793, %v2384, %v2385
    %v2389 = vsel %vm793, %v2383, %v2384
    %v2390 = vsel %vm793, %v2382, %v2383
    %v2391 = vsel %vm793, %v2381, %v2382
    %v2392 = vsel %vm793, %v2380, %v2381
    %v2393 = vsel %vm793, %v2379, %v2380
    %v2394 = vsel %vm793, %v2386, %v2379
    %s2395 = scalar_lea.vmem [#allocation5], 75
    %v2396 = vld [vmem:[%s2395] sm:$0x1]
    %v2398 = vperm.slane %v2396, 0
    %v2400 = vmul.f32 %v2393, %v2398
    %v2401 = vmul.f32 %v2392, %v2398
    %v2402 = vmul.f32 %v2391, %v2398
    %v2403 = vmul.f32 %v2390, %v2398
    %v2404 = vmul.f32 %v2389, %v2398
    %v2405 = vmul.f32 %v2388, %v2398
    %v2406 = vmul.f32 %v2387, %v2398
    %v2407 = vmul.f32 %v2394, %v2398
    %v2408 = vadd.f32 %v2371, %v2400
    %v2409 = vadd.f32 %v2372, %v2401
    %v2410 = vadd.f32 %v2373, %v2402
    %v2411 = vadd.f32 %v2374, %v2403
    %v2412 = vadd.f32 %v2375, %v2404
    %v2413 = vadd.f32 %v2376, %v2405
    %v2414 = vadd.f32 %v2377, %v2406
    %v2415 = vadd.f32 %v2378, %v2407
    %v2416 = vrot.slane %v2172, 3
    %v2417 = vrot.slane %v2173, 3
    %v2418 = vrot.slane %v2174, 3
    %v2419 = vrot.slane %v2175, 3
    %v2420 = vrot.slane %v2176, 3
    %v2421 = vrot.slane %v2177, 3
    %v2422 = vrot.slane %v2178, 3
    %v2423 = vrot.slane %v2179, 3
    %vm2424 = vcmp.lt.s32.totalorder %v62, 5
    %v2425 = vsel %vm2424, %v2422, %v2423
    %v2426 = vsel %vm2424, %v2421, %v2422
    %v2427 = vsel %vm2424, %v2420, %v2421
    %v2428 = vsel %vm2424, %v2419, %v2420
    %v2429 = vsel %vm2424, %v2418, %v2419
    %v2430 = vsel %vm2424, %v2417, %v2418
    %v2431 = vsel %vm2424, %v2416, %v2417
    %v2432 = vsel %vm2424, %v2423, %v2416
    %s2433 = scalar_lea.vmem [#allocation5], 76
    %v2434 = vld [vmem:[%s2433] sm:$0x1]
    %v2436 = vperm.slane %v2434, 0
    %v2438 = vmul.f32 %v2431, %v2436
    %v2439 = vmul.f32 %v2430, %v2436
    %v2440 = vmul.f32 %v2429, %v2436
    %v2441 = vmul.f32 %v2428, %v2436
    %v2442 = vmul.f32 %v2427, %v2436
    %v2443 = vmul.f32 %v2426, %v2436
    %v2444 = vmul.f32 %v2425, %v2436
    %v2445 = vmul.f32 %v2432, %v2436
    %v2446 = vadd.f32 %v2408, %v2438
    %v2447 = vadd.f32 %v2409, %v2439
    %v2448 = vadd.f32 %v2410, %v2440
    %v2449 = vadd.f32 %v2411, %v2441
    %v2450 = vadd.f32 %v2412, %v2442
    %v2451 = vadd.f32 %v2413, %v2443
    %v2452 = vadd.f32 %v2414, %v2444
    %v2453 = vadd.f32 %v2415, %v2445
    %v2454 = vrot.slane %v2180, 3
    %v2455 = vrot.slane %v2181, 3
    %v2456 = vrot.slane %v2182, 3
    %v2457 = vrot.slane %v2183, 3
    %v2458 = vrot.slane %v2184, 3
    %v2459 = vrot.slane %v2185, 3
    %v2460 = vrot.slane %v2186, 3
    %v2461 = vrot.slane %v2187, 3
    %v2462 = vsel %vm2424, %v2460, %v2461
    %v2463 = vsel %vm2424, %v2459, %v2460
    %v2464 = vsel %vm2424, %v2458, %v2459
    %v2465 = vsel %vm2424, %v2457, %v2458
    %v2466 = vsel %vm2424, %v2456, %v2457
    %v2467 = vsel %vm2424, %v2455, %v2456
    %v2468 = vsel %vm2424, %v2454, %v2455
    %v2469 = vsel %vm2424, %v2461, %v2454
    %s2470 = scalar_lea.vmem [#allocation5], 77
    %v2471 = vld [vmem:[%s2470] sm:$0x1]
    %v2473 = vperm.slane %v2471, 0
    %v2475 = vmul.f32 %v2469, %v2473
    %v2476 = vmul.f32 %v2468, %v2473
    %v2477 = vmul.f32 %v2467, %v2473
    %v2478 = vmul.f32 %v2466, %v2473
    %v2479 = vmul.f32 %v2465, %v2473
    %v2480 = vmul.f32 %v2464, %v2473
    %v2481 = vmul.f32 %v2463, %v2473
    %v2482 = vmul.f32 %v2462, %v2473
    %v2483 = vadd.f32 %v2446, %v2475
    %v2484 = vadd.f32 %v2447, %v2476
    %v2485 = vadd.f32 %v2448, %v2477
    %v2486 = vadd.f32 %v2449, %v2478
    %v2487 = vadd.f32 %v2450, %v2479
    %v2488 = vadd.f32 %v2451, %v2480
    %v2489 = vadd.f32 %v2452, %v2481
    %v2490 = vadd.f32 %v2453, %v2482
    %v2491 = vrot.slane %v2180, 4
    %v2492 = vrot.slane %v2181, 4
    %v2493 = vrot.slane %v2182, 4
    %v2494 = vrot.slane %v2183, 4
    %v2495 = vrot.slane %v2184, 4
    %v2496 = vrot.slane %v2185, 4
    %v2497 = vrot.slane %v2186, 4
    %v2498 = vrot.slane %v2187, 4
    %vm2499 = vcmp.lt.s32.totalorder %v62, 4
    %v2500 = vsel %vm2499, %v2497, %v2498
    %v2501 = vsel %vm2499, %v2496, %v2497
    %v2502 = vsel %vm2499, %v2495, %v2496
    %v2503 = vsel %vm2499, %v2494, %v2495
    %v2504 = vsel %vm2499, %v2493, %v2494
    %v2505 = vsel %vm2499, %v2492, %v2493
    %v2506 = vsel %vm2499, %v2491, %v2492
    %v2507 = vsel %vm2499, %v2498, %v2491
    %s2508 = scalar_lea.vmem [#allocation5], 78
    %v2509 = vld [vmem:[%s2508] sm:$0x1]
    %v2511 = vperm.slane %v2509, 0
    %v2513 = vmul.f32 %v2507, %v2511
    %v2514 = vmul.f32 %v2506, %v2511
    %v2515 = vmul.f32 %v2505, %v2511
    %v2516 = vmul.f32 %v2504, %v2511
    %v2517 = vmul.f32 %v2503, %v2511
    %v2518 = vmul.f32 %v2502, %v2511
    %v2519 = vmul.f32 %v2501, %v2511
    %v2520 = vmul.f32 %v2500, %v2511
    %v2521 = vadd.f32 %v2483, %v2513
    %v2522 = vadd.f32 %v2484, %v2514
    %v2523 = vadd.f32 %v2485, %v2515
    %v2524 = vadd.f32 %v2486, %v2516
    %v2525 = vadd.f32 %v2487, %v2517
    %v2526 = vadd.f32 %v2488, %v2518
    %v2527 = vadd.f32 %v2489, %v2519
    %v2528 = vadd.f32 %v2490, %v2520
    %v2529 = vrot.slane %v2180, 5
    %v2530 = vrot.slane %v2181, 5
    %v2531 = vrot.slane %v2182, 5
    %v2532 = vrot.slane %v2183, 5
    %v2533 = vrot.slane %v2184, 5
    %v2534 = vrot.slane %v2185, 5
    %v2535 = vrot.slane %v2186, 5
    %v2536 = vrot.slane %v2187, 5
    %v2537 = vsel %vm2217, %v2535, %v2536
    %v2538 = vsel %vm2217, %v2534, %v2535
    %v2539 = vsel %vm2217, %v2533, %v2534
    %v2540 = vsel %vm2217, %v2532, %v2533
    %v2541 = vsel %vm2217, %v2531, %v2532
    %v2542 = vsel %vm2217, %v2530, %v2531
    %v2543 = vsel %vm2217, %v2529, %v2530
    %v2544 = vsel %vm2217, %v2536, %v2529
    %s2545 = scalar_lea.vmem [#allocation5], 79
    %v2546 = vld [vmem:[%s2545] sm:$0x1]
    %v2548 = vperm.slane %v2546, 0
    %v2550 = vmul.f32 %v2544, %v2548
    %v2551 = vmul.f32 %v2543, %v2548
    %v2552 = vmul.f32 %v2542, %v2548
    %v2553 = vmul.f32 %v2541, %v2548
    %v2554 = vmul.f32 %v2540, %v2548
    %v2555 = vmul.f32 %v2539, %v2548
    %v2556 = vmul.f32 %v2538, %v2548
    %v2557 = vmul.f32 %v2537, %v2548
    %v2558 = vadd.f32 %v2521, %v2550
    %v2559 = vadd.f32 %v2522, %v2551
    %v2560 = vadd.f32 %v2523, %v2552
    %v2561 = vadd.f32 %v2524, %v2553
    %v2562 = vadd.f32 %v2525, %v2554
    %v2563 = vadd.f32 %v2526, %v2555
    %v2564 = vadd.f32 %v2527, %v2556
    %v2565 = vadd.f32 %v2528, %v2557
    %v2566 = vrot.slane %v2180, 6
    %v2567 = vrot.slane %v2181, 6
    %v2568 = vrot.slane %v2182, 6
    %v2569 = vrot.slane %v2183, 6
    %v2570 = vrot.slane %v2184, 6
    %v2571 = vrot.slane %v2185, 6
    %v2572 = vrot.slane %v2186, 6
    %v2573 = vrot.slane %v2187, 6
    %v2574 = vsel %vm63, %v2572, %v2573
    %v2575 = vsel %vm63, %v2571, %v2572
    %v2576 = vsel %vm63, %v2570, %v2571
    %v2577 = vsel %vm63, %v2569, %v2570
    %v2578 = vsel %vm63, %v2568, %v2569
    %v2579 = vsel %vm63, %v2567, %v2568
    %v2580 = vsel %vm63, %v2566, %v2567
    %v2581 = vsel %vm63, %v2573, %v2566
    %s2582 = scalar_lea.vmem [#allocation5], 80
    %v2583 = vld [vmem:[%s2582] sm:$0x1]
    %v2585 = vperm.slane %v2583, 0
    %v2587 = vmul.f32 %v2581, %v2585
    %v2588 = vmul.f32 %v2580, %v2585
    %v2589 = vmul.f32 %v2579, %v2585
    %v2590 = vmul.f32 %v2578, %v2585
    %v2591 = vmul.f32 %v2577, %v2585
    %v2592 = vmul.f32 %v2576, %v2585
    %v2593 = vmul.f32 %v2575, %v2585
    %v2594 = vmul.f32 %v2574, %v2585
    %v2595 = vadd.f32 %v2558, %v2587
    %v2596 = vadd.f32 %v2559, %v2588
    %v2597 = vadd.f32 %v2560, %v2589
    %v2598 = vadd.f32 %v2561, %v2590
    %v2599 = vadd.f32 %v2562, %v2591
    %v2600 = vadd.f32 %v2563, %v2592
    %v2601 = vadd.f32 %v2564, %v2593
    %v2602 = vadd.f32 %v2565, %v2594
    %v2603 = vrot.slane %v2180, 7
    %v2604 = vrot.slane %v2181, 7
    %v2605 = vrot.slane %v2182, 7
    %v2606 = vrot.slane %v2183, 7
    %v2607 = vrot.slane %v2184, 7
    %v2608 = vrot.slane %v2185, 7
    %v2609 = vrot.slane %v2186, 7
    %v2610 = vrot.slane %v2187, 7
    %v2611 = vsel %vm252, %v2609, %v2610
    %v2612 = vsel %vm252, %v2608, %v2609
    %v2613 = vsel %vm252, %v2607, %v2608
    %v2614 = vsel %vm252, %v2606, %v2607
    %v2615 = vsel %vm252, %v2605, %v2606
    %v2616 = vsel %vm252, %v2604, %v2605
    %v2617 = vsel %vm252, %v2603, %v2604
    %v2618 = vsel %vm252, %v2610, %v2603
    %s2619 = scalar_lea.vmem [#allocation5], 81
    %v2620 = vld [vmem:[%s2619] sm:$0x1]
    %v2622 = vperm.slane %v2620, 0
    %v2624 = vmul.f32 %v2618, %v2622
    %v2625 = vmul.f32 %v2617, %v2622
    %v2626 = vmul.f32 %v2616, %v2622
    %v2627 = vmul.f32 %v2615, %v2622
    %v2628 = vmul.f32 %v2614, %v2622
    %v2629 = vmul.f32 %v2613, %v2622
    %v2630 = vmul.f32 %v2612, %v2622
    %v2631 = vmul.f32 %v2611, %v2622
    %v2632 = vadd.f32 %v2595, %v2624
    %v2633 = vadd.f32 %v2596, %v2625
    %v2634 = vadd.f32 %v2597, %v2626
    %v2635 = vadd.f32 %v2598, %v2627
    %v2636 = vadd.f32 %v2599, %v2628
    %v2637 = vadd.f32 %v2600, %v2629
    %v2638 = vadd.f32 %v2601, %v2630
    %v2639 = vadd.f32 %v2602, %v2631
    %s2640 = scalar_lea.vmem [#allocation5], 82
    %v2641 = vld [vmem:[%s2640] sm:$0x1]
    %v2643 = vperm.slane %v2641, 0
    %v2645 = vmul.f32 %v2180, %v2643
    %v2646 = vmul.f32 %v2181, %v2643
    %v2647 = vmul.f32 %v2182, %v2643
    %v2648 = vmul.f32 %v2183, %v2643
    %v2649 = vmul.f32 %v2184, %v2643
    %v2650 = vmul.f32 %v2185, %v2643
    %v2651 = vmul.f32 %v2186, %v2643
    %v2652 = vmul.f32 %v2187, %v2643
    %v2653 = vadd.f32 %v2632, %v2645
    %v2654 = vadd.f32 %v2633, %v2646
    %v2655 = vadd.f32 %v2634, %v2647
    %v2656 = vadd.f32 %v2635, %v2648
    %v2657 = vadd.f32 %v2636, %v2649
    %v2658 = vadd.f32 %v2637, %v2650
    %v2659 = vadd.f32 %v2638, %v2651
    %v2660 = vadd.f32 %v2639, %v2652
    %v2661 = vrot.slane %v2180, 1
    %v2662 = vrot.slane %v2181, 1
    %v2663 = vrot.slane %v2182, 1
    %v2664 = vrot.slane %v2183, 1
    %v2665 = vrot.slane %v2184, 1
    %v2666 = vrot.slane %v2185, 1
    %v2667 = vrot.slane %v2186, 1
    %v2668 = vrot.slane %v2187, 1
    %v2669 = vsel %vm607, %v2667, %v2668
    %v2670 = vsel %vm607, %v2666, %v2667
    %v2671 = vsel %vm607, %v2665, %v2666
    %v2672 = vsel %vm607, %v2664, %v2665
    %v2673 = vsel %vm607, %v2663, %v2664
    %v2674 = vsel %vm607, %v2662, %v2663
    %v2675 = vsel %vm607, %v2661, %v2662
    %v2676 = vsel %vm607, %v2668, %v2661
    %s2677 = scalar_lea.vmem [#allocation5], 83
    %v2678 = vld [vmem:[%s2677] sm:$0x1]
    %v2680 = vperm.slane %v2678, 0
    %v2682 = vmul.f32 %v2675, %v2680
    %v2683 = vmul.f32 %v2674, %v2680
    %v2684 = vmul.f32 %v2673, %v2680
    %v2685 = vmul.f32 %v2672, %v2680
    %v2686 = vmul.f32 %v2671, %v2680
    %v2687 = vmul.f32 %v2670, %v2680
    %v2688 = vmul.f32 %v2669, %v2680
    %v2689 = vmul.f32 %v2676, %v2680
    %v2690 = vadd.f32 %v2653, %v2682
    %v2691 = vadd.f32 %v2654, %v2683
    %v2692 = vadd.f32 %v2655, %v2684
    %v2693 = vadd.f32 %v2656, %v2685
    %v2694 = vadd.f32 %v2657, %v2686
    %v2695 = vadd.f32 %v2658, %v2687
    %v2696 = vadd.f32 %v2659, %v2688
    %v2697 = vadd.f32 %v2660, %v2689
    %v2698 = vrot.slane %v2180, 2
    %v2699 = vrot.slane %v2181, 2
    %v2700 = vrot.slane %v2182, 2
    %v2701 = vrot.slane %v2183, 2
    %v2702 = vrot.slane %v2184, 2
    %v2703 = vrot.slane %v2185, 2
    %v2704 = vrot.slane %v2186, 2
    %v2705 = vrot.slane %v2187, 2
    %v2706 = vsel %vm793, %v2704, %v2705
    %v2707 = vsel %vm793, %v2703, %v2704
    %v2708 = vsel %vm793, %v2702, %v2703
    %v2709 = vsel %vm793, %v2701, %v2702
    %v2710 = vsel %vm793, %v2700, %v2701
    %v2711 = vsel %vm793, %v2699, %v2700
    %v2712 = vsel %vm793, %v2698, %v2699
    %v2713 = vsel %vm793, %v2705, %v2698
    %s2714 = scalar_lea.vmem [#allocation5], 84
    %v2715 = vld [vmem:[%s2714] sm:$0x1]
    %v2717 = vperm.slane %v2715, 0
    %v2719 = vmul.f32 %v2712, %v2717
    %v2720 = vmul.f32 %v2711, %v2717
    %v2721 = vmul.f32 %v2710, %v2717
    %v2722 = vmul.f32 %v2709, %v2717
    %v2723 = vmul.f32 %v2708, %v2717
    %v2724 = vmul.f32 %v2707, %v2717
    %v2725 = vmul.f32 %v2706, %v2717
    %v2726 = vmul.f32 %v2713, %v2717
    %v2727 = vadd.f32 %v2690, %v2719
    %v2728 = vadd.f32 %v2691, %v2720
    %v2729 = vadd.f32 %v2692, %v2721
    %v2730 = vadd.f32 %v2693, %v2722
    %v2731 = vadd.f32 %v2694, %v2723
    %v2732 = vadd.f32 %v2695, %v2724
    %v2733 = vadd.f32 %v2696, %v2725
    %v2734 = vadd.f32 %v2697, %v2726
    %s2735 = scalar_lea.vmem [#allocation5], 85
    %v2736 = vld [vmem:[%s2735] sm:$0x1]
    %v2738 = vperm.slane %v2736, 0
    %v2740 = vmul.f32 %v2468, %v2738
    %v2741 = vmul.f32 %v2467, %v2738
    %v2742 = vmul.f32 %v2466, %v2738
    %v2743 = vmul.f32 %v2465, %v2738
    %v2744 = vmul.f32 %v2464, %v2738
    %v2745 = vmul.f32 %v2463, %v2738
    %v2746 = vmul.f32 %v2462, %v2738
    %v2747 = vmul.f32 %v2469, %v2738
    %v2748 = vadd.f32 %v2727, %v2740
    %v2749 = vadd.f32 %v2728, %v2741
    %v2750 = vadd.f32 %v2729, %v2742
    %v2751 = vadd.f32 %v2730, %v2743
    %v2752 = vadd.f32 %v2731, %v2744
    %v2753 = vadd.f32 %v2732, %v2745
    %v2754 = vadd.f32 %v2733, %v2746
    %v2755 = vadd.f32 %v2734, %v2747
    %s2756 = scalar_lea.vmem [#allocation5], 86
    %v2757 = vld [vmem:[%s2756] sm:$0x1]
    %v2759 = vperm.slane %v2757, 0
    %v2761 = vmul.f32 %v2506, %v2759
    %v2762 = vmul.f32 %v2505, %v2759
    %v2763 = vmul.f32 %v2504, %v2759
    %v2764 = vmul.f32 %v2503, %v2759
    %v2765 = vmul.f32 %v2502, %v2759
    %v2766 = vmul.f32 %v2501, %v2759
    %v2767 = vmul.f32 %v2500, %v2759
    %v2768 = vmul.f32 %v2507, %v2759
    %v2769 = vadd.f32 %v2748, %v2761
    %v2770 = vadd.f32 %v2749, %v2762
    %v2771 = vadd.f32 %v2750, %v2763
    %v2772 = vadd.f32 %v2751, %v2764
    %v2773 = vadd.f32 %v2752, %v2765
    %v2774 = vadd.f32 %v2753, %v2766
    %v2775 = vadd.f32 %v2754, %v2767
    %v2776 = vadd.f32 %v2755, %v2768
    %s2777 = scalar_lea.vmem [#allocation5], 87
    %v2778 = vld [vmem:[%s2777] sm:$0x1]
    %v2780 = vperm.slane %v2778, 0
    %v2782 = vmul.f32 %v2543, %v2780
    %v2783 = vmul.f32 %v2542, %v2780
    %v2784 = vmul.f32 %v2541, %v2780
    %v2785 = vmul.f32 %v2540, %v2780
    %v2786 = vmul.f32 %v2539, %v2780
    %v2787 = vmul.f32 %v2538, %v2780
    %v2788 = vmul.f32 %v2537, %v2780
    %v2789 = vmul.f32 %v2544, %v2780
    %v2790 = vadd.f32 %v2769, %v2782
    %v2791 = vadd.f32 %v2770, %v2783
    %v2792 = vadd.f32 %v2771, %v2784
    %v2793 = vadd.f32 %v2772, %v2785
    %v2794 = vadd.f32 %v2773, %v2786
    %v2795 = vadd.f32 %v2774, %v2787
    %v2796 = vadd.f32 %v2775, %v2788
    %v2797 = vadd.f32 %v2776, %v2789
    %v2798 = vrot.slane %v2188, 6
    %v2799 = vrot.slane %v2189, 6
    %v2800 = vrot.slane %v2190, 6
    %v2801 = vrot.slane %v2191, 6
    %v2802 = vrot.slane %v2192, 6
    %v2803 = vrot.slane %v2193, 6
    %v2804 = vrot.slane %v2194, 6
    %v2805 = vrot.slane %v2195, 6
    %v2806 = vsel %vm63, %v2804, %v2805
    %v2807 = vsel %vm63, %v2803, %v2804
    %v2808 = vsel %vm63, %v2802, %v2803
    %v2809 = vsel %vm63, %v2801, %v2802
    %v2810 = vsel %vm63, %v2800, %v2801
    %v2811 = vsel %vm63, %v2799, %v2800
    %v2812 = vsel %vm63, %v2798, %v2799
    %v2813 = vsel %vm63, %v2805, %v2798
    %s2814 = scalar_lea.vmem [#allocation5], 88
    %v2815 = vld [vmem:[%s2814] sm:$0x1]
    %v2817 = vperm.slane %v2815, 0
    %v2819 = vmul.f32 %v2806, %v2817
    %v2820 = vmul.f32 %v2813, %v2817
    %v2821 = vmul.f32 %v2812, %v2817
    %v2822 = vmul.f32 %v2811, %v2817
    %v2823 = vmul.f32 %v2810, %v2817
    %v2824 = vmul.f32 %v2809, %v2817
    %v2825 = vmul.f32 %v2808, %v2817
    %v2826 = vmul.f32 %v2807, %v2817
    %v2827 = vadd.f32 %v2790, %v2819
    %v2828 = vadd.f32 %v2791, %v2820
    %v2829 = vadd.f32 %v2792, %v2821
    %v2830 = vadd.f32 %v2793, %v2822
    %v2831 = vadd.f32 %v2794, %v2823
    %v2832 = vadd.f32 %v2795, %v2824
    %v2833 = vadd.f32 %v2796, %v2825
    %v2834 = vadd.f32 %v2797, %v2826
    %v2835 = vrot.slane %v2188, 7
    %v2836 = vrot.slane %v2189, 7
    %v2837 = vrot.slane %v2190, 7
    %v2838 = vrot.slane %v2191, 7
    %v2839 = vrot.slane %v2192, 7
    %v2840 = vrot.slane %v2193, 7
    %v2841 = vrot.slane %v2194, 7
    %v2842 = vrot.slane %v2195, 7
    %v2843 = vsel %vm252, %v2841, %v2842
    %v2844 = vsel %vm252, %v2840, %v2841
    %v2845 = vsel %vm252, %v2839, %v2840
    %v2846 = vsel %vm252, %v2838, %v2839
    %v2847 = vsel %vm252, %v2837, %v2838
    %v2848 = vsel %vm252, %v2836, %v2837
    %v2849 = vsel %vm252, %v2835, %v2836
    %v2850 = vsel %vm252, %v2842, %v2835
    %s2851 = scalar_lea.vmem [#allocation5], 89
    %v2852 = vld [vmem:[%s2851] sm:$0x1]
    %v2854 = vperm.slane %v2852, 0
    %v2856 = vmul.f32 %v2843, %v2854
    %v2857 = vmul.f32 %v2850, %v2854
    %v2858 = vmul.f32 %v2849, %v2854
    %v2859 = vmul.f32 %v2848, %v2854
    %v2860 = vmul.f32 %v2847, %v2854
    %v2861 = vmul.f32 %v2846, %v2854
    %v2862 = vmul.f32 %v2845, %v2854
    %v2863 = vmul.f32 %v2844, %v2854
    %v2864 = vadd.f32 %v2827, %v2856
    %v2865 = vadd.f32 %v2828, %v2857
    %v2866 = vadd.f32 %v2829, %v2858
    %v2867 = vadd.f32 %v2830, %v2859
    %v2868 = vadd.f32 %v2831, %v2860
    %v2869 = vadd.f32 %v2832, %v2861
    %v2870 = vadd.f32 %v2833, %v2862
    %v2871 = vadd.f32 %v2834, %v2863
    %s2872 = scalar_lea.vmem [#allocation5], 90
    %v2873 = vld [vmem:[%s2872] sm:$0x1]
    %v2875 = vperm.slane %v2873, 0
    %v2877 = vmul.f32 %v2195, %v2875
    %v2878 = vmul.f32 %v2188, %v2875
    %v2879 = vmul.f32 %v2189, %v2875
    %v2880 = vmul.f32 %v2190, %v2875
    %v2881 = vmul.f32 %v2191, %v2875
    %v2882 = vmul.f32 %v2192, %v2875
    %v2883 = vmul.f32 %v2193, %v2875
    %v2884 = vmul.f32 %v2194, %v2875
    %v2885 = vadd.f32 %v2864, %v2877
    %v2886 = vadd.f32 %v2865, %v2878
    %v2887 = vadd.f32 %v2866, %v2879
    %v2888 = vadd.f32 %v2867, %v2880
    %v2889 = vadd.f32 %v2868, %v2881
    %v2890 = vadd.f32 %v2869, %v2882
    %v2891 = vadd.f32 %v2870, %v2883
    %v2892 = vadd.f32 %v2871, %v2884
    %v2893 = vrot.slane %v2188, 1
    %v2894 = vrot.slane %v2189, 1
    %v2895 = vrot.slane %v2190, 1
    %v2896 = vrot.slane %v2191, 1
    %v2897 = vrot.slane %v2192, 1
    %v2898 = vrot.slane %v2193, 1
    %v2899 = vrot.slane %v2194, 1
    %v2900 = vrot.slane %v2195, 1
    %v2901 = vsel %vm607, %v2899, %v2900
    %v2902 = vsel %vm607, %v2898, %v2899
    %v2903 = vsel %vm607, %v2897, %v2898
    %v2904 = vsel %vm607, %v2896, %v2897
    %v2905 = vsel %vm607, %v2895, %v2896
    %v2906 = vsel %vm607, %v2894, %v2895
    %v2907 = vsel %vm607, %v2893, %v2894
    %v2908 = vsel %vm607, %v2900, %v2893
    %s2909 = scalar_lea.vmem [#allocation5], 91
    %v2910 = vld [vmem:[%s2909] sm:$0x1]
    %v2912 = vperm.slane %v2910, 0
    %v2914 = vmul.f32 %v2908, %v2912
    %v2915 = vmul.f32 %v2907, %v2912
    %v2916 = vmul.f32 %v2906, %v2912
    %v2917 = vmul.f32 %v2905, %v2912
    %v2918 = vmul.f32 %v2904, %v2912
    %v2919 = vmul.f32 %v2903, %v2912
    %v2920 = vmul.f32 %v2902, %v2912
    %v2921 = vmul.f32 %v2901, %v2912
    %v2922 = vadd.f32 %v2885, %v2914
    %v2923 = vadd.f32 %v2886, %v2915
    %v2924 = vadd.f32 %v2887, %v2916
    %v2925 = vadd.f32 %v2888, %v2917
    %v2926 = vadd.f32 %v2889, %v2918
    %v2927 = vadd.f32 %v2890, %v2919
    %v2928 = vadd.f32 %v2891, %v2920
    %v2929 = vadd.f32 %v2892, %v2921
    %v2930 = vrot.slane %v2188, 2
    %v2931 = vrot.slane %v2189, 2
    %v2932 = vrot.slane %v2190, 2
    %v2933 = vrot.slane %v2191, 2
    %v2934 = vrot.slane %v2192, 2
    %v2935 = vrot.slane %v2193, 2
    %v2936 = vrot.slane %v2194, 2
    %v2937 = vrot.slane %v2195, 2
    %v2938 = vsel %vm793, %v2936, %v2937
    %v2939 = vsel %vm793, %v2935, %v2936
    %v2940 = vsel %vm793, %v2934, %v2935
    %v2941 = vsel %vm793, %v2933, %v2934
    %v2942 = vsel %vm793, %v2932, %v2933
    %v2943 = vsel %vm793, %v2931, %v2932
    %v2944 = vsel %vm793, %v2930, %v2931
    %v2945 = vsel %vm793, %v2937, %v2930
    %s2946 = scalar_lea.vmem [#allocation5], 92
    %v2947 = vld [vmem:[%s2946] sm:$0x1]
    %v2949 = vperm.slane %v2947, 0
    %v2951 = vmul.f32 %v2945, %v2949
    %v2952 = vmul.f32 %v2944, %v2949
    %v2953 = vmul.f32 %v2943, %v2949
    %v2954 = vmul.f32 %v2942, %v2949
    %v2955 = vmul.f32 %v2941, %v2949
    %v2956 = vmul.f32 %v2940, %v2949
    %v2957 = vmul.f32 %v2939, %v2949
    %v2958 = vmul.f32 %v2938, %v2949
    %v2959 = vadd.f32 %v2922, %v2951
    %v2960 = vadd.f32 %v2923, %v2952
    %v2961 = vadd.f32 %v2924, %v2953
    %v2962 = vadd.f32 %v2925, %v2954
    %v2963 = vadd.f32 %v2926, %v2955
    %v2964 = vadd.f32 %v2927, %v2956
    %v2965 = vadd.f32 %v2928, %v2957
    %v2966 = vadd.f32 %v2929, %v2958
    %v2967 = vrot.slane %v2188, 3
    %v2968 = vrot.slane %v2189, 3
    %v2969 = vrot.slane %v2190, 3
    %v2970 = vrot.slane %v2191, 3
    %v2971 = vrot.slane %v2192, 3
    %v2972 = vrot.slane %v2193, 3
    %v2973 = vrot.slane %v2194, 3
    %v2974 = vrot.slane %v2195, 3
    %v2975 = vsel %vm2424, %v2973, %v2974
    %v2976 = vsel %vm2424, %v2972, %v2973
    %v2977 = vsel %vm2424, %v2971, %v2972
    %v2978 = vsel %vm2424, %v2970, %v2971
    %v2979 = vsel %vm2424, %v2969, %v2970
    %v2980 = vsel %vm2424, %v2968, %v2969
    %v2981 = vsel %vm2424, %v2967, %v2968
    %v2982 = vsel %vm2424, %v2974, %v2967
    %s2983 = scalar_lea.vmem [#allocation5], 93
    %v2984 = vld [vmem:[%s2983] sm:$0x1]
    %v2986 = vperm.slane %v2984, 0
    %v2988 = vmul.f32 %v2982, %v2986
    %v2989 = vmul.f32 %v2981, %v2986
    %v2990 = vmul.f32 %v2980, %v2986
    %v2991 = vmul.f32 %v2979, %v2986
    %v2992 = vmul.f32 %v2978, %v2986
    %v2993 = vmul.f32 %v2977, %v2986
    %v2994 = vmul.f32 %v2976, %v2986
    %v2995 = vmul.f32 %v2975, %v2986
    %v2996 = vadd.f32 %v2959, %v2988
    %v2997 = vadd.f32 %v2960, %v2989
    %v2998 = vadd.f32 %v2961, %v2990
    %v2999 = vadd.f32 %v2962, %v2991
    %v3000 = vadd.f32 %v2963, %v2992
    %v3001 = vadd.f32 %v2964, %v2993
    %v3002 = vadd.f32 %v2965, %v2994
    %v3003 = vadd.f32 %v2966, %v2995
    %v3004 = vrot.slane %v2188, 4
    %v3005 = vrot.slane %v2189, 4
    %v3006 = vrot.slane %v2190, 4
    %v3007 = vrot.slane %v2191, 4
    %v3008 = vrot.slane %v2192, 4
    %v3009 = vrot.slane %v2193, 4
    %v3010 = vrot.slane %v2194, 4
    %v3011 = vrot.slane %v2195, 4
    %v3012 = vsel %vm2499, %v3010, %v3011
    %v3013 = vsel %vm2499, %v3009, %v3010
    %v3014 = vsel %vm2499, %v3008, %v3009
    %v3015 = vsel %vm2499, %v3007, %v3008
    %v3016 = vsel %vm2499, %v3006, %v3007
    %v3017 = vsel %vm2499, %v3005, %v3006
    %v3018 = vsel %vm2499, %v3004, %v3005
    %v3019 = vsel %vm2499, %v3011, %v3004
    %s3020 = scalar_lea.vmem [#allocation5], 94
    %v3021 = vld [vmem:[%s3020] sm:$0x1]
    %v3023 = vperm.slane %v3021, 0
    %v3025 = vmul.f32 %v3019, %v3023
    %v3026 = vmul.f32 %v3018, %v3023
    %v3027 = vmul.f32 %v3017, %v3023
    %v3028 = vmul.f32 %v3016, %v3023
    %v3029 = vmul.f32 %v3015, %v3023
    %v3030 = vmul.f32 %v3014, %v3023
    %v3031 = vmul.f32 %v3013, %v3023
    %v3032 = vmul.f32 %v3012, %v3023
    %v3033 = vadd.f32 %v2996, %v3025
    %v3034 = vadd.f32 %v2997, %v3026
    %v3035 = vadd.f32 %v2998, %v3027
    %v3036 = vadd.f32 %v2999, %v3028
    %v3037 = vadd.f32 %v3000, %v3029
    %v3038 = vadd.f32 %v3001, %v3030
    %v3039 = vadd.f32 %v3002, %v3031
    %v3040 = vadd.f32 %v3003, %v3032
    %v3041 = vrot.slane %v2188, 5
    %v3042 = vrot.slane %v2189, 5
    %v3043 = vrot.slane %v2190, 5
    %v3044 = vrot.slane %v2191, 5
    %v3045 = vrot.slane %v2192, 5
    %v3046 = vrot.slane %v2193, 5
    %v3047 = vrot.slane %v2194, 5
    %v3048 = vrot.slane %v2195, 5
    %v3049 = vsel %vm2217, %v3047, %v3048
    %v3050 = vsel %vm2217, %v3046, %v3047
    %v3051 = vsel %vm2217, %v3045, %v3046
    %v3052 = vsel %vm2217, %v3044, %v3045
    %v3053 = vsel %vm2217, %v3043, %v3044
    %v3054 = vsel %vm2217, %v3042, %v3043
    %v3055 = vsel %vm2217, %v3041, %v3042
    %v3056 = vsel %vm2217, %v3048, %v3041
    %s3057 = scalar_lea.vmem [#allocation5], 95
    %v3058 = vld [vmem:[%s3057] sm:$0x1]
    %v3060 = vperm.slane %v3058, 0
    %v3062 = vmul.f32 %v3056, %v3060
    %v3063 = vmul.f32 %v3055, %v3060
    %v3064 = vmul.f32 %v3054, %v3060
    %v3065 = vmul.f32 %v3053, %v3060
    %v3066 = vmul.f32 %v3052, %v3060
    %v3067 = vmul.f32 %v3051, %v3060
    %v3068 = vmul.f32 %v3050, %v3060
    %v3069 = vmul.f32 %v3049, %v3060
    %v3070 = vadd.f32 %v3033, %v3062
    %v3071 = vadd.f32 %v3034, %v3063
    %v3072 = vadd.f32 %v3035, %v3064
    %v3073 = vadd.f32 %v3036, %v3065
    %v3074 = vadd.f32 %v3037, %v3066
    %v3075 = vadd.f32 %v3038, %v3067
    %v3076 = vadd.f32 %v3039, %v3068
    %v3077 = vadd.f32 %v3040, %v3069
    %s3078 = scalar_lea.vmem [#allocation5], 96
    %v3079 = vld [vmem:[%s3078] sm:$0x1]
    %v3081 = vperm.slane %v3079, 0
    %v3083 = vmul.f32 %v2813, %v3081
    %v3084 = vmul.f32 %v2812, %v3081
    %v3085 = vmul.f32 %v2811, %v3081
    %v3086 = vmul.f32 %v2810, %v3081
    %v3087 = vmul.f32 %v2809, %v3081
    %v3088 = vmul.f32 %v2808, %v3081
    %v3089 = vmul.f32 %v2807, %v3081
    %v3090 = vmul.f32 %v2806, %v3081
    %v3091 = vadd.f32 %v3070, %v3083
    %v3092 = vadd.f32 %v3071, %v3084
    %v3093 = vadd.f32 %v3072, %v3085
    %v3094 = vadd.f32 %v3073, %v3086
    %v3095 = vadd.f32 %v3074, %v3087
    %v3096 = vadd.f32 %v3075, %v3088
    %v3097 = vadd.f32 %v3076, %v3089
    %v3098 = vadd.f32 %v3077, %v3090
    %s3099 = scalar_lea.vmem [#allocation5], 97
    %v3100 = vld [vmem:[%s3099] sm:$0x1]
    %v3102 = vperm.slane %v3100, 0
    %v3104 = vmul.f32 %v2850, %v3102
    %v3105 = vmul.f32 %v2849, %v3102
    %v3106 = vmul.f32 %v2848, %v3102
    %v3107 = vmul.f32 %v2847, %v3102
    %v3108 = vmul.f32 %v2846, %v3102
    %v3109 = vmul.f32 %v2845, %v3102
    %v3110 = vmul.f32 %v2844, %v3102
    %v3111 = vmul.f32 %v2843, %v3102
    %v3112 = vadd.f32 %v3091, %v3104
    %v3113 = vadd.f32 %v3092, %v3105
    %v3114 = vadd.f32 %v3093, %v3106
    %v3115 = vadd.f32 %v3094, %v3107
    %v3116 = vadd.f32 %v3095, %v3108
    %v3117 = vadd.f32 %v3096, %v3109
    %v3118 = vadd.f32 %v3097, %v3110
    %v3119 = vadd.f32 %v3098, %v3111
    %s3120 = scalar_lea.vmem [#allocation5], 98
    %v3121 = vld [vmem:[%s3120] sm:$0x1]
    %v3123 = vperm.slane %v3121, 0
    %v3125 = vmul.f32 %v2188, %v3123
    %v3126 = vmul.f32 %v2189, %v3123
    %v3127 = vmul.f32 %v2190, %v3123
    %v3128 = vmul.f32 %v2191, %v3123
    %v3129 = vmul.f32 %v2192, %v3123
    %v3130 = vmul.f32 %v2193, %v3123
    %v3131 = vmul.f32 %v2194, %v3123
    %v3132 = vmul.f32 %v2195, %v3123
    %v3133 = vadd.f32 %v3112, %v3125
    %v3134 = vadd.f32 %v3113, %v3126
    %v3135 = vadd.f32 %v3114, %v3127
    %v3136 = vadd.f32 %v3115, %v3128
    %v3137 = vadd.f32 %v3116, %v3129
    %v3138 = vadd.f32 %v3117, %v3130
    %v3139 = vadd.f32 %v3118, %v3131
    %v3140 = vadd.f32 %v3119, %v3132
    %s3141 = scalar_lea.vmem [#allocation5], 99
    %v3142 = vld [vmem:[%s3141] sm:$0x1]
    %v3144 = vperm.slane %v3142, 0
    %v3146 = vmul.f32 %v2907, %v3144
    %v3147 = vmul.f32 %v2906, %v3144
    %v3148 = vmul.f32 %v2905, %v3144
    %v3149 = vmul.f32 %v2904, %v3144
    %v3150 = vmul.f32 %v2903, %v3144
    %v3151 = vmul.f32 %v2902, %v3144
    %v3152 = vmul.f32 %v2901, %v3144
    %v3153 = vmul.f32 %v2908, %v3144
    %v3154 = vadd.f32 %v3133, %v3146
    %v3155 = vadd.f32 %v3134, %v3147
    %v3156 = vadd.f32 %v3135, %v3148
    %v3157 = vadd.f32 %v3136, %v3149
    %v3158 = vadd.f32 %v3137, %v3150
    %v3159 = vadd.f32 %v3138, %v3151
    %v3160 = vadd.f32 %v3139, %v3152
    %v3161 = vadd.f32 %v3140, %v3153
    %s3162 = scalar_lea.vmem [#allocation5], 100
    %v3163 = vld [vmem:[%s3162] sm:$0x1]
    %v3165 = vperm.slane %v3163, 0
    %v3167 = vmul.f32 %v2944, %v3165
    %v3168 = vmul.f32 %v2943, %v3165
    %v3169 = vmul.f32 %v2942, %v3165
    %v3170 = vmul.f32 %v2941, %v3165
    %v3171 = vmul.f32 %v2940, %v3165
    %v3172 = vmul.f32 %v2939, %v3165
    %v3173 = vmul.f32 %v2938, %v3165
    %v3174 = vmul.f32 %v2945, %v3165
    %v3175 = vadd.f32 %v3154, %v3167
    %v3176 = vadd.f32 %v3155, %v3168
    %v3177 = vadd.f32 %v3156, %v3169
    %v3178 = vadd.f32 %v3157, %v3170
    %v3179 = vadd.f32 %v3158, %v3171
    %v3180 = vadd.f32 %v3159, %v3172
    %v3181 = vadd.f32 %v3160, %v3173
    %v3182 = vadd.f32 %v3161, %v3174
    %s3183 = scalar_lea.vmem [#allocation5], 101
    %v3184 = vld [vmem:[%s3183] sm:$0x1]
    %v3186 = vperm.slane %v3184, 0
    %v3188 = vmul.f32 %v2981, %v3186
    %v3189 = vmul.f32 %v2980, %v3186
    %v3190 = vmul.f32 %v2979, %v3186
    %v3191 = vmul.f32 %v2978, %v3186
    %v3192 = vmul.f32 %v2977, %v3186
    %v3193 = vmul.f32 %v2976, %v3186
    %v3194 = vmul.f32 %v2975, %v3186
    %v3195 = vmul.f32 %v2982, %v3186
    %v3196 = vadd.f32 %v3175, %v3188
    %v3197 = vadd.f32 %v3176, %v3189
    %v3198 = vadd.f32 %v3177, %v3190
    %v3199 = vadd.f32 %v3178, %v3191
    %v3200 = vadd.f32 %v3179, %v3192
    %v3201 = vadd.f32 %v3180, %v3193
    %v3202 = vadd.f32 %v3181, %v3194
    %v3203 = vadd.f32 %v3182, %v3195
    %s3204 = scalar_lea.vmem [#allocation5], 102
    %v3205 = vld [vmem:[%s3204] sm:$0x1]
    %v3207 = vperm.slane %v3205, 0
    %v3209 = vmul.f32 %v3018, %v3207
    %v3210 = vmul.f32 %v3017, %v3207
    %v3211 = vmul.f32 %v3016, %v3207
    %v3212 = vmul.f32 %v3015, %v3207
    %v3213 = vmul.f32 %v3014, %v3207
    %v3214 = vmul.f32 %v3013, %v3207
    %v3215 = vmul.f32 %v3012, %v3207
    %v3216 = vmul.f32 %v3019, %v3207
    %v3217 = vadd.f32 %v3196, %v3209
    %v3218 = vadd.f32 %v3197, %v3210
    %v3219 = vadd.f32 %v3198, %v3211
    %v3220 = vadd.f32 %v3199, %v3212
    %v3221 = vadd.f32 %v3200, %v3213
    %v3222 = vadd.f32 %v3201, %v3214
    %v3223 = vadd.f32 %v3202, %v3215
    %v3224 = vadd.f32 %v3203, %v3216
    %s3225 = scalar_lea.vmem [#allocation5], 103
    %v3226 = vld [vmem:[%s3225] sm:$0x1]
    %v3228 = vperm.slane %v3226, 0
    %v3230 = vmul.f32 %v3055, %v3228
    %v3231 = vmul.f32 %v3054, %v3228
    %v3232 = vmul.f32 %v3053, %v3228
    %v3233 = vmul.f32 %v3052, %v3228
    %v3234 = vmul.f32 %v3051, %v3228
    %v3235 = vmul.f32 %v3050, %v3228
    %v3236 = vmul.f32 %v3049, %v3228
    %v3237 = vmul.f32 %v3056, %v3228
    %v3238 = vadd.f32 %v3217, %v3230
    %v3239 = vadd.f32 %v3218, %v3231
    %v3240 = vadd.f32 %v3219, %v3232
    %v3241 = vadd.f32 %v3220, %v3233
    %v3242 = vadd.f32 %v3221, %v3234
    %v3243 = vadd.f32 %v3222, %v3235
    %v3244 = vadd.f32 %v3223, %v3236
    %v3245 = vadd.f32 %v3224, %v3237
    %s3246 = scalar_lea.vmem [#allocation5], 104
    %v3247 = vld [vmem:[%s3246] sm:$0x1]
    %v3249 = vperm.slane %v3247, 0
    %v3251 = vmul.f32 %v2812, %v3249
    %v3252 = vmul.f32 %v2811, %v3249
    %v3253 = vmul.f32 %v2810, %v3249
    %v3254 = vmul.f32 %v2809, %v3249
    %v3255 = vmul.f32 %v2808, %v3249
    %v3256 = vmul.f32 %v2807, %v3249
    %v3257 = vmul.f32 %v2806, %v3249
    %v3258 = vmul.f32 %v2813, %v3249
    %v3259 = vadd.f32 %v3238, %v3251
    %v3260 = vadd.f32 %v3239, %v3252
    %v3261 = vadd.f32 %v3240, %v3253
    %v3262 = vadd.f32 %v3241, %v3254
    %v3263 = vadd.f32 %v3242, %v3255
    %v3264 = vadd.f32 %v3243, %v3256
    %v3265 = vadd.f32 %v3244, %v3257
    %v3266 = vadd.f32 %v3245, %v3258
    %s3267 = scalar_lea.vmem [#allocation5], 105
    %v3268 = vld [vmem:[%s3267] sm:$0x1]
    %v3270 = vperm.slane %v3268, 0
    %v3272 = vmul.f32 %v2849, %v3270
    %v3273 = vmul.f32 %v2848, %v3270
    %v3274 = vmul.f32 %v2847, %v3270
    %v3275 = vmul.f32 %v2846, %v3270
    %v3276 = vmul.f32 %v2845, %v3270
    %v3277 = vmul.f32 %v2844, %v3270
    %v3278 = vmul.f32 %v2843, %v3270
    %v3279 = vmul.f32 %v2850, %v3270
    %v3280 = vadd.f32 %v3259, %v3272
    %v3281 = vadd.f32 %v3260, %v3273
    %v3282 = vadd.f32 %v3261, %v3274
    %v3283 = vadd.f32 %v3262, %v3275
    %v3284 = vadd.f32 %v3263, %v3276
    %v3285 = vadd.f32 %v3264, %v3277
    %v3286 = vadd.f32 %v3265, %v3278
    %v3287 = vadd.f32 %v3266, %v3279
    %s3288 = scalar_lea.vmem [#allocation5], 106
    %v3289 = vld [vmem:[%s3288] sm:$0x1]
    %v3291 = vperm.slane %v3289, 0
    %v3293 = vmul.f32 %v2189, %v3291
    %v3294 = vmul.f32 %v2190, %v3291
    %v3295 = vmul.f32 %v2191, %v3291
    %v3296 = vmul.f32 %v2192, %v3291
    %v3297 = vmul.f32 %v2193, %v3291
    %v3298 = vmul.f32 %v2194, %v3291
    %v3299 = vmul.f32 %v2195, %v3291
    %v3300 = vmul.f32 %v2188, %v3291
    %v3301 = vadd.f32 %v3280, %v3293
    %v3302 = vadd.f32 %v3281, %v3294
    %v3303 = vadd.f32 %v3282, %v3295
    %v3304 = vadd.f32 %v3283, %v3296
    %v3305 = vadd.f32 %v3284, %v3297
    %v3306 = vadd.f32 %v3285, %v3298
    %v3307 = vadd.f32 %v3286, %v3299
    %v3308 = vadd.f32 %v3287, %v3300
    %s3309 = scalar_lea.vmem [#allocation5], 107
    %v3310 = vld [vmem:[%s3309] sm:$0x1]
    %v3312 = vperm.slane %v3310, 0
    %v3314 = vmul.f32 %v2906, %v3312
    %v3315 = vmul.f32 %v2905, %v3312
    %v3316 = vmul.f32 %v2904, %v3312
    %v3317 = vmul.f32 %v2903, %v3312
    %v3318 = vmul.f32 %v2902, %v3312
    %v3319 = vmul.f32 %v2901, %v3312
    %v3320 = vmul.f32 %v2908, %v3312
    %v3321 = vmul.f32 %v2907, %v3312
    %v3322 = vadd.f32 %v3301, %v3314
    %v3323 = vadd.f32 %v3302, %v3315
    %v3324 = vadd.f32 %v3303, %v3316
    %v3325 = vadd.f32 %v3304, %v3317
    %v3326 = vadd.f32 %v3305, %v3318
    %v3327 = vadd.f32 %v3306, %v3319
    %v3328 = vadd.f32 %v3307, %v3320
    %v3329 = vadd.f32 %v3308, %v3321
    %s3330 = scalar_lea.vmem [#allocation5], 108
    %v3331 = vld [vmem:[%s3330] sm:$0x1]
    %v3333 = vperm.slane %v3331, 0
    %v3335 = vmul.f32 %v2943, %v3333
    %v3336 = vmul.f32 %v2942, %v3333
    %v3337 = vmul.f32 %v2941, %v3333
    %v3338 = vmul.f32 %v2940, %v3333
    %v3339 = vmul.f32 %v2939, %v3333
    %v3340 = vmul.f32 %v2938, %v3333
    %v3341 = vmul.f32 %v2945, %v3333
    %v3342 = vmul.f32 %v2944, %v3333
    %v3343 = vadd.f32 %v3322, %v3335
    %v3344 = vadd.f32 %v3323, %v3336
    %v3345 = vadd.f32 %v3324, %v3337
    %v3346 = vadd.f32 %v3325, %v3338
    %v3347 = vadd.f32 %v3326, %v3339
    %v3348 = vadd.f32 %v3327, %v3340
    %v3349 = vadd.f32 %v3328, %v3341
    %v3350 = vadd.f32 %v3329, %v3342
    %s3351 = scalar_lea.vmem [#allocation5], 5
    %v3352 = vld [vmem:[%s3351] sm:$0x1]
    %3353 = vrot.lane.b32.xlu0 %v3343, 3
    %v3354 = vpop.permute.xlu0 %3353
    %3355 = vrot.lane.b32.xlu0 %v3344, 3
    %v3356 = vpop.permute.xlu0 %3355
    %3357 = vrot.lane.b32.xlu0 %v3345, 3
    %v3358 = vpop.permute.xlu0 %3357
    %3359 = vrot.lane.b32.xlu0 %v3346, 3
    %v3360 = vpop.permute.xlu0 %3359
    %3361 = vrot.lane.b32.xlu0 %v3347, 3
    %v3362 = vpop.permute.xlu0 %3361
    %3363 = vrot.lane.b32.xlu0 %v3348, 3
    %v3364 = vpop.permute.xlu0 %3363
    %3365 = vrot.lane.b32.xlu0 %v3349, 3
    %v3366 = vpop.permute.xlu0 %3365
    %3367 = vrot.lane.b32.xlu0 %v3350, 3
    %v3368 = vpop.permute.xlu0 %3367
    %s3369 = scalar_lea.vmem [#allocation5], 109
    %v3370 = vld [vmem:[%s3369] sm:$0x1]
    %v3372 = vperm.slane %v3370, 0
    %v3374 = vmul.f32 %v3354, %v3372
    %v3375 = vmul.f32 %v3356, %v3372
    %v3376 = vmul.f32 %v3358, %v3372
    %v3377 = vmul.f32 %v3360, %v3372
    %v3378 = vmul.f32 %v3362, %v3372
    %v3379 = vmul.f32 %v3364, %v3372
    %v3380 = vmul.f32 %v3366, %v3372
    %v3381 = vmul.f32 %v3368, %v3372
    %v3383 = vperm.slane %v3352, 0
    %v3385 = vadd.f32 %v3383, %v3374
    %v3386 = vadd.f32 %v3383, %v3375
    %v3387 = vadd.f32 %v3383, %v3376
    %v3388 = vadd.f32 %v3383, %v3377
    %v3389 = vadd.f32 %v3383, %v3378
    %v3390 = vadd.f32 %v3383, %v3379
    %v3391 = vadd.f32 %v3383, %v3380
    %v3392 = vadd.f32 %v3383, %v3381
    %3393 = vrot.lane.b32.xlu0 %v3343, 2
    %v3394 = vpop.permute.xlu0 %3393
    %3395 = vrot.lane.b32.xlu0 %v3344, 2
    %v3396 = vpop.permute.xlu0 %3395
    %3397 = vrot.lane.b32.xlu0 %v3345, 2
    %v3398 = vpop.permute.xlu0 %3397
    %3399 = vrot.lane.b32.xlu0 %v3346, 2
    %v3400 = vpop.permute.xlu0 %3399
    %3401 = vrot.lane.b32.xlu0 %v3347, 2
    %v3402 = vpop.permute.xlu0 %3401
    %3403 = vrot.lane.b32.xlu0 %v3348, 2
    %v3404 = vpop.permute.xlu0 %3403
    %3405 = vrot.lane.b32.xlu0 %v3349, 2
    %v3406 = vpop.permute.xlu0 %3405
    %3407 = vrot.lane.b32.xlu0 %v3350, 2
    %v3408 = vpop.permute.xlu0 %3407
    %s3409 = scalar_lea.vmem [#allocation5], 110
    %v3410 = vld [vmem:[%s3409] sm:$0x1]
    %v3412 = vperm.slane %v3410, 0
    %v3414 = vmul.f32 %v3394, %v3412
    %v3415 = vmul.f32 %v3396, %v3412
    %v3416 = vmul.f32 %v3398, %v3412
    %v3417 = vmul.f32 %v3400, %v3412
    %v3418 = vmul.f32 %v3402, %v3412
    %v3419 = vmul.f32 %v3404, %v3412
    %v3420 = vmul.f32 %v3406, %v3412
    %v3421 = vmul.f32 %v3408, %v3412
    %v3422 = vadd.f32 %v3385, %v3414
    %v3423 = vadd.f32 %v3386, %v3415
    %v3424 = vadd.f32 %v3387, %v3416
    %v3425 = vadd.f32 %v3388, %v3417
    %v3426 = vadd.f32 %v3389, %v3418
    %v3427 = vadd.f32 %v3390, %v3419
    %v3428 = vadd.f32 %v3391, %v3420
    %v3429 = vadd.f32 %v3392, %v3421
    %3430 = vrot.lane.b32.xlu0 %v3343, 1
    %v3431 = vpop.permute.xlu0 %3430
    %3432 = vrot.lane.b32.xlu0 %v3344, 1
    %v3433 = vpop.permute.xlu0 %3432
    %3434 = vrot.lane.b32.xlu0 %v3345, 1
    %v3435 = vpop.permute.xlu0 %3434
    %3436 = vrot.lane.b32.xlu0 %v3346, 1
    %v3437 = vpop.permute.xlu0 %3436
    %3438 = vrot.lane.b32.xlu0 %v3347, 1
    %v3439 = vpop.permute.xlu0 %3438
    %3440 = vrot.lane.b32.xlu0 %v3348, 1
    %v3441 = vpop.permute.xlu0 %3440
    %3442 = vrot.lane.b32.xlu0 %v3349, 1
    %v3443 = vpop.permute.xlu0 %3442
    %3444 = vrot.lane.b32.xlu0 %v3350, 1
    %v3445 = vpop.permute.xlu0 %3444
    %s3446 = scalar_lea.vmem [#allocation5], 111
    %v3447 = vld [vmem:[%s3446] sm:$0x1]
    %v3449 = vperm.slane %v3447, 0
    %v3451 = vmul.f32 %v3431, %v3449
    %v3452 = vmul.f32 %v3433, %v3449
    %v3453 = vmul.f32 %v3435, %v3449
    %v3454 = vmul.f32 %v3437, %v3449
    %v3455 = vmul.f32 %v3439, %v3449
    %v3456 = vmul.f32 %v3441, %v3449
    %v3457 = vmul.f32 %v3443, %v3449
    %v3458 = vmul.f32 %v3445, %v3449
    %v3459 = vadd.f32 %v3422, %v3451
    %v3460 = vadd.f32 %v3423, %v3452
    %v3461 = vadd.f32 %v3424, %v3453
    %v3462 = vadd.f32 %v3425, %v3454
    %v3463 = vadd.f32 %v3426, %v3455
    %v3464 = vadd.f32 %v3427, %v3456
    %v3465 = vadd.f32 %v3428, %v3457
    %v3466 = vadd.f32 %v3429, %v3458
    %s3467 = scalar_lea.vmem [#allocation5], 112
    %v3468 = vld [vmem:[%s3467] sm:$0x1]
    %v3470 = vperm.slane %v3468, 0
    %v3472 = vmul.f32 %v3343, %v3470
    %v3473 = vmul.f32 %v3344, %v3470
    %v3474 = vmul.f32 %v3345, %v3470
    %v3475 = vmul.f32 %v3346, %v3470
    %v3476 = vmul.f32 %v3347, %v3470
    %v3477 = vmul.f32 %v3348, %v3470
    %v3478 = vmul.f32 %v3349, %v3470
    %v3479 = vmul.f32 %v3350, %v3470
    %v3480 = vadd.f32 %v3459, %v3472
    %v3481 = vadd.f32 %v3460, %v3473
    %v3482 = vadd.f32 %v3461, %v3474
    %v3483 = vadd.f32 %v3462, %v3475
    %v3484 = vadd.f32 %v3463, %v3476
    %v3485 = vadd.f32 %v3464, %v3477
    %v3486 = vadd.f32 %v3465, %v3478
    %v3487 = vadd.f32 %v3466, %v3479
    %3488 = vrot.lane.b32.xlu0 %v3343, 127
    %v3489 = vpop.permute.xlu0 %3488
    %3490 = vrot.lane.b32.xlu0 %v3344, 127
    %v3491 = vpop.permute.xlu0 %3490
    %3492 = vrot.lane.b32.xlu0 %v3345, 127
    %v3493 = vpop.permute.xlu0 %3492
    %3494 = vrot.lane.b32.xlu0 %v3346, 127
    %v3495 = vpop.permute.xlu0 %3494
    %3496 = vrot.lane.b32.xlu0 %v3347, 127
    %v3497 = vpop.permute.xlu0 %3496
    %3498 = vrot.lane.b32.xlu0 %v3348, 127
    %v3499 = vpop.permute.xlu0 %3498
    %3500 = vrot.lane.b32.xlu0 %v3349, 127
    %v3501 = vpop.permute.xlu0 %3500
    %3502 = vrot.lane.b32.xlu0 %v3350, 127
    %v3503 = vpop.permute.xlu0 %3502
    %s3504 = scalar_lea.vmem [#allocation5], 113
    %v3505 = vld [vmem:[%s3504] sm:$0x1]
    %v3507 = vperm.slane %v3505, 0
    %v3509 = vmul.f32 %v3489, %v3507
    %v3510 = vmul.f32 %v3491, %v3507
    %v3511 = vmul.f32 %v3493, %v3507
    %v3512 = vmul.f32 %v3495, %v3507
    %v3513 = vmul.f32 %v3497, %v3507
    %v3514 = vmul.f32 %v3499, %v3507
    %v3515 = vmul.f32 %v3501, %v3507
    %v3516 = vmul.f32 %v3503, %v3507
    %v3517 = vadd.f32 %v3480, %v3509
    %v3518 = vadd.f32 %v3481, %v3510
    %v3519 = vadd.f32 %v3482, %v3511
    %v3520 = vadd.f32 %v3483, %v3512
    %v3521 = vadd.f32 %v3484, %v3513
    %v3522 = vadd.f32 %v3485, %v3514
    %v3523 = vadd.f32 %v3486, %v3515
    %v3524 = vadd.f32 %v3487, %v3516
    %3525 = vrot.lane.b32.xlu0 %v3343, 126
    %v3526 = vpop.permute.xlu0 %3525
    %3527 = vrot.lane.b32.xlu0 %v3344, 126
    %v3528 = vpop.permute.xlu0 %3527
    %3529 = vrot.lane.b32.xlu0 %v3345, 126
    %v3530 = vpop.permute.xlu0 %3529
    %3531 = vrot.lane.b32.xlu0 %v3346, 126
    %v3532 = vpop.permute.xlu0 %3531
    %3533 = vrot.lane.b32.xlu0 %v3347, 126
    %v3534 = vpop.permute.xlu0 %3533
    %3535 = vrot.lane.b32.xlu0 %v3348, 126
    %v3536 = vpop.permute.xlu0 %3535
    %3537 = vrot.lane.b32.xlu0 %v3349, 126
    %v3538 = vpop.permute.xlu0 %3537
    %3539 = vrot.lane.b32.xlu0 %v3350, 126
    %v3540 = vpop.permute.xlu0 %3539
    %s3541 = scalar_lea.vmem [#allocation5], 114
    %v3542 = vld [vmem:[%s3541] sm:$0x1]
    %v3544 = vperm.slane %v3542, 0
    %v3546 = vmul.f32 %v3526, %v3544
    %v3547 = vmul.f32 %v3528, %v3544
    %v3548 = vmul.f32 %v3530, %v3544
    %v3549 = vmul.f32 %v3532, %v3544
    %v3550 = vmul.f32 %v3534, %v3544
    %v3551 = vmul.f32 %v3536, %v3544
    %v3552 = vmul.f32 %v3538, %v3544
    %v3553 = vmul.f32 %v3540, %v3544
    %v3554 = vadd.f32 %v3517, %v3546
    %v3555 = vadd.f32 %v3518, %v3547
    %v3556 = vadd.f32 %v3519, %v3548
    %v3557 = vadd.f32 %v3520, %v3549
    %v3558 = vadd.f32 %v3521, %v3550
    %v3559 = vadd.f32 %v3522, %v3551
    %v3560 = vadd.f32 %v3523, %v3552
    %v3561 = vadd.f32 %v3524, %v3553
    %3562 = vrot.lane.b32.xlu0 %v3343, 125
    %v3563 = vpop.permute.xlu0 %3562
    %3564 = vrot.lane.b32.xlu0 %v3344, 125
    %v3565 = vpop.permute.xlu0 %3564
    %3566 = vrot.lane.b32.xlu0 %v3345, 125
    %v3567 = vpop.permute.xlu0 %3566
    %3568 = vrot.lane.b32.xlu0 %v3346, 125
    %v3569 = vpop.permute.xlu0 %3568
    %3570 = vrot.lane.b32.xlu0 %v3347, 125
    %v3571 = vpop.permute.xlu0 %3570
    %3572 = vrot.lane.b32.xlu0 %v3348, 125
    %v3573 = vpop.permute.xlu0 %3572
    %3574 = vrot.lane.b32.xlu0 %v3349, 125
    %v3575 = vpop.permute.xlu0 %3574
    %3576 = vrot.lane.b32.xlu0 %v3350, 125
    %v3577 = vpop.permute.xlu0 %3576
    %s3578 = scalar_lea.vmem [#allocation5], 115
    %v3579 = vld [vmem:[%s3578] sm:$0x1]
    %v3581 = vperm.slane %v3579, 0
    %v3583 = vmul.f32 %v3563, %v3581
    %v3584 = vmul.f32 %v3565, %v3581
    %v3585 = vmul.f32 %v3567, %v3581
    %v3586 = vmul.f32 %v3569, %v3581
    %v3587 = vmul.f32 %v3571, %v3581
    %v3588 = vmul.f32 %v3573, %v3581
    %v3589 = vmul.f32 %v3575, %v3581
    %v3590 = vmul.f32 %v3577, %v3581
    %v3591 = vadd.f32 %v3554, %v3583
    %v3592 = vadd.f32 %v3555, %v3584
    %v3593 = vadd.f32 %v3556, %v3585
    %v3594 = vadd.f32 %v3557, %v3586
    %v3595 = vadd.f32 %v3558, %v3587
    %v3596 = vadd.f32 %v3559, %v3588
    %v3597 = vadd.f32 %v3560, %v3589
    %v3598 = vadd.f32 %v3561, %v3590
    %v3599 = vxor.u32 %v3591, 2147483648
    %v3600 = vxor.u32 %v3592, 2147483648
    %v3601 = vxor.u32 %v3593, 2147483648
    %v3602 = vxor.u32 %v3594, 2147483648
    %v3603 = vxor.u32 %v3595, 2147483648
    %v3604 = vxor.u32 %v3596, 2147483648
    %v3605 = vxor.u32 %v3597, 2147483648
    %v3606 = vxor.u32 %v3598, 2147483648
    %v3607 = vmul.f32 %v3599, 1.442695
    %v3608 = vpow.pop %v3607
    %v3609 = vmul.f32 %v3600, 1.442695
    %v3610 = vpow.pop %v3609
    %v3611 = vmul.f32 %v3601, 1.442695
    %v3612 = vpow.pop %v3611
    %v3613 = vmul.f32 %v3602, 1.442695
    %v3614 = vpow.pop %v3613
    %v3615 = vmul.f32 %v3603, 1.442695
    %v3616 = vpow.pop %v3615
    %v3617 = vmul.f32 %v3604, 1.442695
    %v3618 = vpow.pop %v3617
    %v3619 = vmul.f32 %v3605, 1.442695
    %v3620 = vpow.pop %v3619
    %v3621 = vmul.f32 %v3606, 1.442695
    %v3622 = vpow.pop %v3621
    %v3623 = vadd.f32 %v3608, 1.0
    %v3624 = vadd.f32 %v3610, 1.0
    %v3625 = vadd.f32 %v3612, 1.0
    %v3626 = vadd.f32 %v3614, 1.0
    %v3627 = vadd.f32 %v3616, 1.0
    %v3628 = vadd.f32 %v3618, 1.0
    %v3629 = vadd.f32 %v3620, 1.0
    %v3630 = vadd.f32 %v3622, 1.0
    %v3631 = vrcp.pop %v3623
    %v3632 = vmul.f32 %v3623, %v3631
    %v3633 = vsub.f32 1.0, %v3632
    %v3634 = vmul.f32 %v3631, %v3633
    %v3635 = vadd.f32 %v3631, %v3634
    %vm3636 = vweird.f32 %v3623
    %vm3637 = vweird.f32 %v3631
    %vm3638 = vmor %vm3636, %vm3637
    %v3639 = vsel %vm3638, %v3631, %v3635
    %v3640 = vand.u32 2147483647, %v3623
    %vm3641 = vcmp.eq.f32.partialorder %v3640, 8.507059e+37
    %v3642 = vand.u32 %v3623, 2147483648
    %v3643 = vor.u32 1.1754944e-38, %v3642
    %v3644 = vsel %vm3641, %v3643, %v3639
    %v3645 = vmul.f32 1.0, %v3644
    %v3646 = vrcp.pop %v3624
    %v3647 = vmul.f32 %v3624, %v3646
    %v3648 = vsub.f32 1.0, %v3647
    %v3649 = vmul.f32 %v3646, %v3648
    %v3650 = vadd.f32 %v3646, %v3649
    %vm3651 = vweird.f32 %v3624
    %vm3652 = vweird.f32 %v3646
    %vm3653 = vmor %vm3651, %vm3652
    %v3654 = vsel %vm3653, %v3646, %v3650
    %v3655 = vand.u32 2147483647, %v3624
    %vm3656 = vcmp.eq.f32.partialorder %v3655, 8.507059e+37
    %v3657 = vand.u32 %v3624, 2147483648
    %v3658 = vor.u32 1.1754944e-38, %v3657
    %v3659 = vsel %vm3656, %v3658, %v3654
    %v3660 = vmul.f32 1.0, %v3659
    %v3661 = vrcp.pop %v3625
    %v3662 = vmul.f32 %v3625, %v3661
    %v3663 = vsub.f32 1.0, %v3662
    %v3664 = vmul.f32 %v3661, %v3663
    %v3665 = vadd.f32 %v3661, %v3664
    %vm3666 = vweird.f32 %v3625
    %vm3667 = vweird.f32 %v3661
    %vm3668 = vmor %vm3666, %vm3667
    %v3669 = vsel %vm3668, %v3661, %v3665
    %v3670 = vand.u32 2147483647, %v3625
    %vm3671 = vcmp.eq.f32.partialorder %v3670, 8.507059e+37
    %v3672 = vand.u32 %v3625, 2147483648
    %v3673 = vor.u32 1.1754944e-38, %v3672
    %v3674 = vsel %vm3671, %v3673, %v3669
    %v3675 = vmul.f32 1.0, %v3674
    %v3676 = vrcp.pop %v3626
    %v3677 = vmul.f32 %v3626, %v3676
    %v3678 = vsub.f32 1.0, %v3677
    %v3679 = vmul.f32 %v3676, %v3678
    %v3680 = vadd.f32 %v3676, %v3679
    %vm3681 = vweird.f32 %v3626
    %vm3682 = vweird.f32 %v3676
    %vm3683 = vmor %vm3681, %vm3682
    %v3684 = vsel %vm3683, %v3676, %v3680
    %v3685 = vand.u32 2147483647, %v3626
    %vm3686 = vcmp.eq.f32.partialorder %v3685, 8.507059e+37
    %v3687 = vand.u32 %v3626, 2147483648
    %v3688 = vor.u32 1.1754944e-38, %v3687
    %v3689 = vsel %vm3686, %v3688, %v3684
    %v3690 = vmul.f32 1.0, %v3689
    %v3691 = vrcp.pop %v3627
    %v3692 = vmul.f32 %v3627, %v3691
    %v3693 = vsub.f32 1.0, %v3692
    %v3694 = vmul.f32 %v3691, %v3693
    %v3695 = vadd.f32 %v3691, %v3694
    %vm3696 = vweird.f32 %v3627
    %vm3697 = vweird.f32 %v3691
    %vm3698 = vmor %vm3696, %vm3697
    %v3699 = vsel %vm3698, %v3691, %v3695
    %v3700 = vand.u32 2147483647, %v3627
    %vm3701 = vcmp.eq.f32.partialorder %v3700, 8.507059e+37
    %v3702 = vand.u32 %v3627, 2147483648
    %v3703 = vor.u32 1.1754944e-38, %v3702
    %v3704 = vsel %vm3701, %v3703, %v3699
    %v3705 = vmul.f32 1.0, %v3704
    %v3706 = vrcp.pop %v3628
    %v3707 = vmul.f32 %v3628, %v3706
    %v3708 = vsub.f32 1.0, %v3707
    %v3709 = vmul.f32 %v3706, %v3708
    %v3710 = vadd.f32 %v3706, %v3709
    %vm3711 = vweird.f32 %v3628
    %vm3712 = vweird.f32 %v3706
    %vm3713 = vmor %vm3711, %vm3712
    %v3714 = vsel %vm3713, %v3706, %v3710
    %v3715 = vand.u32 2147483647, %v3628
    %vm3716 = vcmp.eq.f32.partialorder %v3715, 8.507059e+37
    %v3717 = vand.u32 %v3628, 2147483648
    %v3718 = vor.u32 1.1754944e-38, %v3717
    %v3719 = vsel %vm3716, %v3718, %v3714
    %v3720 = vmul.f32 1.0, %v3719
    %v3721 = vrcp.pop %v3629
    %v3722 = vmul.f32 %v3629, %v3721
    %v3723 = vsub.f32 1.0, %v3722
    %v3724 = vmul.f32 %v3721, %v3723
    %v3725 = vadd.f32 %v3721, %v3724
    %vm3726 = vweird.f32 %v3629
    %vm3727 = vweird.f32 %v3721
    %vm3728 = vmor %vm3726, %vm3727
    %v3729 = vsel %vm3728, %v3721, %v3725
    %v3730 = vand.u32 2147483647, %v3629
    %vm3731 = vcmp.eq.f32.partialorder %v3730, 8.507059e+37
    %v3732 = vand.u32 %v3629, 2147483648
    %v3733 = vor.u32 1.1754944e-38, %v3732
    %v3734 = vsel %vm3731, %v3733, %v3729
    %v3735 = vmul.f32 1.0, %v3734
    %v3736 = vrcp.pop %v3630
    %v3737 = vmul.f32 %v3630, %v3736
    %v3738 = vsub.f32 1.0, %v3737
    %v3739 = vmul.f32 %v3736, %v3738
    %v3740 = vadd.f32 %v3736, %v3739
    %vm3741 = vweird.f32 %v3630
    %vm3742 = vweird.f32 %v3736
    %vm3743 = vmor %vm3741, %vm3742
    %v3744 = vsel %vm3743, %v3736, %v3740
    %v3745 = vand.u32 2147483647, %v3630
    %vm3746 = vcmp.eq.f32.partialorder %v3745, 8.507059e+37
    %v3747 = vand.u32 %v3630, 2147483648
    %v3748 = vor.u32 1.1754944e-38, %v3747
    %v3749 = vsel %vm3746, %v3748, %v3744
    %v3750 = vmul.f32 1.0, %v3749
    %3751 = vst [vmem:[#allocation7] sm:$0xff] %v3645
    %3752 = vst [vmem:[#allocation7 + $0x8] sm:$0xff] %v3660
    %3753 = vst [vmem:[#allocation7 + $0x10] sm:$0xff] %v3675
    %3754 = vst [vmem:[#allocation7 + $0x18] sm:$0xff] %v3690
    %3755 = vst [vmem:[#allocation7 + $0x20] sm:$0xff] %v3705
    %3756 = vst [vmem:[#allocation7 + $0x28] sm:$0xff] %v3720
    %3757 = vst [vmem:[#allocation7 + $0x30] sm:$0xff] %v3735
    %3758 = vst [vmem:[#allocation7 + $0x38] sm:$0xff] %v3750
    // Predicated region
    $region18: #{tpu_custom_call.1} parent=1 // pred_check
      _
    $region19: #{tpu_custom_call.1} parent=1 // pred_check_branch
      %3760 = sbr.rel (0) target = $region21
    $region20: #{tpu_custom_call.1} parent=1 // pred_region
      %3762 = vsyncadd [#allocation4], 0
      %s3763 = sshll.u32 [#allocation7], 4
      %s3764 = int_to_ptr.vmem [resolvable:$true] %s3763
      %s3765 = sshll.u32 %s2, 4
      %s3766 = int_to_ptr.hbm [resolvable:$true] %s3765
      %3771 = dma.vmem_to_hbm [thread:$0]  %s3764, 1024, %s3766, [#allocation4], 128, 128, 8
    $region21: #{tpu_custom_call.1} parent=1 // pred_fallthru
      _
    // Predicated region
    $region22: #{tpu_custom_call.1} parent=1 // pred_check
      _
    $region23: #{tpu_custom_call.1} parent=1 // pred_check_branch
      %3773 = sbr.rel (0) target = $region25
    $region24: #{tpu_custom_call.1} parent=1 // pred_region
      %3775 = dma.done [#allocation4], 1024
    $region25: #{tpu_custom_call.1} parent=1 // pred_fallthru
      _
    %3776 = vsyncpa [#allocation3], 1
    %3777 = vsyncpa [#allocation6], 1
    %3778 = vsyncpa [#allocation4], 1

</llo_original>
